<compile_context>
chip_gen: v7x
topology: tpu7x:2x2x1
jax: 0.10.0
libtpu: 0.0.40
codegen_flags: <defaults>
</compile_context>

<pallas_src>
import jax
import jax.numpy as jnp
from jax.experimental import pallas as pl
from jax.experimental.pallas import tpu as pltpu


def dot_predictor_kernel(src_ref, dst_ref, w1_ref, w2_ref, o_ref):
    # Elementwise product of src/dst embeddings in f32 (VPU; v5e has no bf16 VPU).
    h = src_ref[...] * dst_ref[...]                                   # [tile_n, in] f32
    # Cast only at the dot: bf16 x bf16 matmul on the MXU with f32 accumulation.
    h1 = jnp.dot(h.astype(jnp.bfloat16), w1_ref[...],
                 preferred_element_type=jnp.float32)                  # [tile_n, hidden] f32
    h1 = jnp.maximum(h1, 0.0)
    # Linear(hidden -> 1, bias=False) as VPU multiply + cross-lane reduce in f32
    # (an N=1 MXU matmul would pad its output dim to 128/256 lanes).
    logits = jnp.sum(h1 * w2_ref[...], axis=-1)                       # [tile_n]
    # Lane-dense store: the output block is (1, tile_n).
    o_ref[...] = jax.nn.sigmoid(logits)[None, :].astype(o_ref.dtype)


def _cdiv(a, b):
    return -(-a // b)


def _choose_tile_n(n_rows, max_tile_n, prefer_even_steps):
    """Pick tile_n (multiple of 128, <= n_rows) without requiring it to divide n_rows."""
    tile = min((n_rows // 128) * 128, (max_tile_n // 128) * 128)
    tile = max(tile, 128)
    if prefer_even_steps and n_rows >= 256:
        # v7x has 2 TensorCores: prefer an even number of grid steps so both
        # cores get balanced work.  Bounded search downward in 128-row steps.
        t = tile
        for _ in range(16):
            if t < 128:
                break
            if _cdiv(n_rows, t) % 2 == 0:
                return t
            t -= 128
    return tile


def dot_predictor(h_src, h_dst, w1, w2, *, max_tile_n=4096):
    """h_src, h_dst: [N, in_size]; w1: [in_size, hidden]; w2: [hidden, 1] (pre-transposed)."""
    N, in_size = h_src.shape
    in2, hidden = w1.shape
    hidden2, out_size = w2.shape
    assert in2 == in_size and hidden2 == hidden
    assert out_size == 1, "optimized path assumes the module default out_size=1"

    # Tiny-N fallback only: pad up to one 128-row tile (negligible).  For N >= 128
    # no input padding is done; the ragged tail is a partial last block handled
    # by Pallas (per-row math, so garbage in the OOB rows cannot contaminate
    # real rows, and the masked output store drops them).
    n_eff = N
    if N < 128:
        pad = 128 - N
        h_src = jnp.pad(h_src, ((0, pad), (0, 0)))
        h_dst = jnp.pad(h_dst, ((0, pad), (0, 0)))
        n_eff = 128

    try:
        device_kind = jax.devices()[0].device_kind.lower()
    except Exception:  # pragma: no cover - defensive
        device_kind = ""
    prefer_even_steps = "v7" in device_kind   # 2 TensorCores per chip on v7x

    tile_n = _choose_tile_n(n_eff, max_tile_n, prefer_even_steps)
    grid = (_cdiv(n_eff, tile_n),)

    # Weights: W1 cast once to bf16 for the MXU; W2 as a lane-major f32 row
    # vector for the VPU reduce.
    w1_bf = w1.astype(jnp.bfloat16)
    w2_row = w2.reshape(1, hidden)

    cost = pl.CostEstimate(
        flops=2 * n_eff * in_size * hidden + 4 * n_eff * hidden + n_eff * in_size,
        transcendentals=n_eff,
        bytes_accessed=(4 * 2 * n_eff * in_size     # both inputs, f32
                        + 2 * in_size * hidden      # W1, bf16
                        + 4 * hidden                # W2, f32
                        + 4 * n_eff),               # output, f32
    )

    out_row = pl.pallas_call(
        dot_predictor_kernel,
        out_shape=jax.ShapeDtypeStruct((1, n_eff), h_src.dtype),
        grid_spec=pltpu.PrefetchScalarGridSpec(
            num_scalar_prefetch=0,
            grid=grid,
            in_specs=[
                pl.BlockSpec((tile_n, in_size), lambda i: (i, 0)),   # h_src tile
                pl.BlockSpec((tile_n, in_size), lambda i: (i, 0)),   # h_dst tile
                pl.BlockSpec((in_size, hidden), lambda i: (0, 0)),   # W1 (whole, bf16, ~16 KiB)
                pl.BlockSpec((1, hidden), lambda i: (0, 0)),         # W2 row (whole)
            ],
            out_specs=pl.BlockSpec((1, tile_n), lambda i: (0, i)),   # lane-dense row block
        ),
        compiler_params=pltpu.CompilerParams(
            dimension_semantics=("parallel",),
            vmem_limit_bytes=32 * 1024 * 1024,
        ),
        cost_estimate=cost,
    )(h_src, h_dst, w1_bf, w2_row)

    # (1, n_eff) -> (n_eff, 1) -> drop padded rows (no-op slice when n_eff == N).
    return out_row.reshape(n_eff, 1)[:N]


def reference_f32(h_src, h_dst, w1, w2):
    h = h_src * h_dst
    h = jnp.maximum(h @ w1, 0.0)
    h = h @ w2
    return jax.nn.sigmoid(h)


def reference_bf16_matmul(h_src, h_dst, w1, w2):
    # Matches the kernel's numerics: bf16 first matmul with f32 accumulation.
    h = (h_src * h_dst).astype(jnp.bfloat16)
    h = jnp.maximum(jnp.dot(h, w1.astype(jnp.bfloat16),
                            preferred_element_type=jnp.float32), 0.0)
    h = h @ w2
    return jax.nn.sigmoid(h)


if __name__ == "__main__":
    # Small shapes consistent with the module (hidden_size default = 256, out_size = 1).
    # N is deliberately NOT a multiple of the tile size to exercise the ragged path.
    N, in_size, hidden, out_size = 300, 32, 256, 1

    key = jax.random.PRNGKey(0)
    k_src, k_dst, k_w1, k_w2 = jax.random.split(key, 4)

    h_src = jax.random.normal(k_src, (N, in_size), dtype=jnp.float32)
    h_dst = jax.random.normal(k_dst, (N, in_size), dtype=jnp.float32)

    # Deterministic parameter init (Kaiming-uniform-ish scale, bias=False),
    # stored pre-transposed as [in, out] so the kernel computes x @ W.
    w1 = jax.random.uniform(k_w1, (in_size, hidden), dtype=jnp.float32,
                            minval=-1.0, maxval=1.0) / jnp.sqrt(in_size)
    w2 = jax.random.uniform(k_w2, (hidden, out_size), dtype=jnp.float32,
                            minval=-1.0, maxval=1.0) / jnp.sqrt(hidden)

    out = dot_predictor(h_src, h_dst, w1, w2)
    out = jax.block_until_ready(out)
    assert out.shape == (N, out_size)

    # Tight check against a numerics-matched (bf16 first matmul) reference.
    ref_bf = reference_bf16_matmul(h_src, h_dst, w1, w2)
    err_bf = float(jnp.max(jnp.abs(out - ref_bf)))
    assert err_bf < 1e-3, err_bf

    # Looser check against the exact f32 module semantics (bf16 matmul rounding).
    ref_f32 = reference_f32(h_src, h_dst, w1, w2)
    err_f32 = float(jnp.max(jnp.abs(out - ref_f32)))
    assert err_f32 < 2e-2, err_f32

    print("KERNEL_OK")
</pallas_src>

<mosaic_0001>
module attributes {stable_mosaic.version = 11 : i64} {
  func.func @dot_predictor_kernel(%arg0: i32, %arg1: memref<256x32xf32, #tpu.memory_space<vmem>>, %arg2: memref<256x32xf32, #tpu.memory_space<vmem>>, %arg3: memref<32x256xbf16, #tpu.memory_space<vmem>>, %arg4: memref<1x256xf32, #tpu.memory_space<vmem>>, %arg5: memref<1x256xf32, #tpu.memory_space<vmem>>) attributes {dimension_semantics = [#tpu.dimension_semantics<parallel>], iteration_bounds = array<i64: 2>, scalar_prefetch = 0 : i64, scratch_operands = 0 : i64, tpu.core_type = #tpu.core_type<tc>, window_params = [{transform_indices = @transform_0, window_bounds = array<i64: 256, 32>}, {transform_indices = @transform_1, window_bounds = array<i64: 256, 32>}, {pipeline_mode = #tpu.pipeline_mode<synchronous>, transform_indices = @transform_2, window_bounds = array<i64: 32, 256>}, {pipeline_mode = #tpu.pipeline_mode<synchronous>, transform_indices = @transform_3, window_bounds = array<i64: 1, 256>}, {transform_indices = @transform_4, window_bounds = array<i64: 1, 256>}]} {
    %c0 = arith.constant 0 : index
    %c0_0 = arith.constant 0 : index
    %0 = vector.load %arg1[%c0, %c0_0] : memref<256x32xf32, #tpu.memory_space<vmem>>, vector<256x32xf32>
    %c0_1 = arith.constant 0 : index
    %c0_2 = arith.constant 0 : index
    %1 = vector.load %arg2[%c0_1, %c0_2] : memref<256x32xf32, #tpu.memory_space<vmem>>, vector<256x32xf32>
    %2 = arith.mulf %0, %1 : vector<256x32xf32>
    %3 = arith.truncf %2 : vector<256x32xf32> to vector<256x32xbf16>
    %c0_3 = arith.constant 0 : index
    %c0_4 = arith.constant 0 : index
    %4 = vector.load %arg3[%c0_3, %c0_4] : memref<32x256xbf16, #tpu.memory_space<vmem>>, vector<32x256xbf16>
    %cst = arith.constant dense<0.000000e+00> : vector<256x256xf32>
    %5 = tpu.matmul %3, %4, %cst {dimension_numbers = #tpu.dot_dimension_numbers<[1], [0], [0], [1], [0, 0, 1, 1], [], []>} : vector<256x32xbf16>, vector<32x256xbf16>, vector<256x256xf32> -> vector<256x256xf32>
    %cst_5 = arith.constant 0.000000e+00 : f32
    %6 = vector.broadcast %cst_5 : f32 to vector<256x256xf32>
    %7 = arith.maximumf %5, %6 : vector<256x256xf32>
    %c0_6 = arith.constant 0 : index
    %c0_7 = arith.constant 0 : index
    %8 = vector.load %arg4[%c0_6, %c0_7] : memref<1x256xf32, #tpu.memory_space<vmem>>, vector<1x256xf32>
    %9 = vector.broadcast %8 : vector<1x256xf32> to vector<256x256xf32>
    %10 = arith.mulf %7, %9 : vector<256x256xf32>
    %cst_8 = arith.constant dense<0.000000e+00> : vector<256xf32>
    %11 = vector.multi_reduction <add>, %10, %cst_8 [1] : vector<256x256xf32> to vector<256xf32>
    %12 = arith.negf %11 : vector<256xf32>
    %13 = math.exp %12 : vector<256xf32>
    %cst_9 = arith.constant 1.000000e+00 : f32
    %14 = vector.broadcast %cst_9 : f32 to vector<256xf32>
    %15 = arith.addf %14, %13 : vector<256xf32>
    %16 = arith.divf %14, %15 : vector<256xf32>
    %17 = vector.shape_cast %16 : vector<256xf32> to vector<1x256xf32>
    %c0_10 = arith.constant 0 : index
    %c0_11 = arith.constant 0 : index
    %18 = vector.load %arg5[%c0_10, %c0_11] : memref<1x256xf32, #tpu.memory_space<vmem>>, vector<1x256xf32>
    tpu.vector_store %arg5[%c0_10, %c0_11], %17 {strides = array<i32>} : memref<1x256xf32, #tpu.memory_space<vmem>>, vector<1x256xf32>,
    return
  }
  func.func @transform_0(%arg0: i32) -> (i32, i32) {
    %c0_i32 = arith.constant 0 : i32
    %c0_i32_0 = arith.constant 0 : i32
    return %arg0, %c0_i32 : i32, i32
  }
  func.func @transform_1(%arg0: i32) -> (i32, i32) {
    %c0_i32 = arith.constant 0 : i32
    %c0_i32_0 = arith.constant 0 : i32
    return %arg0, %c0_i32 : i32, i32
  }
  func.func @transform_2(%arg0: i32) -> (i32, i32) {
    %c0_i32 = arith.constant 0 : i32
    %c0_i32_0 = arith.constant 0 : i32
    %c0_i32_1 = arith.constant 0 : i32
    return %c0_i32, %c0_i32_0 : i32, i32
  }
  func.func @transform_3(%arg0: i32) -> (i32, i32) {
    %c0_i32 = arith.constant 0 : i32
    %c0_i32_0 = arith.constant 0 : i32
    %c0_i32_1 = arith.constant 0 : i32
    return %c0_i32, %c0_i32_0 : i32, i32
  }
  func.func @transform_4(%arg0: i32) -> (i32, i32) {
    %c0_i32 = arith.constant 0 : i32
    %c0_i32_0 = arith.constant 0 : i32
    return %c0_i32, %arg0 : i32, i32
  }
}

</mosaic_0001>

<llo_original>
// kernel: tpu_custom_call.1
$region0: #{tpu_custom_call.1}
  #allocation0 [shape = 'u32[]', space=smem, size = 0x4, offset = 0x4, fixed_abs, tag = 'smem constant byte address 0x4 - core index']
  #allocation1 [shape = 'u32[144,128]{1,0:T(1,128)}', space=vmem, size = 0x12000, scoped, tag = 'internal scratch']
  %s0 = inlined_call_operand.vmem [shape: f32[300,32], index: 0, kind: input, shape index: {}]
  %s1 = inlined_call_operand.vmem [shape: f32[300,32], index: 1, kind: input, shape index: {}]
  %s2 = inlined_call_operand.vmem [shape: bf16[32,256], index: 2, kind: input, shape index: {}]
  %s3 = inlined_call_operand.vmem [shape: f32[1,256], index: 3, kind: input, shape index: {}]
  %s4 = inlined_call_operand.hbm [shape: f32[1,300], index: 4, kind: output, shape index: {}]
  %s5 = sld [smem:[#allocation0]]
  $region49: #{tpu_custom_call.1} parent=0
    _
  %s7 = ssub.s32 1, %s5
  %s8 = scalar_select 0, %s7, %s5
  $region1: #{tpu_custom_call.1} parent=0
    #allocation2 [shape = 'u8[2048]{0}', space=vmem, size = 0x800, scoped, tag = 'output window, operand 0']
    #allocation3 [shape = 's32[2]{0}', space=sflag, size = 0x8, scoped, tag = 'scoped memory for tpu_custom_call.1']
    %9 = vsyncpa [#allocation3], 0
    %s10 = scalar_lea.sflag [#allocation3], 1
    %11 = vsyncpa %s10, 0
    loop: start=0, step=1, limit=4
    $region2: #{tpu_custom_call.1} parent=1 // loop_pre_header
      _
    $region3: #{tpu_custom_call.1} parent=1 // loop_header
      %s13 = sphi 0, %s17
      %p14 = scmp.ge.s32.totalorder %s13, 4
      %s23 = sphi 0, %s25
      %s26 = sphi 0, %s23
      %s27 = sphi 0, %s26
      %s43 = sphi 0, %s27
      %s49 = sphi 0, %s51
      %s52 = sphi 0, %s49
      %s53 = sphi 0, %s52
      %s69 = sphi 0, %s53
      %s73 = sphi 0, %s73
      %s75 = sphi 0, %s73
      %s76 = sphi 0, %s75
      %s90 = sphi 0, %s76
      %s94 = sphi 0, %s94
      %s96 = sphi 0, %s94
      %s97 = sphi 0, %s96
      %s111 = sphi 0, %s97
      %s117 = sphi 0, %s119
      %s120 = sphi 0, %s117
      %s121 = sphi 0, %s120
      %s137 = sphi 0, %s121
    $region4: #{tpu_custom_call.1} parent=1 // loop_header_branch
      %16 = sbr.rel (%p14) target = $region8
    $region5: #{tpu_custom_call.1} parent=1 // loop_body
      %s18 = ssub.s32 %s13, 1
      %s19 = ssub.s32 %s13, 2
      %s20 = sadd.s32 %s13, 1
      %s21 = ssub.s32 %s13, %s20
      %p22 = scmp.eq.s32.totalorder %s21, 0
      %s24 = sadd.s32 %s23, 1
      %s25 = scalar_select %p22, %s23, %s24
      %p28 = pneg %p22
      %p29 = scmp.eq.s32.totalorder %s13, 1
      %p30 = por %p28, %p29
      %p31 = scmp.ne.s32.totalorder %s23, %s26
      %p32 = scmp.eq.s32.totalorder %s13, 0
      %p33 = por %p31, %p32
      %p34 = scmp.ne.s32.totalorder %s23, %s26
      %p35 = scmp.eq.s32.totalorder %s18, 1
      %p36 = por %p34, %p35
      %p37 = scmp.ne.s32.totalorder %s26, %s27
      %p38 = scmp.eq.s32.totalorder %s18, 0
      %p39 = por %p37, %p38
      %p40 = scmp.ne.s32.totalorder %s26, %s27
      %p41 = scmp.eq.s32.totalorder %s19, 1
      %p42 = por %p40, %p41
      %p44 = scmp.ne.s32.totalorder %s27, %s43
      %p45 = scmp.eq.s32.totalorder %s19, 0
      %p46 = por %p44, %p45
      %s47 = ssub.s32 %s13, %s20
      %p48 = scmp.eq.s32.totalorder %s47, 0
      %s50 = sadd.s32 %s49, 1
      %s51 = scalar_select %p48, %s49, %s50
      %p54 = pneg %p48
      %p55 = scmp.eq.s32.totalorder %s13, 1
      %p56 = por %p54, %p55
      %p57 = scmp.ne.s32.totalorder %s49, %s52
      %p58 = scmp.eq.s32.totalorder %s13, 0
      %p59 = por %p57, %p58
      %p60 = scmp.ne.s32.totalorder %s49, %s52
      %p61 = scmp.eq.s32.totalorder %s18, 1
      %p62 = por %p60, %p61
      %p63 = scmp.ne.s32.totalorder %s52, %s53
      %p64 = scmp.eq.s32.totalorder %s18, 0
      %p65 = por %p63, %p64
      %p66 = scmp.ne.s32.totalorder %s52, %s53
      %p67 = scmp.eq.s32.totalorder %s19, 1
      %p68 = por %p66, %p67
      %p70 = scmp.ne.s32.totalorder %s53, %s69
      %p71 = scmp.eq.s32.totalorder %s19, 0
      %p72 = por %p70, %p71
      %s74 = sadd.s32 %s73, 1
      %p77 = scmp.eq.s32.totalorder %s13, 1
      %p78 = scmp.ne.s32.totalorder %s73, %s75
      %p79 = scmp.eq.s32.totalorder %s13, 0
      %p80 = por %p78, %p79
      %p81 = scmp.ne.s32.totalorder %s73, %s75
      %p82 = scmp.eq.s32.totalorder %s18, 1
      %p83 = por %p81, %p82
      %p84 = scmp.ne.s32.totalorder %s75, %s76
      %p85 = scmp.eq.s32.totalorder %s18, 0
      %p86 = por %p84, %p85
      %p87 = scmp.ne.s32.totalorder %s75, %s76
      %p88 = scmp.eq.s32.totalorder %s19, 1
      %p89 = por %p87, %p88
      %p91 = scmp.ne.s32.totalorder %s76, %s90
      %p92 = scmp.eq.s32.totalorder %s19, 0
      %p93 = por %p91, %p92
      %s95 = sadd.s32 %s94, 1
      %p98 = scmp.eq.s32.totalorder %s13, 1
      %p99 = scmp.ne.s32.totalorder %s94, %s96
      %p100 = scmp.eq.s32.totalorder %s13, 0
      %p101 = por %p99, %p100
      %p102 = scmp.ne.s32.totalorder %s94, %s96
      %p103 = scmp.eq.s32.totalorder %s18, 1
      %p104 = por %p102, %p103
      %p105 = scmp.ne.s32.totalorder %s96, %s97
      %p106 = scmp.eq.s32.totalorder %s18, 0
      %p107 = por %p105, %p106
      %p108 = scmp.ne.s32.totalorder %s96, %s97
      %p109 = scmp.eq.s32.totalorder %s19, 1
      %p110 = por %p108, %p109
      %p112 = scmp.ne.s32.totalorder %s97, %s111
      %p113 = scmp.eq.s32.totalorder %s19, 0
      %p114 = por %p112, %p113
      %s115 = ssub.s32 %s13, %s20
      %p116 = scmp.eq.s32.totalorder %s115, 0
      %s118 = sadd.s32 %s117, 1
      %s119 = scalar_select %p116, %s117, %s118
      %p122 = pneg %p116
      %p123 = scmp.eq.s32.totalorder %s13, 1
      %p124 = por %p122, %p123
      %p125 = scmp.ne.s32.totalorder %s117, %s120
      %p126 = scmp.eq.s32.totalorder %s13, 0
      %p127 = por %p125, %p126
      %p128 = scmp.ne.s32.totalorder %s117, %s120
      %p129 = scmp.eq.s32.totalorder %s18, 1
      %p130 = por %p128, %p129
      %p131 = scmp.ne.s32.totalorder %s120, %s121
      %p132 = scmp.eq.s32.totalorder %s18, 0
      %p133 = por %p131, %p132
      %p134 = scmp.ne.s32.totalorder %s120, %s121
      %p135 = scmp.eq.s32.totalorder %s19, 1
      %p136 = por %p134, %p135
      %p138 = scmp.ne.s32.totalorder %s121, %s137
      %p139 = scmp.eq.s32.totalorder %s19, 0
      %p140 = por %p138, %p139
      %p141 = scmp.le.s32.totalorder 1, %s13
      %p142 = scmp.lt.s32.totalorder %s13, 3
      %p143 = pnand %p141, %p142
      %p144 = pneg %p143
      // Predicated region
      $region9: #{tpu_custom_call.1} parent=5 // pred_check
        _
      $region10: #{tpu_custom_call.1} parent=5 // pred_check_branch
        %146 = sbr.rel (%p143) target = $region12
      $region11: #{tpu_custom_call.1} parent=5 // pred_region
        %s147 = ssub.s32 %s13, 1
        // Predicated region
        $region13: #{tpu_custom_call.1} parent=11 // pred_check
          %p148 = pneg %p86
        $region14: #{tpu_custom_call.1} parent=11 // pred_check_branch
          %150 = sbr.rel (%p148) target = $region16
        $region15: #{tpu_custom_call.1} parent=11 // pred_region
          _
        $region16: #{tpu_custom_call.1} parent=11 // pred_fallthru
          _
        // Predicated region
        $region17: #{tpu_custom_call.1} parent=11 // pred_check
          %p151 = pneg %p107
        $region18: #{tpu_custom_call.1} parent=11 // pred_check_branch
          %153 = sbr.rel (%p151) target = $region20
        $region19: #{tpu_custom_call.1} parent=11 // pred_region
          _
        $region20: #{tpu_custom_call.1} parent=11 // pred_fallthru
          _
      $region12: #{tpu_custom_call.1} parent=5 // pred_fallthru
        _
      %p154 = scmp.lt.s32.totalorder %s13, 2
      // Predicated region
      $region21: #{tpu_custom_call.1} parent=5 // pred_check
        %p155 = pneg %p154
      $region22: #{tpu_custom_call.1} parent=5 // pred_check_branch
        %157 = sbr.rel (%p155) target = $region24
      $region23: #{tpu_custom_call.1} parent=5 // pred_region
        // Predicated region
        $region25: #{tpu_custom_call.1} parent=23 // pred_check
          %p158 = pneg %p33
        $region26: #{tpu_custom_call.1} parent=23 // pred_check_branch
          %160 = sbr.rel (%p158) target = $region28
        $region27: #{tpu_custom_call.1} parent=23 // pred_region
          %s161 = smul.u32 32, %s13
          %s162 = ssub.s32 38, %s161
          %p163 = scmp.lt.s32.totalorder %s162, 32
          %s164 = scalar_select %p163, %s162, 32
          %s165 = smul.u32 128, %s164
          %p166 = scmp.lt.s32.totalorder %s161, 37
          %s167 = scalar_select %p166, %s161, 37
          %s168 = smul.addr %s167, 8
          %s169 = scalar_lea.vmem %s0, %s168
          %s170 = smul.u32 32, %s13
          %s171 = ssub.s32 38, %s170
          %p172 = scmp.lt.s32.totalorder %s171, 32
          %s173 = scalar_select %p172, %s171, 32
          %s174 = smul.u32 128, %s173
        $region28: #{tpu_custom_call.1} parent=23 // pred_fallthru
          _
        // Predicated region
        $region29: #{tpu_custom_call.1} parent=23 // pred_check
          %p175 = pneg %p59
        $region30: #{tpu_custom_call.1} parent=23 // pred_check_branch
          %177 = sbr.rel (%p175) target = $region32
        $region31: #{tpu_custom_call.1} parent=23 // pred_region
          %s178 = smul.u32 32, %s13
          %s179 = ssub.s32 38, %s178
          %p180 = scmp.lt.s32.totalorder %s179, 32
          %s181 = scalar_select %p180, %s179, 32
          %s182 = smul.u32 128, %s181
          %p183 = scmp.lt.s32.totalorder %s178, 37
          %s184 = scalar_select %p183, %s178, 37
          %s185 = smul.addr %s184, 8
          %s186 = scalar_lea.vmem %s1, %s185
          %s187 = smul.u32 32, %s13
          %s188 = ssub.s32 38, %s187
          %p189 = scmp.lt.s32.totalorder %s188, 32
          %s190 = scalar_select %p189, %s188, 32
          %s191 = smul.u32 128, %s190
        $region32: #{tpu_custom_call.1} parent=23 // pred_fallthru
          _
      $region24: #{tpu_custom_call.1} parent=5 // pred_fallthru
        _
      %p192 = scmp.le.s32.totalorder 1, %s13
      %p193 = scmp.lt.s32.totalorder %s13, 3
      %p194 = pnand %p192, %p193
      %p195 = pneg %p194
      // Predicated region
      $region33: #{tpu_custom_call.1} parent=5 // pred_check
        _
      $region34: #{tpu_custom_call.1} parent=5 // pred_check_branch
        %197 = sbr.rel (%p194) target = $region36
      $region35: #{tpu_custom_call.1} parent=5 // pred_region
        %s198 = ssub.s32 %s13, 1
        %s199 = smul.u32 32, %s18
        %s200 = ssub.s32 38, %s199
        %p201 = scmp.lt.s32.totalorder %s200, 32
        %s202 = scalar_select %p201, %s200, 32
        %s203 = smul.u32 128, %s202
        %p204 = scmp.lt.s32.totalorder %s199, 37
        %s205 = scalar_select %p204, %s199, 37
        %s206 = smul.addr %s205, 8
        %s207 = scalar_lea.vmem %s0, %s206
        %p208 = pneg %p39
        %p209 = pneg %p36
        %s210 = smul.u32 32, %s18
        %s211 = ssub.s32 38, %s210
        %p212 = scmp.lt.s32.totalorder %s211, 32
        %s213 = scalar_select %p212, %s211, 32
        %s214 = smul.u32 128, %s213
        %p215 = scmp.lt.s32.totalorder %s210, 37
        %s216 = scalar_select %p215, %s210, 37
        %s217 = smul.addr %s216, 8
        %s218 = scalar_lea.vmem %s1, %s217
        %p219 = pneg %p65
        %p220 = pneg %p62
        %p221 = pneg %p86
        %p222 = pneg %p83
        %p223 = pneg %p107
        %p224 = pneg %p104
        %p225 = pneg %p133
        %p226 = pneg %p130
        %s227 = sand.u32 %s120, 1
        %s228 = scalar_lea.sflag [#allocation3], %s227
        %s229 = sand.u32 %s120, 1
        %s230 = smul.addr %s229, 2
        %s231 = scalar_lea.vmem [#allocation2], %s230
        %s232 = smul.u32 32, %s18
        %s233 = ssub.s32 38, %s232
        %p234 = scmp.lt.s32.totalorder %s233, 32
        %s235 = scalar_select %p234, %s233, 32
        %s236 = smul.u32 128, %s235
        %p237 = scmp.lt.s32.totalorder %s232, 37
        %s238 = scalar_select %p237, %s232, 37
        %s239 = smul.addr %s238, 8
        %s240 = scalar_lea.vmem %s0, %s239
        %s241 = smul.u32 32, %s18
        %s242 = ssub.s32 38, %s241
        %p243 = scmp.lt.s32.totalorder %s242, 32
        %s244 = scalar_select %p243, %s242, 32
        %s245 = smul.u32 128, %s244
        %s246 = smul.u32 32, %s18
        %s247 = ssub.s32 38, %s246
        %p248 = scmp.lt.s32.totalorder %s247, 32
        %s249 = scalar_select %p248, %s247, 32
        %s250 = smul.u32 128, %s249
        %p251 = scmp.lt.s32.totalorder %s246, 37
        %s252 = scalar_select %p251, %s246, 37
        %s253 = smul.addr %s252, 8
        %s254 = scalar_lea.vmem %s1, %s253
        %s255 = smul.u32 32, %s18
        %s256 = ssub.s32 38, %s255
        %p257 = scmp.lt.s32.totalorder %s256, 32
        %s258 = scalar_select %p257, %s256, 32
        %s259 = smul.u32 128, %s258
        %s260 = smul.u32 2, %s18
        %s261 = ssub.s32 3, %s260
        %p262 = scmp.lt.s32.totalorder %s261, 2
        %s263 = scalar_select %p262, %s261, 2
        %s264 = smul.u32 16, %s263
        %v266 = vld [vmem:[%s240] sm:$0xff]
        %v267 = vld [vmem:[%s240 + $0x8] sm:$0xff]
        %v268 = vld [vmem:[%s240 + $0x10] sm:$0xff]
        %v269 = vld [vmem:[%s240 + $0x18] sm:$0xff]
        %v270 = vld [vmem:[%s240 + $0x20] sm:$0xff]
        %v271 = vld [vmem:[%s240 + $0x28] sm:$0xff]
        %v272 = vld [vmem:[%s240 + $0x30] sm:$0xff]
        %v273 = vld [vmem:[%s240 + $0x38] sm:$0xff]
        %v274 = vld [vmem:[%s240 + $0x40] sm:$0xff]
        %v275 = vld [vmem:[%s240 + $0x48] sm:$0xff]
        %v276 = vld [vmem:[%s240 + $0x50] sm:$0xff]
        %v277 = vld [vmem:[%s240 + $0x58] sm:$0xff]
        %v278 = vld [vmem:[%s240 + $0x60] sm:$0xff]
        %v279 = vld [vmem:[%s240 + $0x68] sm:$0xff]
        %v280 = vld [vmem:[%s240 + $0x70] sm:$0xff]
        %v281 = vld [vmem:[%s240 + $0x78] sm:$0xff]
        %v282 = vld [vmem:[%s240 + $0x80] sm:$0xff]
        %v283 = vld [vmem:[%s240 + $0x88] sm:$0xff]
        %v284 = vld [vmem:[%s240 + $0x90] sm:$0xff]
        %v285 = vld [vmem:[%s240 + $0x98] sm:$0xff]
        %v286 = vld [vmem:[%s240 + $0xa0] sm:$0xff]
        %v287 = vld [vmem:[%s240 + $0xa8] sm:$0xff]
        %v288 = vld [vmem:[%s240 + $0xb0] sm:$0xff]
        %v289 = vld [vmem:[%s240 + $0xb8] sm:$0xff]
        %v290 = vld [vmem:[%s240 + $0xc0] sm:$0xff]
        %v291 = vld [vmem:[%s240 + $0xc8] sm:$0xff]
        %v292 = vld [vmem:[%s240 + $0xd0] sm:$0xff]
        %v293 = vld [vmem:[%s240 + $0xd8] sm:$0xff]
        %v294 = vld [vmem:[%s240 + $0xe0] sm:$0xff]
        %v295 = vld [vmem:[%s240 + $0xe8] sm:$0xff]
        %v296 = vld [vmem:[%s240 + $0xf0] sm:$0xff]
        %v297 = vld [vmem:[%s240 + $0xf8] sm:$0xff]
        %v298 = vld [vmem:[%s254] sm:$0xff]
        %v299 = vld [vmem:[%s254 + $0x8] sm:$0xff]
        %v300 = vld [vmem:[%s254 + $0x10] sm:$0xff]
        %v301 = vld [vmem:[%s254 + $0x18] sm:$0xff]
        %v302 = vld [vmem:[%s254 + $0x20] sm:$0xff]
        %v303 = vld [vmem:[%s254 + $0x28] sm:$0xff]
        %v304 = vld [vmem:[%s254 + $0x30] sm:$0xff]
        %v305 = vld [vmem:[%s254 + $0x38] sm:$0xff]
        %v306 = vld [vmem:[%s254 + $0x40] sm:$0xff]
        %v307 = vld [vmem:[%s254 + $0x48] sm:$0xff]
        %v308 = vld [vmem:[%s254 + $0x50] sm:$0xff]
        %v309 = vld [vmem:[%s254 + $0x58] sm:$0xff]
        %v310 = vld [vmem:[%s254 + $0x60] sm:$0xff]
        %v311 = vld [vmem:[%s254 + $0x68] sm:$0xff]
        %v312 = vld [vmem:[%s254 + $0x70] sm:$0xff]
        %v313 = vld [vmem:[%s254 + $0x78] sm:$0xff]
        %v314 = vld [vmem:[%s254 + $0x80] sm:$0xff]
        %v315 = vld [vmem:[%s254 + $0x88] sm:$0xff]
        %v316 = vld [vmem:[%s254 + $0x90] sm:$0xff]
        %v317 = vld [vmem:[%s254 + $0x98] sm:$0xff]
        %v318 = vld [vmem:[%s254 + $0xa0] sm:$0xff]
        %v319 = vld [vmem:[%s254 + $0xa8] sm:$0xff]
        %v320 = vld [vmem:[%s254 + $0xb0] sm:$0xff]
        %v321 = vld [vmem:[%s254 + $0xb8] sm:$0xff]
        %v322 = vld [vmem:[%s254 + $0xc0] sm:$0xff]
        %v323 = vld [vmem:[%s254 + $0xc8] sm:$0xff]
        %v324 = vld [vmem:[%s254 + $0xd0] sm:$0xff]
        %v325 = vld [vmem:[%s254 + $0xd8] sm:$0xff]
        %v326 = vld [vmem:[%s254 + $0xe0] sm:$0xff]
        %v327 = vld [vmem:[%s254 + $0xe8] sm:$0xff]
        %v328 = vld [vmem:[%s254 + $0xf0] sm:$0xff]
        %v329 = vld [vmem:[%s254 + $0xf8] sm:$0xff]
        %v330 = vmul.f32 %v266, %v298
        %v331 = vmul.f32 %v267, %v299
        %v332 = vmul.f32 %v268, %v300
        %v333 = vmul.f32 %v269, %v301
        %v334 = vmul.f32 %v270, %v302
        %v335 = vmul.f32 %v271, %v303
        %v336 = vmul.f32 %v272, %v304
        %v337 = vmul.f32 %v273, %v305
        %v338 = vmul.f32 %v274, %v306
        %v339 = vmul.f32 %v275, %v307
        %v340 = vmul.f32 %v276, %v308
        %v341 = vmul.f32 %v277, %v309
        %v342 = vmul.f32 %v278, %v310
        %v343 = vmul.f32 %v279, %v311
        %v344 = vmul.f32 %v280, %v312
        %v345 = vmul.f32 %v281, %v313
        %v346 = vmul.f32 %v282, %v314
        %v347 = vmul.f32 %v283, %v315
        %v348 = vmul.f32 %v284, %v316
        %v349 = vmul.f32 %v285, %v317
        %v350 = vmul.f32 %v286, %v318
        %v351 = vmul.f32 %v287, %v319
        %v352 = vmul.f32 %v288, %v320
        %v353 = vmul.f32 %v289, %v321
        %v354 = vmul.f32 %v290, %v322
        %v355 = vmul.f32 %v291, %v323
        %v356 = vmul.f32 %v292, %v324
        %v357 = vmul.f32 %v293, %v325
        %v358 = vmul.f32 %v294, %v326
        %v359 = vmul.f32 %v295, %v327
        %v360 = vmul.f32 %v296, %v328
        %v361 = vmul.f32 %v297, %v329
        %v362 = vpack.c.bf16 %v331, %v330
        %v363 = vpack.c.bf16 %v333, %v332
        %v364 = vpack.c.bf16 %v335, %v334
        %v365 = vpack.c.bf16 %v337, %v336
        %v366 = vpack.c.bf16 %v339, %v338
        %v367 = vpack.c.bf16 %v341, %v340
        %v368 = vpack.c.bf16 %v343, %v342
        %v369 = vpack.c.bf16 %v345, %v344
        %v370 = vpack.c.bf16 %v347, %v346
        %v371 = vpack.c.bf16 %v349, %v348
        %v372 = vpack.c.bf16 %v351, %v350
        %v373 = vpack.c.bf16 %v353, %v352
        %v374 = vpack.c.bf16 %v355, %v354
        %v375 = vpack.c.bf16 %v357, %v356
        %v376 = vpack.c.bf16 %v359, %v358
        %v377 = vpack.c.bf16 %v361, %v360
        %v378 = vld [vmem:[%s2] sm:$0xff]
        %v379 = vld [vmem:[%s2 + $0x8] sm:$0xff]
        %v380 = vld [vmem:[%s2 + $0x10] sm:$0xff]
        %v381 = vld [vmem:[%s2 + $0x18] sm:$0xff]
        %v386 = vunpack.c.l.b16 %v378
        %v387 = vunpack.c.h.b16 %v378
        %v388 = vunpack.c.l.b16 %v379
        %v389 = vunpack.c.h.b16 %v379
        %v390 = vunpack.c.l.b16 %v380
        %v391 = vunpack.c.h.b16 %v380
        %v392 = vunpack.c.l.b16 %v381
        %v393 = vunpack.c.h.b16 %v381
        %v394 = vpack.c.b16 %v388, %v386
        %v395 = vpack.c.b16 %v389, %v387
        %v396 = vpack.c.b16 %v392, %v390
        %v397 = vpack.c.b16 %v393, %v391
        %vm402 = vcmask 261120
        %v404 = vsel %vm402, %v362, 0
        %v407 = vsel %vm402, %v363, 0
        %v410 = vsel %vm402, %v364, 0
        %v413 = vsel %vm402, %v365, 0
        %v416 = vsel %vm402, %v366, 0
        %v419 = vsel %vm402, %v367, 0
        %v422 = vsel %vm402, %v368, 0
        %v425 = vsel %vm402, %v369, 0
        %v428 = vsel %vm402, %v370, 0
        %v431 = vsel %vm402, %v371, 0
        %v434 = vsel %vm402, %v372, 0
        %v437 = vsel %vm402, %v373, 0
        %v440 = vsel %vm402, %v374, 0
        %v443 = vsel %vm402, %v375, 0
        %v446 = vsel %vm402, %v376, 0
        %v449 = vsel %vm402, %v377, 0
        %451 = vmatprep.subr.bf16.mxu0 %v395
        %452 = vmatpush1.bf16.msra.mxu0 %v394
        %453 = vmatprep.subr.bf16.mxu0 %v397
        %454 = vmatpush1.bf16.msra.mxu0 %v396
        %455 = vmatprep.subr.bf16.mxu0 0
        %456 = vmatpush1.bf16.msra.mxu0 0
        %457 = vmatprep.subr.bf16.mxu0 0
        %458 = vmatpush1.bf16.msra.mxu0 0
        %459 = vmatprep.subr.bf16.mxu0 0
        %460 = vmatpush1.bf16.msra.mxu0 0
        %461 = vmatprep.subr.bf16.mxu0 0
        %462 = vmatpush1.bf16.msra.mxu0 0
        %463 = vmatprep.subr.bf16.mxu0 0
        %464 = vmatpush1.bf16.msra.mxu0 0
        %465 = vmatprep.subr.bf16.mxu0 0
        %466 = vmatpush1.bf16.msra.mxu0 0
        %467 = vmatprep.subr.bf16.mxu0 0
        %468 = vmatpush1.bf16.msra.mxu0 0
        %469 = vmatprep.subr.bf16.mxu0 0
        %470 = vmatpush1.bf16.msra.mxu0 0
        %471 = vmatprep.subr.bf16.mxu0 0
        %472 = vmatpush1.bf16.msra.mxu0 0
        %473 = vmatprep.subr.bf16.mxu0 0
        %474 = vmatpush1.bf16.msra.mxu0 0
        %475 = vmatprep.subr.bf16.mxu0 0
        %476 = vmatpush1.bf16.msra.mxu0 0
        %477 = vmatprep.subr.bf16.mxu0 0
        %478 = vmatpush1.bf16.msra.mxu0 0
        %479 = vmatprep.subr.bf16.mxu0 0
        %480 = vmatpush1.bf16.msra.mxu0 0
        %481 = vmatprep.subr.bf16.mxu0 0
        %482 = vmatpush1.bf16.msra.mxu0 0
        %483 = vmatprep.mubr.bf16.mxu0 0
        %484 = vmatmul.mubr.bf16.gmra.mrb[0].mxu0 %v404
        %v485 = vpop.f32.mrb[0].mxu0
        %v486 = vadd.f32 0.0, %v485
        %v487 = vpop.f32.mrb[0].mxu0
        %v488 = vadd.f32 0.0, %v487
        %v489 = vpop.f32.mrb[0].mxu0
        %v490 = vadd.f32 0.0, %v489
        %v491 = vpop.f32.mrb[0].mxu0
        %v492 = vadd.f32 0.0, %v491
        %493 = vmatprep.mubr.bf16.mxu0 0
        %494 = vmatmul.mubr.bf16.gmra.mrb[0].mxu0 %v407
        %v495 = vpop.f32.mrb[0].mxu0
        %v496 = vadd.f32 0.0, %v495
        %v497 = vpop.f32.mrb[0].mxu0
        %v498 = vadd.f32 0.0, %v497
        %v499 = vpop.f32.mrb[0].mxu0
        %v500 = vadd.f32 0.0, %v499
        %v501 = vpop.f32.mrb[0].mxu0
        %v502 = vadd.f32 0.0, %v501
        %503 = vmatprep.mubr.bf16.mxu0 0
        %504 = vmatmul.mubr.bf16.gmra.mrb[0].mxu0 %v410
        %v505 = vpop.f32.mrb[0].mxu0
        %v506 = vadd.f32 0.0, %v505
        %v507 = vpop.f32.mrb[0].mxu0
        %v508 = vadd.f32 0.0, %v507
        %v509 = vpop.f32.mrb[0].mxu0
        %v510 = vadd.f32 0.0, %v509
        %v511 = vpop.f32.mrb[0].mxu0
        %v512 = vadd.f32 0.0, %v511
        %513 = vmatprep.mubr.bf16.mxu0 0
        %514 = vmatmul.mubr.bf16.gmra.mrb[0].mxu0 %v413
        %v515 = vpop.f32.mrb[0].mxu0
        %v516 = vadd.f32 0.0, %v515
        %v517 = vpop.f32.mrb[0].mxu0
        %v518 = vadd.f32 0.0, %v517
        %v519 = vpop.f32.mrb[0].mxu0
        %v520 = vadd.f32 0.0, %v519
        %v521 = vpop.f32.mrb[0].mxu0
        %v522 = vadd.f32 0.0, %v521
        %523 = vmatprep.mubr.bf16.mxu0 0
        %524 = vmatmul.mubr.bf16.gmra.mrb[0].mxu0 %v416
        %v525 = vpop.f32.mrb[0].mxu0
        %v526 = vadd.f32 0.0, %v525
        %v527 = vpop.f32.mrb[0].mxu0
        %v528 = vadd.f32 0.0, %v527
        %v529 = vpop.f32.mrb[0].mxu0
        %v530 = vadd.f32 0.0, %v529
        %v531 = vpop.f32.mrb[0].mxu0
        %v532 = vadd.f32 0.0, %v531
        %533 = vmatprep.mubr.bf16.mxu0 0
        %534 = vmatmul.mubr.bf16.gmra.mrb[0].mxu0 %v419
        %v535 = vpop.f32.mrb[0].mxu0
        %v536 = vadd.f32 0.0, %v535
        %v537 = vpop.f32.mrb[0].mxu0
        %v538 = vadd.f32 0.0, %v537
        %v539 = vpop.f32.mrb[0].mxu0
        %v540 = vadd.f32 0.0, %v539
        %v541 = vpop.f32.mrb[0].mxu0
        %v542 = vadd.f32 0.0, %v541
        %543 = vmatprep.mubr.bf16.mxu0 0
        %544 = vmatmul.mubr.bf16.gmra.mrb[0].mxu0 %v422
        %v545 = vpop.f32.mrb[0].mxu0
        %v546 = vadd.f32 0.0, %v545
        %v547 = vpop.f32.mrb[0].mxu0
        %v548 = vadd.f32 0.0, %v547
        %v549 = vpop.f32.mrb[0].mxu0
        %v550 = vadd.f32 0.0, %v549
        %v551 = vpop.f32.mrb[0].mxu0
        %v552 = vadd.f32 0.0, %v551
        %553 = vmatprep.mubr.bf16.mxu0 0
        %554 = vmatmul.mubr.bf16.gmra.mrb[0].mxu0 %v425
        %v555 = vpop.f32.mrb[0].mxu0
        %v556 = vadd.f32 0.0, %v555
        %v557 = vpop.f32.mrb[0].mxu0
        %v558 = vadd.f32 0.0, %v557
        %v559 = vpop.f32.mrb[0].mxu0
        %v560 = vadd.f32 0.0, %v559
        %v561 = vpop.f32.mrb[0].mxu0
        %v562 = vadd.f32 0.0, %v561
        %563 = vmatprep.mubr.bf16.mxu0 0
        %564 = vmatmul.mubr.bf16.gmra.mrb[0].mxu0 %v428
        %v565 = vpop.f32.mrb[0].mxu0
        %v566 = vadd.f32 0.0, %v565
        %v567 = vpop.f32.mrb[0].mxu0
        %v568 = vadd.f32 0.0, %v567
        %v569 = vpop.f32.mrb[0].mxu0
        %v570 = vadd.f32 0.0, %v569
        %v571 = vpop.f32.mrb[0].mxu0
        %v572 = vadd.f32 0.0, %v571
        %573 = vmatprep.mubr.bf16.mxu0 0
        %574 = vmatmul.mubr.bf16.gmra.mrb[0].mxu0 %v431
        %v575 = vpop.f32.mrb[0].mxu0
        %v576 = vadd.f32 0.0, %v575
        %v577 = vpop.f32.mrb[0].mxu0
        %v578 = vadd.f32 0.0, %v577
        %v579 = vpop.f32.mrb[0].mxu0
        %v580 = vadd.f32 0.0, %v579
        %v581 = vpop.f32.mrb[0].mxu0
        %v582 = vadd.f32 0.0, %v581
        %583 = vmatprep.mubr.bf16.mxu0 0
        %584 = vmatmul.mubr.bf16.gmra.mrb[0].mxu0 %v434
        %v585 = vpop.f32.mrb[0].mxu0
        %v586 = vadd.f32 0.0, %v585
        %v587 = vpop.f32.mrb[0].mxu0
        %v588 = vadd.f32 0.0, %v587
        %v589 = vpop.f32.mrb[0].mxu0
        %v590 = vadd.f32 0.0, %v589
        %v591 = vpop.f32.mrb[0].mxu0
        %v592 = vadd.f32 0.0, %v591
        %593 = vmatprep.mubr.bf16.mxu0 0
        %594 = vmatmul.mubr.bf16.gmra.mrb[0].mxu0 %v437
        %v595 = vpop.f32.mrb[0].mxu0
        %v596 = vadd.f32 0.0, %v595
        %v597 = vpop.f32.mrb[0].mxu0
        %v598 = vadd.f32 0.0, %v597
        %v599 = vpop.f32.mrb[0].mxu0
        %v600 = vadd.f32 0.0, %v599
        %v601 = vpop.f32.mrb[0].mxu0
        %v602 = vadd.f32 0.0, %v601
        %603 = vmatprep.mubr.bf16.mxu0 0
        %604 = vmatmul.mubr.bf16.gmra.mrb[0].mxu0 %v440
        %v605 = vpop.f32.mrb[0].mxu0
        %v606 = vadd.f32 0.0, %v605
        %v607 = vpop.f32.mrb[0].mxu0
        %v608 = vadd.f32 0.0, %v607
        %v609 = vpop.f32.mrb[0].mxu0
        %v610 = vadd.f32 0.0, %v609
        %v611 = vpop.f32.mrb[0].mxu0
        %v612 = vadd.f32 0.0, %v611
        %613 = vmatprep.mubr.bf16.mxu0 0
        %614 = vmatmul.mubr.bf16.gmra.mrb[0].mxu0 %v443
        %v615 = vpop.f32.mrb[0].mxu0
        %v616 = vadd.f32 0.0, %v615
        %v617 = vpop.f32.mrb[0].mxu0
        %v618 = vadd.f32 0.0, %v617
        %v619 = vpop.f32.mrb[0].mxu0
        %v620 = vadd.f32 0.0, %v619
        %v621 = vpop.f32.mrb[0].mxu0
        %v622 = vadd.f32 0.0, %v621
        %623 = vmatprep.mubr.bf16.mxu0 0
        %624 = vmatmul.mubr.bf16.gmra.mrb[0].mxu0 %v446
        %v625 = vpop.f32.mrb[0].mxu0
        %v626 = vadd.f32 0.0, %v625
        %v627 = vpop.f32.mrb[0].mxu0
        %v628 = vadd.f32 0.0, %v627
        %v629 = vpop.f32.mrb[0].mxu0
        %v630 = vadd.f32 0.0, %v629
        %v631 = vpop.f32.mrb[0].mxu0
        %v632 = vadd.f32 0.0, %v631
        %633 = vmatprep.mubr.bf16.mxu0 0
        %634 = vmatmul.mubr.bf16.gmra.mrb[0].mxu0 %v449
        %v635 = vpop.f32.mrb[0].mxu0
        %v636 = vadd.f32 0.0, %v635
        %v637 = vpop.f32.mrb[0].mxu0
        %v638 = vadd.f32 0.0, %v637
        %v639 = vpop.f32.mrb[0].mxu0
        %v640 = vadd.f32 0.0, %v639
        %v641 = vpop.f32.mrb[0].mxu0
        %v642 = vadd.f32 0.0, %v641
        %643 = vdwg.mxu0
        %v644 = vmax.f32 %v486, 0.0
        %v645 = vmax.f32 %v488, 0.0
        %v646 = vmax.f32 %v490, 0.0
        %v647 = vmax.f32 %v492, 0.0
        %v648 = vmax.f32 %v496, 0.0
        %v649 = vmax.f32 %v498, 0.0
        %v650 = vmax.f32 %v500, 0.0
        %v651 = vmax.f32 %v502, 0.0
        %v652 = vmax.f32 %v506, 0.0
        %v653 = vmax.f32 %v508, 0.0
        %v654 = vmax.f32 %v510, 0.0
        %v655 = vmax.f32 %v512, 0.0
        %v656 = vmax.f32 %v516, 0.0
        %v657 = vmax.f32 %v518, 0.0
        %v658 = vmax.f32 %v520, 0.0
        %v659 = vmax.f32 %v522, 0.0
        %v660 = vmax.f32 %v526, 0.0
        %v661 = vmax.f32 %v528, 0.0
        %v662 = vmax.f32 %v530, 0.0
        %v663 = vmax.f32 %v532, 0.0
        %v664 = vmax.f32 %v536, 0.0
        %v665 = vmax.f32 %v538, 0.0
        %v666 = vmax.f32 %v540, 0.0
        %v667 = vmax.f32 %v542, 0.0
        %v668 = vmax.f32 %v546, 0.0
        %v669 = vmax.f32 %v548, 0.0
        %v670 = vmax.f32 %v550, 0.0
        %v671 = vmax.f32 %v552, 0.0
        %v672 = vmax.f32 %v556, 0.0
        %v673 = vmax.f32 %v558, 0.0
        %v674 = vmax.f32 %v560, 0.0
        %v675 = vmax.f32 %v562, 0.0
        %v676 = vmax.f32 %v566, 0.0
        %v677 = vmax.f32 %v568, 0.0
        %v678 = vmax.f32 %v570, 0.0
        %v679 = vmax.f32 %v572, 0.0
        %v680 = vmax.f32 %v576, 0.0
        %v681 = vmax.f32 %v578, 0.0
        %v682 = vmax.f32 %v580, 0.0
        %v683 = vmax.f32 %v582, 0.0
        %v684 = vmax.f32 %v586, 0.0
        %v685 = vmax.f32 %v588, 0.0
        %v686 = vmax.f32 %v590, 0.0
        %v687 = vmax.f32 %v592, 0.0
        %v688 = vmax.f32 %v596, 0.0
        %v689 = vmax.f32 %v598, 0.0
        %v690 = vmax.f32 %v600, 0.0
        %v691 = vmax.f32 %v602, 0.0
        %v692 = vmax.f32 %v606, 0.0
        %v693 = vmax.f32 %v608, 0.0
        %v694 = vmax.f32 %v610, 0.0
        %v695 = vmax.f32 %v612, 0.0
        %v696 = vmax.f32 %v616, 0.0
        %v697 = vmax.f32 %v618, 0.0
        %v698 = vmax.f32 %v620, 0.0
        %v699 = vmax.f32 %v622, 0.0
        %v700 = vmax.f32 %v626, 0.0
        %v701 = vmax.f32 %v628, 0.0
        %v702 = vmax.f32 %v630, 0.0
        %v703 = vmax.f32 %v632, 0.0
        %v704 = vmax.f32 %v636, 0.0
        %v705 = vmax.f32 %v638, 0.0
        %v706 = vmax.f32 %v640, 0.0
        %v707 = vmax.f32 %v642, 0.0
        %v708 = vld [vmem:[%s3] sm:$0x3]
        %v710 = vlaneseq
        %v711 = vshrl.u32 %v710, 7
        %v712 = vsub.s32 0, %v711
        %v713 = vrot.slane %v708, %v712
        %v714 = vlaneseq
        %v715 = vshrl.u32 %v714, 7
        %v716 = vsub.s32 1, %v715
        %v717 = vrot.slane %v708, %v716
        %v720 = vmul.f32 %v644, %v713
        %v721 = vmul.f32 %v645, %v717
        %v722 = vmul.f32 %v646, %v713
        %v723 = vmul.f32 %v647, %v717
        %v724 = vmul.f32 %v648, %v713
        %v725 = vmul.f32 %v649, %v717
        %v726 = vmul.f32 %v650, %v713
        %v727 = vmul.f32 %v651, %v717
        %v728 = vmul.f32 %v652, %v713
        %v729 = vmul.f32 %v653, %v717
        %v730 = vmul.f32 %v654, %v713
        %v731 = vmul.f32 %v655, %v717
        %v732 = vmul.f32 %v656, %v713
        %v733 = vmul.f32 %v657, %v717
        %v734 = vmul.f32 %v658, %v713
        %v735 = vmul.f32 %v659, %v717
        %v736 = vmul.f32 %v660, %v713
        %v737 = vmul.f32 %v661, %v717
        %v738 = vmul.f32 %v662, %v713
        %v739 = vmul.f32 %v663, %v717
        %v740 = vmul.f32 %v664, %v713
        %v741 = vmul.f32 %v665, %v717
        %v742 = vmul.f32 %v666, %v713
        %v743 = vmul.f32 %v667, %v717
        %v744 = vmul.f32 %v668, %v713
        %v745 = vmul.f32 %v669, %v717
        %v746 = vmul.f32 %v670, %v713
        %v747 = vmul.f32 %v671, %v717
        %v748 = vmul.f32 %v672, %v713
        %v749 = vmul.f32 %v673, %v717
        %v750 = vmul.f32 %v674, %v713
        %v751 = vmul.f32 %v675, %v717
        %v752 = vmul.f32 %v676, %v713
        %v753 = vmul.f32 %v677, %v717
        %v754 = vmul.f32 %v678, %v713
        %v755 = vmul.f32 %v679, %v717
        %v756 = vmul.f32 %v680, %v713
        %v757 = vmul.f32 %v681, %v717
        %v758 = vmul.f32 %v682, %v713
        %v759 = vmul.f32 %v683, %v717
        %v760 = vmul.f32 %v684, %v713
        %v761 = vmul.f32 %v685, %v717
        %v762 = vmul.f32 %v686, %v713
        %v763 = vmul.f32 %v687, %v717
        %v764 = vmul.f32 %v688, %v713
        %v765 = vmul.f32 %v689, %v717
        %v766 = vmul.f32 %v690, %v713
        %v767 = vmul.f32 %v691, %v717
        %v768 = vmul.f32 %v692, %v713
        %v769 = vmul.f32 %v693, %v717
        %v770 = vmul.f32 %v694, %v713
        %v771 = vmul.f32 %v695, %v717
        %v772 = vmul.f32 %v696, %v713
        %v773 = vmul.f32 %v697, %v717
        %v774 = vmul.f32 %v698, %v713
        %v775 = vmul.f32 %v699, %v717
        %v776 = vmul.f32 %v700, %v713
        %v777 = vmul.f32 %v701, %v717
        %v778 = vmul.f32 %v702, %v713
        %v779 = vmul.f32 %v703, %v717
        %v780 = vmul.f32 %v704, %v713
        %v781 = vmul.f32 %v705, %v717
        %v782 = vmul.f32 %v706, %v713
        %v783 = vmul.f32 %v707, %v717
        %v784 = vadd.f32 %v720, %v721
        %785 = vadd.xlane.f32.xlu0 %v784
        %v786 = vpop.xlane.xlu0 %785
        %v787 = vadd.f32 %v722, %v723
        %788 = vadd.xlane.f32.xlu0 %v787
        %v789 = vpop.xlane.xlu0 %788
        %v790 = vadd.f32 %v724, %v725
        %791 = vadd.xlane.f32.xlu0 %v790
        %v792 = vpop.xlane.xlu0 %791
        %v793 = vadd.f32 %v726, %v727
        %794 = vadd.xlane.f32.xlu0 %v793
        %v795 = vpop.xlane.xlu0 %794
        %v796 = vadd.f32 %v728, %v729
        %797 = vadd.xlane.f32.xlu0 %v796
        %v798 = vpop.xlane.xlu0 %797
        %v799 = vadd.f32 %v730, %v731
        %800 = vadd.xlane.f32.xlu0 %v799
        %v801 = vpop.xlane.xlu0 %800
        %v802 = vadd.f32 %v732, %v733
        %803 = vadd.xlane.f32.xlu0 %v802
        %v804 = vpop.xlane.xlu0 %803
        %v805 = vadd.f32 %v734, %v735
        %806 = vadd.xlane.f32.xlu0 %v805
        %v807 = vpop.xlane.xlu0 %806
        %v808 = vadd.f32 %v736, %v737
        %809 = vadd.xlane.f32.xlu0 %v808
        %v810 = vpop.xlane.xlu0 %809
        %v811 = vadd.f32 %v738, %v739
        %812 = vadd.xlane.f32.xlu0 %v811
        %v813 = vpop.xlane.xlu0 %812
        %v814 = vadd.f32 %v740, %v741
        %815 = vadd.xlane.f32.xlu0 %v814
        %v816 = vpop.xlane.xlu0 %815
        %v817 = vadd.f32 %v742, %v743
        %818 = vadd.xlane.f32.xlu0 %v817
        %v819 = vpop.xlane.xlu0 %818
        %v820 = vadd.f32 %v744, %v745
        %821 = vadd.xlane.f32.xlu0 %v820
        %v822 = vpop.xlane.xlu0 %821
        %v823 = vadd.f32 %v746, %v747
        %824 = vadd.xlane.f32.xlu0 %v823
        %v825 = vpop.xlane.xlu0 %824
        %v826 = vadd.f32 %v748, %v749
        %827 = vadd.xlane.f32.xlu0 %v826
        %v828 = vpop.xlane.xlu0 %827
        %v829 = vadd.f32 %v750, %v751
        %830 = vadd.xlane.f32.xlu0 %v829
        %v831 = vpop.xlane.xlu0 %830
        %v832 = vadd.f32 %v752, %v753
        %833 = vadd.xlane.f32.xlu0 %v832
        %v834 = vpop.xlane.xlu0 %833
        %v835 = vadd.f32 %v754, %v755
        %836 = vadd.xlane.f32.xlu0 %v835
        %v837 = vpop.xlane.xlu0 %836
        %v838 = vadd.f32 %v756, %v757
        %839 = vadd.xlane.f32.xlu0 %v838
        %v840 = vpop.xlane.xlu0 %839
        %v841 = vadd.f32 %v758, %v759
        %842 = vadd.xlane.f32.xlu0 %v841
        %v843 = vpop.xlane.xlu0 %842
        %v844 = vadd.f32 %v760, %v761
        %845 = vadd.xlane.f32.xlu0 %v844
        %v846 = vpop.xlane.xlu0 %845
        %v847 = vadd.f32 %v762, %v763
        %848 = vadd.xlane.f32.xlu0 %v847
        %v849 = vpop.xlane.xlu0 %848
        %v850 = vadd.f32 %v764, %v765
        %851 = vadd.xlane.f32.xlu0 %v850
        %v852 = vpop.xlane.xlu0 %851
        %v853 = vadd.f32 %v766, %v767
        %854 = vadd.xlane.f32.xlu0 %v853
        %v855 = vpop.xlane.xlu0 %854
        %v856 = vadd.f32 %v768, %v769
        %857 = vadd.xlane.f32.xlu0 %v856
        %v858 = vpop.xlane.xlu0 %857
        %v859 = vadd.f32 %v770, %v771
        %860 = vadd.xlane.f32.xlu0 %v859
        %v861 = vpop.xlane.xlu0 %860
        %v862 = vadd.f32 %v772, %v773
        %863 = vadd.xlane.f32.xlu0 %v862
        %v864 = vpop.xlane.xlu0 %863
        %v865 = vadd.f32 %v774, %v775
        %866 = vadd.xlane.f32.xlu0 %v865
        %v867 = vpop.xlane.xlu0 %866
        %v868 = vadd.f32 %v776, %v777
        %869 = vadd.xlane.f32.xlu0 %v868
        %v870 = vpop.xlane.xlu0 %869
        %v871 = vadd.f32 %v778, %v779
        %872 = vadd.xlane.f32.xlu0 %v871
        %v873 = vpop.xlane.xlu0 %872
        %v874 = vadd.f32 %v780, %v781
        %875 = vadd.xlane.f32.xlu0 %v874
        %v876 = vpop.xlane.xlu0 %875
        %v877 = vadd.f32 %v782, %v783
        %878 = vadd.xlane.f32.xlu0 %v877
        %v879 = vpop.xlane.xlu0 %878
        %v880 = vxor.u32 %v786, 2147483648
        %v881 = vxor.u32 %v789, 2147483648
        %v882 = vxor.u32 %v792, 2147483648
        %v883 = vxor.u32 %v795, 2147483648
        %v884 = vxor.u32 %v798, 2147483648
        %v885 = vxor.u32 %v801, 2147483648
        %v886 = vxor.u32 %v804, 2147483648
        %v887 = vxor.u32 %v807, 2147483648
        %v888 = vxor.u32 %v810, 2147483648
        %v889 = vxor.u32 %v813, 2147483648
        %v890 = vxor.u32 %v816, 2147483648
        %v891 = vxor.u32 %v819, 2147483648
        %v892 = vxor.u32 %v822, 2147483648
        %v893 = vxor.u32 %v825, 2147483648
        %v894 = vxor.u32 %v828, 2147483648
        %v895 = vxor.u32 %v831, 2147483648
        %v896 = vxor.u32 %v834, 2147483648
        %v897 = vxor.u32 %v837, 2147483648
        %v898 = vxor.u32 %v840, 2147483648
        %v899 = vxor.u32 %v843, 2147483648
        %v900 = vxor.u32 %v846, 2147483648
        %v901 = vxor.u32 %v849, 2147483648
        %v902 = vxor.u32 %v852, 2147483648
        %v903 = vxor.u32 %v855, 2147483648
        %v904 = vxor.u32 %v858, 2147483648
        %v905 = vxor.u32 %v861, 2147483648
        %v906 = vxor.u32 %v864, 2147483648
        %v907 = vxor.u32 %v867, 2147483648
        %v908 = vxor.u32 %v870, 2147483648
        %v909 = vxor.u32 %v873, 2147483648
        %v910 = vxor.u32 %v876, 2147483648
        %v911 = vxor.u32 %v879, 2147483648
        %v912 = vmul.f32 %v880, 1.442695
        %v913 = vpow.pop %v912
        %v914 = vmul.f32 %v881, 1.442695
        %v915 = vpow.pop %v914
        %v916 = vmul.f32 %v882, 1.442695
        %v917 = vpow.pop %v916
        %v918 = vmul.f32 %v883, 1.442695
        %v919 = vpow.pop %v918
        %v920 = vmul.f32 %v884, 1.442695
        %v921 = vpow.pop %v920
        %v922 = vmul.f32 %v885, 1.442695
        %v923 = vpow.pop %v922
        %v924 = vmul.f32 %v886, 1.442695
        %v925 = vpow.pop %v924
        %v926 = vmul.f32 %v887, 1.442695
        %v927 = vpow.pop %v926
        %v928 = vmul.f32 %v888, 1.442695
        %v929 = vpow.pop %v928
        %v930 = vmul.f32 %v889, 1.442695
        %v931 = vpow.pop %v930
        %v932 = vmul.f32 %v890, 1.442695
        %v933 = vpow.pop %v932
        %v934 = vmul.f32 %v891, 1.442695
        %v935 = vpow.pop %v934
        %v936 = vmul.f32 %v892, 1.442695
        %v937 = vpow.pop %v936
        %v938 = vmul.f32 %v893, 1.442695
        %v939 = vpow.pop %v938
        %v940 = vmul.f32 %v894, 1.442695
        %v941 = vpow.pop %v940
        %v942 = vmul.f32 %v895, 1.442695
        %v943 = vpow.pop %v942
        %v944 = vmul.f32 %v896, 1.442695
        %v945 = vpow.pop %v944
        %v946 = vmul.f32 %v897, 1.442695
        %v947 = vpow.pop %v946
        %v948 = vmul.f32 %v898, 1.442695
        %v949 = vpow.pop %v948
        %v950 = vmul.f32 %v899, 1.442695
        %v951 = vpow.pop %v950
        %v952 = vmul.f32 %v900, 1.442695
        %v953 = vpow.pop %v952
        %v954 = vmul.f32 %v901, 1.442695
        %v955 = vpow.pop %v954
        %v956 = vmul.f32 %v902, 1.442695
        %v957 = vpow.pop %v956
        %v958 = vmul.f32 %v903, 1.442695
        %v959 = vpow.pop %v958
        %v960 = vmul.f32 %v904, 1.442695
        %v961 = vpow.pop %v960
        %v962 = vmul.f32 %v905, 1.442695
        %v963 = vpow.pop %v962
        %v964 = vmul.f32 %v906, 1.442695
        %v965 = vpow.pop %v964
        %v966 = vmul.f32 %v907, 1.442695
        %v967 = vpow.pop %v966
        %v968 = vmul.f32 %v908, 1.442695
        %v969 = vpow.pop %v968
        %v970 = vmul.f32 %v909, 1.442695
        %v971 = vpow.pop %v970
        %v972 = vmul.f32 %v910, 1.442695
        %v973 = vpow.pop %v972
        %v974 = vmul.f32 %v911, 1.442695
        %v975 = vpow.pop %v974
        %v976 = vadd.f32 %v913, 1.0
        %v977 = vadd.f32 %v915, 1.0
        %v978 = vadd.f32 %v917, 1.0
        %v979 = vadd.f32 %v919, 1.0
        %v980 = vadd.f32 %v921, 1.0
        %v981 = vadd.f32 %v923, 1.0
        %v982 = vadd.f32 %v925, 1.0
        %v983 = vadd.f32 %v927, 1.0
        %v984 = vadd.f32 %v929, 1.0
        %v985 = vadd.f32 %v931, 1.0
        %v986 = vadd.f32 %v933, 1.0
        %v987 = vadd.f32 %v935, 1.0
        %v988 = vadd.f32 %v937, 1.0
        %v989 = vadd.f32 %v939, 1.0
        %v990 = vadd.f32 %v941, 1.0
        %v991 = vadd.f32 %v943, 1.0
        %v992 = vadd.f32 %v945, 1.0
        %v993 = vadd.f32 %v947, 1.0
        %v994 = vadd.f32 %v949, 1.0
        %v995 = vadd.f32 %v951, 1.0
        %v996 = vadd.f32 %v953, 1.0
        %v997 = vadd.f32 %v955, 1.0
        %v998 = vadd.f32 %v957, 1.0
        %v999 = vadd.f32 %v959, 1.0
        %v1000 = vadd.f32 %v961, 1.0
        %v1001 = vadd.f32 %v963, 1.0
        %v1002 = vadd.f32 %v965, 1.0
        %v1003 = vadd.f32 %v967, 1.0
        %v1004 = vadd.f32 %v969, 1.0
        %v1005 = vadd.f32 %v971, 1.0
        %v1006 = vadd.f32 %v973, 1.0
        %v1007 = vadd.f32 %v975, 1.0
        %v1008 = vrcp.pop %v976
        %v1009 = vmul.f32 1.0, %v1008
        %v1010 = vrcp.pop %v977
        %v1011 = vmul.f32 1.0, %v1010
        %v1012 = vrcp.pop %v978
        %v1013 = vmul.f32 1.0, %v1012
        %v1014 = vrcp.pop %v979
        %v1015 = vmul.f32 1.0, %v1014
        %v1016 = vrcp.pop %v980
        %v1017 = vmul.f32 1.0, %v1016
        %v1018 = vrcp.pop %v981
        %v1019 = vmul.f32 1.0, %v1018
        %v1020 = vrcp.pop %v982
        %v1021 = vmul.f32 1.0, %v1020
        %v1022 = vrcp.pop %v983
        %v1023 = vmul.f32 1.0, %v1022
        %v1024 = vrcp.pop %v984
        %v1025 = vmul.f32 1.0, %v1024
        %v1026 = vrcp.pop %v985
        %v1027 = vmul.f32 1.0, %v1026
        %v1028 = vrcp.pop %v986
        %v1029 = vmul.f32 1.0, %v1028
        %v1030 = vrcp.pop %v987
        %v1031 = vmul.f32 1.0, %v1030
        %v1032 = vrcp.pop %v988
        %v1033 = vmul.f32 1.0, %v1032
        %v1034 = vrcp.pop %v989
        %v1035 = vmul.f32 1.0, %v1034
        %v1036 = vrcp.pop %v990
        %v1037 = vmul.f32 1.0, %v1036
        %v1038 = vrcp.pop %v991
        %v1039 = vmul.f32 1.0, %v1038
        %v1040 = vrcp.pop %v992
        %v1041 = vmul.f32 1.0, %v1040
        %v1042 = vrcp.pop %v993
        %v1043 = vmul.f32 1.0, %v1042
        %v1044 = vrcp.pop %v994
        %v1045 = vmul.f32 1.0, %v1044
        %v1046 = vrcp.pop %v995
        %v1047 = vmul.f32 1.0, %v1046
        %v1048 = vrcp.pop %v996
        %v1049 = vmul.f32 1.0, %v1048
        %v1050 = vrcp.pop %v997
        %v1051 = vmul.f32 1.0, %v1050
        %v1052 = vrcp.pop %v998
        %v1053 = vmul.f32 1.0, %v1052
        %v1054 = vrcp.pop %v999
        %v1055 = vmul.f32 1.0, %v1054
        %v1056 = vrcp.pop %v1000
        %v1057 = vmul.f32 1.0, %v1056
        %v1058 = vrcp.pop %v1001
        %v1059 = vmul.f32 1.0, %v1058
        %v1060 = vrcp.pop %v1002
        %v1061 = vmul.f32 1.0, %v1060
        %v1062 = vrcp.pop %v1003
        %v1063 = vmul.f32 1.0, %v1062
        %v1064 = vrcp.pop %v1004
        %v1065 = vmul.f32 1.0, %v1064
        %v1066 = vrcp.pop %v1005
        %v1067 = vmul.f32 1.0, %v1066
        %v1068 = vrcp.pop %v1006
        %v1069 = vmul.f32 1.0, %v1068
        %v1070 = vrcp.pop %v1007
        %v1071 = vmul.f32 1.0, %v1070
        %v1104 = vlaneseq
        %v1105 = vshrl.u32 %v1104, 7
        %v1106 = vsub.s32 0, %v1105
        %v1107 = vrot.slane %v1009, %v1106
        %v1108 = vlaneseq
        %v1109 = vshrl.u32 %v1108, 7
        %v1110 = vsub.s32 1, %v1109
        %v1111 = vrot.slane %v1009, %v1110
        %v1112 = vlaneseq
        %v1113 = vshrl.u32 %v1112, 7
        %v1114 = vsub.s32 2, %v1113
        %v1115 = vrot.slane %v1009, %v1114
        %v1116 = vlaneseq
        %v1117 = vshrl.u32 %v1116, 7
        %v1118 = vsub.s32 3, %v1117
        %v1119 = vrot.slane %v1009, %v1118
        %v1120 = vlaneseq
        %v1121 = vshrl.u32 %v1120, 7
        %v1122 = vsub.s32 4, %v1121
        %v1123 = vrot.slane %v1009, %v1122
        %v1124 = vlaneseq
        %v1125 = vshrl.u32 %v1124, 7
        %v1126 = vsub.s32 5, %v1125
        %v1127 = vrot.slane %v1009, %v1126
        %v1128 = vlaneseq
        %v1129 = vshrl.u32 %v1128, 7
        %v1130 = vsub.s32 6, %v1129
        %v1131 = vrot.slane %v1009, %v1130
        %v1132 = vlaneseq
        %v1133 = vshrl.u32 %v1132, 7
        %v1134 = vsub.s32 7, %v1133
        %v1135 = vrot.slane %v1009, %v1134
        %v1136 = vlaneseq
        %v1137 = vshrl.u32 %v1136, 7
        %v1138 = vsub.s32 0, %v1137
        %v1139 = vrot.slane %v1011, %v1138
        %v1140 = vlaneseq
        %v1141 = vshrl.u32 %v1140, 7
        %v1142 = vsub.s32 1, %v1141
        %v1143 = vrot.slane %v1011, %v1142
        %v1144 = vlaneseq
        %v1145 = vshrl.u32 %v1144, 7
        %v1146 = vsub.s32 2, %v1145
        %v1147 = vrot.slane %v1011, %v1146
        %v1148 = vlaneseq
        %v1149 = vshrl.u32 %v1148, 7
        %v1150 = vsub.s32 3, %v1149
        %v1151 = vrot.slane %v1011, %v1150
        %v1152 = vlaneseq
        %v1153 = vshrl.u32 %v1152, 7
        %v1154 = vsub.s32 4, %v1153
        %v1155 = vrot.slane %v1011, %v1154
        %v1156 = vlaneseq
        %v1157 = vshrl.u32 %v1156, 7
        %v1158 = vsub.s32 5, %v1157
        %v1159 = vrot.slane %v1011, %v1158
        %v1160 = vlaneseq
        %v1161 = vshrl.u32 %v1160, 7
        %v1162 = vsub.s32 6, %v1161
        %v1163 = vrot.slane %v1011, %v1162
        %v1164 = vlaneseq
        %v1165 = vshrl.u32 %v1164, 7
        %v1166 = vsub.s32 7, %v1165
        %v1167 = vrot.slane %v1011, %v1166
        %v1168 = vlaneseq
        %v1169 = vshrl.u32 %v1168, 7
        %v1170 = vsub.s32 0, %v1169
        %v1171 = vrot.slane %v1013, %v1170
        %v1172 = vlaneseq
        %v1173 = vshrl.u32 %v1172, 7
        %v1174 = vsub.s32 1, %v1173
        %v1175 = vrot.slane %v1013, %v1174
        %v1176 = vlaneseq
        %v1177 = vshrl.u32 %v1176, 7
        %v1178 = vsub.s32 2, %v1177
        %v1179 = vrot.slane %v1013, %v1178
        %v1180 = vlaneseq
        %v1181 = vshrl.u32 %v1180, 7
        %v1182 = vsub.s32 3, %v1181
        %v1183 = vrot.slane %v1013, %v1182
        %v1184 = vlaneseq
        %v1185 = vshrl.u32 %v1184, 7
        %v1186 = vsub.s32 4, %v1185
        %v1187 = vrot.slane %v1013, %v1186
        %v1188 = vlaneseq
        %v1189 = vshrl.u32 %v1188, 7
        %v1190 = vsub.s32 5, %v1189
        %v1191 = vrot.slane %v1013, %v1190
        %v1192 = vlaneseq
        %v1193 = vshrl.u32 %v1192, 7
        %v1194 = vsub.s32 6, %v1193
        %v1195 = vrot.slane %v1013, %v1194
        %v1196 = vlaneseq
        %v1197 = vshrl.u32 %v1196, 7
        %v1198 = vsub.s32 7, %v1197
        %v1199 = vrot.slane %v1013, %v1198
        %v1200 = vlaneseq
        %v1201 = vshrl.u32 %v1200, 7
        %v1202 = vsub.s32 0, %v1201
        %v1203 = vrot.slane %v1015, %v1202
        %v1204 = vlaneseq
        %v1205 = vshrl.u32 %v1204, 7
        %v1206 = vsub.s32 1, %v1205
        %v1207 = vrot.slane %v1015, %v1206
        %v1208 = vlaneseq
        %v1209 = vshrl.u32 %v1208, 7
        %v1210 = vsub.s32 2, %v1209
        %v1211 = vrot.slane %v1015, %v1210
        %v1212 = vlaneseq
        %v1213 = vshrl.u32 %v1212, 7
        %v1214 = vsub.s32 3, %v1213
        %v1215 = vrot.slane %v1015, %v1214
        %v1216 = vlaneseq
        %v1217 = vshrl.u32 %v1216, 7
        %v1218 = vsub.s32 4, %v1217
        %v1219 = vrot.slane %v1015, %v1218
        %v1220 = vlaneseq
        %v1221 = vshrl.u32 %v1220, 7
        %v1222 = vsub.s32 5, %v1221
        %v1223 = vrot.slane %v1015, %v1222
        %v1224 = vlaneseq
        %v1225 = vshrl.u32 %v1224, 7
        %v1226 = vsub.s32 6, %v1225
        %v1227 = vrot.slane %v1015, %v1226
        %v1228 = vlaneseq
        %v1229 = vshrl.u32 %v1228, 7
        %v1230 = vsub.s32 7, %v1229
        %v1231 = vrot.slane %v1015, %v1230
        %v1232 = vlaneseq
        %v1233 = vshrl.u32 %v1232, 7
        %v1234 = vsub.s32 0, %v1233
        %v1235 = vrot.slane %v1017, %v1234
        %v1236 = vlaneseq
        %v1237 = vshrl.u32 %v1236, 7
        %v1238 = vsub.s32 1, %v1237
        %v1239 = vrot.slane %v1017, %v1238
        %v1240 = vlaneseq
        %v1241 = vshrl.u32 %v1240, 7
        %v1242 = vsub.s32 2, %v1241
        %v1243 = vrot.slane %v1017, %v1242
        %v1244 = vlaneseq
        %v1245 = vshrl.u32 %v1244, 7
        %v1246 = vsub.s32 3, %v1245
        %v1247 = vrot.slane %v1017, %v1246
        %v1248 = vlaneseq
        %v1249 = vshrl.u32 %v1248, 7
        %v1250 = vsub.s32 4, %v1249
        %v1251 = vrot.slane %v1017, %v1250
        %v1252 = vlaneseq
        %v1253 = vshrl.u32 %v1252, 7
        %v1254 = vsub.s32 5, %v1253
        %v1255 = vrot.slane %v1017, %v1254
        %v1256 = vlaneseq
        %v1257 = vshrl.u32 %v1256, 7
        %v1258 = vsub.s32 6, %v1257
        %v1259 = vrot.slane %v1017, %v1258
        %v1260 = vlaneseq
        %v1261 = vshrl.u32 %v1260, 7
        %v1262 = vsub.s32 7, %v1261
        %v1263 = vrot.slane %v1017, %v1262
        %v1264 = vlaneseq
        %v1265 = vshrl.u32 %v1264, 7
        %v1266 = vsub.s32 0, %v1265
        %v1267 = vrot.slane %v1019, %v1266
        %v1268 = vlaneseq
        %v1269 = vshrl.u32 %v1268, 7
        %v1270 = vsub.s32 1, %v1269
        %v1271 = vrot.slane %v1019, %v1270
        %v1272 = vlaneseq
        %v1273 = vshrl.u32 %v1272, 7
        %v1274 = vsub.s32 2, %v1273
        %v1275 = vrot.slane %v1019, %v1274
        %v1276 = vlaneseq
        %v1277 = vshrl.u32 %v1276, 7
        %v1278 = vsub.s32 3, %v1277
        %v1279 = vrot.slane %v1019, %v1278
        %v1280 = vlaneseq
        %v1281 = vshrl.u32 %v1280, 7
        %v1282 = vsub.s32 4, %v1281
        %v1283 = vrot.slane %v1019, %v1282
        %v1284 = vlaneseq
        %v1285 = vshrl.u32 %v1284, 7
        %v1286 = vsub.s32 5, %v1285
        %v1287 = vrot.slane %v1019, %v1286
        %v1288 = vlaneseq
        %v1289 = vshrl.u32 %v1288, 7
        %v1290 = vsub.s32 6, %v1289
        %v1291 = vrot.slane %v1019, %v1290
        %v1292 = vlaneseq
        %v1293 = vshrl.u32 %v1292, 7
        %v1294 = vsub.s32 7, %v1293
        %v1295 = vrot.slane %v1019, %v1294
        %v1296 = vlaneseq
        %v1297 = vshrl.u32 %v1296, 7
        %v1298 = vsub.s32 0, %v1297
        %v1299 = vrot.slane %v1021, %v1298
        %v1300 = vlaneseq
        %v1301 = vshrl.u32 %v1300, 7
        %v1302 = vsub.s32 1, %v1301
        %v1303 = vrot.slane %v1021, %v1302
        %v1304 = vlaneseq
        %v1305 = vshrl.u32 %v1304, 7
        %v1306 = vsub.s32 2, %v1305
        %v1307 = vrot.slane %v1021, %v1306
        %v1308 = vlaneseq
        %v1309 = vshrl.u32 %v1308, 7
        %v1310 = vsub.s32 3, %v1309
        %v1311 = vrot.slane %v1021, %v1310
        %v1312 = vlaneseq
        %v1313 = vshrl.u32 %v1312, 7
        %v1314 = vsub.s32 4, %v1313
        %v1315 = vrot.slane %v1021, %v1314
        %v1316 = vlaneseq
        %v1317 = vshrl.u32 %v1316, 7
        %v1318 = vsub.s32 5, %v1317
        %v1319 = vrot.slane %v1021, %v1318
        %v1320 = vlaneseq
        %v1321 = vshrl.u32 %v1320, 7
        %v1322 = vsub.s32 6, %v1321
        %v1323 = vrot.slane %v1021, %v1322
        %v1324 = vlaneseq
        %v1325 = vshrl.u32 %v1324, 7
        %v1326 = vsub.s32 7, %v1325
        %v1327 = vrot.slane %v1021, %v1326
        %v1328 = vlaneseq
        %v1329 = vshrl.u32 %v1328, 7
        %v1330 = vsub.s32 0, %v1329
        %v1331 = vrot.slane %v1023, %v1330
        %v1332 = vlaneseq
        %v1333 = vshrl.u32 %v1332, 7
        %v1334 = vsub.s32 1, %v1333
        %v1335 = vrot.slane %v1023, %v1334
        %v1336 = vlaneseq
        %v1337 = vshrl.u32 %v1336, 7
        %v1338 = vsub.s32 2, %v1337
        %v1339 = vrot.slane %v1023, %v1338
        %v1340 = vlaneseq
        %v1341 = vshrl.u32 %v1340, 7
        %v1342 = vsub.s32 3, %v1341
        %v1343 = vrot.slane %v1023, %v1342
        %v1344 = vlaneseq
        %v1345 = vshrl.u32 %v1344, 7
        %v1346 = vsub.s32 4, %v1345
        %v1347 = vrot.slane %v1023, %v1346
        %v1348 = vlaneseq
        %v1349 = vshrl.u32 %v1348, 7
        %v1350 = vsub.s32 5, %v1349
        %v1351 = vrot.slane %v1023, %v1350
        %v1352 = vlaneseq
        %v1353 = vshrl.u32 %v1352, 7
        %v1354 = vsub.s32 6, %v1353
        %v1355 = vrot.slane %v1023, %v1354
        %v1356 = vlaneseq
        %v1357 = vshrl.u32 %v1356, 7
        %v1358 = vsub.s32 7, %v1357
        %v1359 = vrot.slane %v1023, %v1358
        %v1360 = vlaneseq
        %v1361 = vshrl.u32 %v1360, 7
        %v1362 = vsub.s32 0, %v1361
        %v1363 = vrot.slane %v1025, %v1362
        %v1364 = vlaneseq
        %v1365 = vshrl.u32 %v1364, 7
        %v1366 = vsub.s32 1, %v1365
        %v1367 = vrot.slane %v1025, %v1366
        %v1368 = vlaneseq
        %v1369 = vshrl.u32 %v1368, 7
        %v1370 = vsub.s32 2, %v1369
        %v1371 = vrot.slane %v1025, %v1370
        %v1372 = vlaneseq
        %v1373 = vshrl.u32 %v1372, 7
        %v1374 = vsub.s32 3, %v1373
        %v1375 = vrot.slane %v1025, %v1374
        %v1376 = vlaneseq
        %v1377 = vshrl.u32 %v1376, 7
        %v1378 = vsub.s32 4, %v1377
        %v1379 = vrot.slane %v1025, %v1378
        %v1380 = vlaneseq
        %v1381 = vshrl.u32 %v1380, 7
        %v1382 = vsub.s32 5, %v1381
        %v1383 = vrot.slane %v1025, %v1382
        %v1384 = vlaneseq
        %v1385 = vshrl.u32 %v1384, 7
        %v1386 = vsub.s32 6, %v1385
        %v1387 = vrot.slane %v1025, %v1386
        %v1388 = vlaneseq
        %v1389 = vshrl.u32 %v1388, 7
        %v1390 = vsub.s32 7, %v1389
        %v1391 = vrot.slane %v1025, %v1390
        %v1392 = vlaneseq
        %v1393 = vshrl.u32 %v1392, 7
        %v1394 = vsub.s32 0, %v1393
        %v1395 = vrot.slane %v1027, %v1394
        %v1396 = vlaneseq
        %v1397 = vshrl.u32 %v1396, 7
        %v1398 = vsub.s32 1, %v1397
        %v1399 = vrot.slane %v1027, %v1398
        %v1400 = vlaneseq
        %v1401 = vshrl.u32 %v1400, 7
        %v1402 = vsub.s32 2, %v1401
        %v1403 = vrot.slane %v1027, %v1402
        %v1404 = vlaneseq
        %v1405 = vshrl.u32 %v1404, 7
        %v1406 = vsub.s32 3, %v1405
        %v1407 = vrot.slane %v1027, %v1406
        %v1408 = vlaneseq
        %v1409 = vshrl.u32 %v1408, 7
        %v1410 = vsub.s32 4, %v1409
        %v1411 = vrot.slane %v1027, %v1410
        %v1412 = vlaneseq
        %v1413 = vshrl.u32 %v1412, 7
        %v1414 = vsub.s32 5, %v1413
        %v1415 = vrot.slane %v1027, %v1414
        %v1416 = vlaneseq
        %v1417 = vshrl.u32 %v1416, 7
        %v1418 = vsub.s32 6, %v1417
        %v1419 = vrot.slane %v1027, %v1418
        %v1420 = vlaneseq
        %v1421 = vshrl.u32 %v1420, 7
        %v1422 = vsub.s32 7, %v1421
        %v1423 = vrot.slane %v1027, %v1422
        %v1424 = vlaneseq
        %v1425 = vshrl.u32 %v1424, 7
        %v1426 = vsub.s32 0, %v1425
        %v1427 = vrot.slane %v1029, %v1426
        %v1428 = vlaneseq
        %v1429 = vshrl.u32 %v1428, 7
        %v1430 = vsub.s32 1, %v1429
        %v1431 = vrot.slane %v1029, %v1430
        %v1432 = vlaneseq
        %v1433 = vshrl.u32 %v1432, 7
        %v1434 = vsub.s32 2, %v1433
        %v1435 = vrot.slane %v1029, %v1434
        %v1436 = vlaneseq
        %v1437 = vshrl.u32 %v1436, 7
        %v1438 = vsub.s32 3, %v1437
        %v1439 = vrot.slane %v1029, %v1438
        %v1440 = vlaneseq
        %v1441 = vshrl.u32 %v1440, 7
        %v1442 = vsub.s32 4, %v1441
        %v1443 = vrot.slane %v1029, %v1442
        %v1444 = vlaneseq
        %v1445 = vshrl.u32 %v1444, 7
        %v1446 = vsub.s32 5, %v1445
        %v1447 = vrot.slane %v1029, %v1446
        %v1448 = vlaneseq
        %v1449 = vshrl.u32 %v1448, 7
        %v1450 = vsub.s32 6, %v1449
        %v1451 = vrot.slane %v1029, %v1450
        %v1452 = vlaneseq
        %v1453 = vshrl.u32 %v1452, 7
        %v1454 = vsub.s32 7, %v1453
        %v1455 = vrot.slane %v1029, %v1454
        %v1456 = vlaneseq
        %v1457 = vshrl.u32 %v1456, 7
        %v1458 = vsub.s32 0, %v1457
        %v1459 = vrot.slane %v1031, %v1458
        %v1460 = vlaneseq
        %v1461 = vshrl.u32 %v1460, 7
        %v1462 = vsub.s32 1, %v1461
        %v1463 = vrot.slane %v1031, %v1462
        %v1464 = vlaneseq
        %v1465 = vshrl.u32 %v1464, 7
        %v1466 = vsub.s32 2, %v1465
        %v1467 = vrot.slane %v1031, %v1466
        %v1468 = vlaneseq
        %v1469 = vshrl.u32 %v1468, 7
        %v1470 = vsub.s32 3, %v1469
        %v1471 = vrot.slane %v1031, %v1470
        %v1472 = vlaneseq
        %v1473 = vshrl.u32 %v1472, 7
        %v1474 = vsub.s32 4, %v1473
        %v1475 = vrot.slane %v1031, %v1474
        %v1476 = vlaneseq
        %v1477 = vshrl.u32 %v1476, 7
        %v1478 = vsub.s32 5, %v1477
        %v1479 = vrot.slane %v1031, %v1478
        %v1480 = vlaneseq
        %v1481 = vshrl.u32 %v1480, 7
        %v1482 = vsub.s32 6, %v1481
        %v1483 = vrot.slane %v1031, %v1482
        %v1484 = vlaneseq
        %v1485 = vshrl.u32 %v1484, 7
        %v1486 = vsub.s32 7, %v1485
        %v1487 = vrot.slane %v1031, %v1486
        %v1488 = vlaneseq
        %v1489 = vshrl.u32 %v1488, 7
        %v1490 = vsub.s32 0, %v1489
        %v1491 = vrot.slane %v1033, %v1490
        %v1492 = vlaneseq
        %v1493 = vshrl.u32 %v1492, 7
        %v1494 = vsub.s32 1, %v1493
        %v1495 = vrot.slane %v1033, %v1494
        %v1496 = vlaneseq
        %v1497 = vshrl.u32 %v1496, 7
        %v1498 = vsub.s32 2, %v1497
        %v1499 = vrot.slane %v1033, %v1498
        %v1500 = vlaneseq
        %v1501 = vshrl.u32 %v1500, 7
        %v1502 = vsub.s32 3, %v1501
        %v1503 = vrot.slane %v1033, %v1502
        %v1504 = vlaneseq
        %v1505 = vshrl.u32 %v1504, 7
        %v1506 = vsub.s32 4, %v1505
        %v1507 = vrot.slane %v1033, %v1506
        %v1508 = vlaneseq
        %v1509 = vshrl.u32 %v1508, 7
        %v1510 = vsub.s32 5, %v1509
        %v1511 = vrot.slane %v1033, %v1510
        %v1512 = vlaneseq
        %v1513 = vshrl.u32 %v1512, 7
        %v1514 = vsub.s32 6, %v1513
        %v1515 = vrot.slane %v1033, %v1514
        %v1516 = vlaneseq
        %v1517 = vshrl.u32 %v1516, 7
        %v1518 = vsub.s32 7, %v1517
        %v1519 = vrot.slane %v1033, %v1518
        %v1520 = vlaneseq
        %v1521 = vshrl.u32 %v1520, 7
        %v1522 = vsub.s32 0, %v1521
        %v1523 = vrot.slane %v1035, %v1522
        %v1524 = vlaneseq
        %v1525 = vshrl.u32 %v1524, 7
        %v1526 = vsub.s32 1, %v1525
        %v1527 = vrot.slane %v1035, %v1526
        %v1528 = vlaneseq
        %v1529 = vshrl.u32 %v1528, 7
        %v1530 = vsub.s32 2, %v1529
        %v1531 = vrot.slane %v1035, %v1530
        %v1532 = vlaneseq
        %v1533 = vshrl.u32 %v1532, 7
        %v1534 = vsub.s32 3, %v1533
        %v1535 = vrot.slane %v1035, %v1534
        %v1536 = vlaneseq
        %v1537 = vshrl.u32 %v1536, 7
        %v1538 = vsub.s32 4, %v1537
        %v1539 = vrot.slane %v1035, %v1538
        %v1540 = vlaneseq
        %v1541 = vshrl.u32 %v1540, 7
        %v1542 = vsub.s32 5, %v1541
        %v1543 = vrot.slane %v1035, %v1542
        %v1544 = vlaneseq
        %v1545 = vshrl.u32 %v1544, 7
        %v1546 = vsub.s32 6, %v1545
        %v1547 = vrot.slane %v1035, %v1546
        %v1548 = vlaneseq
        %v1549 = vshrl.u32 %v1548, 7
        %v1550 = vsub.s32 7, %v1549
        %v1551 = vrot.slane %v1035, %v1550
        %v1552 = vlaneseq
        %v1553 = vshrl.u32 %v1552, 7
        %v1554 = vsub.s32 0, %v1553
        %v1555 = vrot.slane %v1037, %v1554
        %v1556 = vlaneseq
        %v1557 = vshrl.u32 %v1556, 7
        %v1558 = vsub.s32 1, %v1557
        %v1559 = vrot.slane %v1037, %v1558
        %v1560 = vlaneseq
        %v1561 = vshrl.u32 %v1560, 7
        %v1562 = vsub.s32 2, %v1561
        %v1563 = vrot.slane %v1037, %v1562
        %v1564 = vlaneseq
        %v1565 = vshrl.u32 %v1564, 7
        %v1566 = vsub.s32 3, %v1565
        %v1567 = vrot.slane %v1037, %v1566
        %v1568 = vlaneseq
        %v1569 = vshrl.u32 %v1568, 7
        %v1570 = vsub.s32 4, %v1569
        %v1571 = vrot.slane %v1037, %v1570
        %v1572 = vlaneseq
        %v1573 = vshrl.u32 %v1572, 7
        %v1574 = vsub.s32 5, %v1573
        %v1575 = vrot.slane %v1037, %v1574
        %v1576 = vlaneseq
        %v1577 = vshrl.u32 %v1576, 7
        %v1578 = vsub.s32 6, %v1577
        %v1579 = vrot.slane %v1037, %v1578
        %v1580 = vlaneseq
        %v1581 = vshrl.u32 %v1580, 7
        %v1582 = vsub.s32 7, %v1581
        %v1583 = vrot.slane %v1037, %v1582
        %v1584 = vlaneseq
        %v1585 = vshrl.u32 %v1584, 7
        %v1586 = vsub.s32 0, %v1585
        %v1587 = vrot.slane %v1039, %v1586
        %v1588 = vlaneseq
        %v1589 = vshrl.u32 %v1588, 7
        %v1590 = vsub.s32 1, %v1589
        %v1591 = vrot.slane %v1039, %v1590
        %v1592 = vlaneseq
        %v1593 = vshrl.u32 %v1592, 7
        %v1594 = vsub.s32 2, %v1593
        %v1595 = vrot.slane %v1039, %v1594
        %v1596 = vlaneseq
        %v1597 = vshrl.u32 %v1596, 7
        %v1598 = vsub.s32 3, %v1597
        %v1599 = vrot.slane %v1039, %v1598
        %v1600 = vlaneseq
        %v1601 = vshrl.u32 %v1600, 7
        %v1602 = vsub.s32 4, %v1601
        %v1603 = vrot.slane %v1039, %v1602
        %v1604 = vlaneseq
        %v1605 = vshrl.u32 %v1604, 7
        %v1606 = vsub.s32 5, %v1605
        %v1607 = vrot.slane %v1039, %v1606
        %v1608 = vlaneseq
        %v1609 = vshrl.u32 %v1608, 7
        %v1610 = vsub.s32 6, %v1609
        %v1611 = vrot.slane %v1039, %v1610
        %v1612 = vlaneseq
        %v1613 = vshrl.u32 %v1612, 7
        %v1614 = vsub.s32 7, %v1613
        %v1615 = vrot.slane %v1039, %v1614
        %v1616 = vlaneseq
        %v1617 = vshrl.u32 %v1616, 7
        %v1618 = vsub.s32 0, %v1617
        %v1619 = vrot.slane %v1041, %v1618
        %v1620 = vlaneseq
        %v1621 = vshrl.u32 %v1620, 7
        %v1622 = vsub.s32 1, %v1621
        %v1623 = vrot.slane %v1041, %v1622
        %v1624 = vlaneseq
        %v1625 = vshrl.u32 %v1624, 7
        %v1626 = vsub.s32 2, %v1625
        %v1627 = vrot.slane %v1041, %v1626
        %v1628 = vlaneseq
        %v1629 = vshrl.u32 %v1628, 7
        %v1630 = vsub.s32 3, %v1629
        %v1631 = vrot.slane %v1041, %v1630
        %v1632 = vlaneseq
        %v1633 = vshrl.u32 %v1632, 7
        %v1634 = vsub.s32 4, %v1633
        %v1635 = vrot.slane %v1041, %v1634
        %v1636 = vlaneseq
        %v1637 = vshrl.u32 %v1636, 7
        %v1638 = vsub.s32 5, %v1637
        %v1639 = vrot.slane %v1041, %v1638
        %v1640 = vlaneseq
        %v1641 = vshrl.u32 %v1640, 7
        %v1642 = vsub.s32 6, %v1641
        %v1643 = vrot.slane %v1041, %v1642
        %v1644 = vlaneseq
        %v1645 = vshrl.u32 %v1644, 7
        %v1646 = vsub.s32 7, %v1645
        %v1647 = vrot.slane %v1041, %v1646
        %v1648 = vlaneseq
        %v1649 = vshrl.u32 %v1648, 7
        %v1650 = vsub.s32 0, %v1649
        %v1651 = vrot.slane %v1043, %v1650
        %v1652 = vlaneseq
        %v1653 = vshrl.u32 %v1652, 7
        %v1654 = vsub.s32 1, %v1653
        %v1655 = vrot.slane %v1043, %v1654
        %v1656 = vlaneseq
        %v1657 = vshrl.u32 %v1656, 7
        %v1658 = vsub.s32 2, %v1657
        %v1659 = vrot.slane %v1043, %v1658
        %v1660 = vlaneseq
        %v1661 = vshrl.u32 %v1660, 7
        %v1662 = vsub.s32 3, %v1661
        %v1663 = vrot.slane %v1043, %v1662
        %v1664 = vlaneseq
        %v1665 = vshrl.u32 %v1664, 7
        %v1666 = vsub.s32 4, %v1665
        %v1667 = vrot.slane %v1043, %v1666
        %v1668 = vlaneseq
        %v1669 = vshrl.u32 %v1668, 7
        %v1670 = vsub.s32 5, %v1669
        %v1671 = vrot.slane %v1043, %v1670
        %v1672 = vlaneseq
        %v1673 = vshrl.u32 %v1672, 7
        %v1674 = vsub.s32 6, %v1673
        %v1675 = vrot.slane %v1043, %v1674
        %v1676 = vlaneseq
        %v1677 = vshrl.u32 %v1676, 7
        %v1678 = vsub.s32 7, %v1677
        %v1679 = vrot.slane %v1043, %v1678
        %v1680 = vlaneseq
        %v1681 = vshrl.u32 %v1680, 7
        %v1682 = vsub.s32 0, %v1681
        %v1683 = vrot.slane %v1045, %v1682
        %v1684 = vlaneseq
        %v1685 = vshrl.u32 %v1684, 7
        %v1686 = vsub.s32 1, %v1685
        %v1687 = vrot.slane %v1045, %v1686
        %v1688 = vlaneseq
        %v1689 = vshrl.u32 %v1688, 7
        %v1690 = vsub.s32 2, %v1689
        %v1691 = vrot.slane %v1045, %v1690
        %v1692 = vlaneseq
        %v1693 = vshrl.u32 %v1692, 7
        %v1694 = vsub.s32 3, %v1693
        %v1695 = vrot.slane %v1045, %v1694
        %v1696 = vlaneseq
        %v1697 = vshrl.u32 %v1696, 7
        %v1698 = vsub.s32 4, %v1697
        %v1699 = vrot.slane %v1045, %v1698
        %v1700 = vlaneseq
        %v1701 = vshrl.u32 %v1700, 7
        %v1702 = vsub.s32 5, %v1701
        %v1703 = vrot.slane %v1045, %v1702
        %v1704 = vlaneseq
        %v1705 = vshrl.u32 %v1704, 7
        %v1706 = vsub.s32 6, %v1705
        %v1707 = vrot.slane %v1045, %v1706
        %v1708 = vlaneseq
        %v1709 = vshrl.u32 %v1708, 7
        %v1710 = vsub.s32 7, %v1709
        %v1711 = vrot.slane %v1045, %v1710
        %v1712 = vlaneseq
        %v1713 = vshrl.u32 %v1712, 7
        %v1714 = vsub.s32 0, %v1713
        %v1715 = vrot.slane %v1047, %v1714
        %v1716 = vlaneseq
        %v1717 = vshrl.u32 %v1716, 7
        %v1718 = vsub.s32 1, %v1717
        %v1719 = vrot.slane %v1047, %v1718
        %v1720 = vlaneseq
        %v1721 = vshrl.u32 %v1720, 7
        %v1722 = vsub.s32 2, %v1721
        %v1723 = vrot.slane %v1047, %v1722
        %v1724 = vlaneseq
        %v1725 = vshrl.u32 %v1724, 7
        %v1726 = vsub.s32 3, %v1725
        %v1727 = vrot.slane %v1047, %v1726
        %v1728 = vlaneseq
        %v1729 = vshrl.u32 %v1728, 7
        %v1730 = vsub.s32 4, %v1729
        %v1731 = vrot.slane %v1047, %v1730
        %v1732 = vlaneseq
        %v1733 = vshrl.u32 %v1732, 7
        %v1734 = vsub.s32 5, %v1733
        %v1735 = vrot.slane %v1047, %v1734
        %v1736 = vlaneseq
        %v1737 = vshrl.u32 %v1736, 7
        %v1738 = vsub.s32 6, %v1737
        %v1739 = vrot.slane %v1047, %v1738
        %v1740 = vlaneseq
        %v1741 = vshrl.u32 %v1740, 7
        %v1742 = vsub.s32 7, %v1741
        %v1743 = vrot.slane %v1047, %v1742
        %v1744 = vlaneseq
        %v1745 = vshrl.u32 %v1744, 7
        %v1746 = vsub.s32 0, %v1745
        %v1747 = vrot.slane %v1049, %v1746
        %v1748 = vlaneseq
        %v1749 = vshrl.u32 %v1748, 7
        %v1750 = vsub.s32 1, %v1749
        %v1751 = vrot.slane %v1049, %v1750
        %v1752 = vlaneseq
        %v1753 = vshrl.u32 %v1752, 7
        %v1754 = vsub.s32 2, %v1753
        %v1755 = vrot.slane %v1049, %v1754
        %v1756 = vlaneseq
        %v1757 = vshrl.u32 %v1756, 7
        %v1758 = vsub.s32 3, %v1757
        %v1759 = vrot.slane %v1049, %v1758
        %v1760 = vlaneseq
        %v1761 = vshrl.u32 %v1760, 7
        %v1762 = vsub.s32 4, %v1761
        %v1763 = vrot.slane %v1049, %v1762
        %v1764 = vlaneseq
        %v1765 = vshrl.u32 %v1764, 7
        %v1766 = vsub.s32 5, %v1765
        %v1767 = vrot.slane %v1049, %v1766
        %v1768 = vlaneseq
        %v1769 = vshrl.u32 %v1768, 7
        %v1770 = vsub.s32 6, %v1769
        %v1771 = vrot.slane %v1049, %v1770
        %v1772 = vlaneseq
        %v1773 = vshrl.u32 %v1772, 7
        %v1774 = vsub.s32 7, %v1773
        %v1775 = vrot.slane %v1049, %v1774
        %v1776 = vlaneseq
        %v1777 = vshrl.u32 %v1776, 7
        %v1778 = vsub.s32 0, %v1777
        %v1779 = vrot.slane %v1051, %v1778
        %v1780 = vlaneseq
        %v1781 = vshrl.u32 %v1780, 7
        %v1782 = vsub.s32 1, %v1781
        %v1783 = vrot.slane %v1051, %v1782
        %v1784 = vlaneseq
        %v1785 = vshrl.u32 %v1784, 7
        %v1786 = vsub.s32 2, %v1785
        %v1787 = vrot.slane %v1051, %v1786
        %v1788 = vlaneseq
        %v1789 = vshrl.u32 %v1788, 7
        %v1790 = vsub.s32 3, %v1789
        %v1791 = vrot.slane %v1051, %v1790
        %v1792 = vlaneseq
        %v1793 = vshrl.u32 %v1792, 7
        %v1794 = vsub.s32 4, %v1793
        %v1795 = vrot.slane %v1051, %v1794
        %v1796 = vlaneseq
        %v1797 = vshrl.u32 %v1796, 7
        %v1798 = vsub.s32 5, %v1797
        %v1799 = vrot.slane %v1051, %v1798
        %v1800 = vlaneseq
        %v1801 = vshrl.u32 %v1800, 7
        %v1802 = vsub.s32 6, %v1801
        %v1803 = vrot.slane %v1051, %v1802
        %v1804 = vlaneseq
        %v1805 = vshrl.u32 %v1804, 7
        %v1806 = vsub.s32 7, %v1805
        %v1807 = vrot.slane %v1051, %v1806
        %v1808 = vlaneseq
        %v1809 = vshrl.u32 %v1808, 7
        %v1810 = vsub.s32 0, %v1809
        %v1811 = vrot.slane %v1053, %v1810
        %v1812 = vlaneseq
        %v1813 = vshrl.u32 %v1812, 7
        %v1814 = vsub.s32 1, %v1813
        %v1815 = vrot.slane %v1053, %v1814
        %v1816 = vlaneseq
        %v1817 = vshrl.u32 %v1816, 7
        %v1818 = vsub.s32 2, %v1817
        %v1819 = vrot.slane %v1053, %v1818
        %v1820 = vlaneseq
        %v1821 = vshrl.u32 %v1820, 7
        %v1822 = vsub.s32 3, %v1821
        %v1823 = vrot.slane %v1053, %v1822
        %v1824 = vlaneseq
        %v1825 = vshrl.u32 %v1824, 7
        %v1826 = vsub.s32 4, %v1825
        %v1827 = vrot.slane %v1053, %v1826
        %v1828 = vlaneseq
        %v1829 = vshrl.u32 %v1828, 7
        %v1830 = vsub.s32 5, %v1829
        %v1831 = vrot.slane %v1053, %v1830
        %v1832 = vlaneseq
        %v1833 = vshrl.u32 %v1832, 7
        %v1834 = vsub.s32 6, %v1833
        %v1835 = vrot.slane %v1053, %v1834
        %v1836 = vlaneseq
        %v1837 = vshrl.u32 %v1836, 7
        %v1838 = vsub.s32 7, %v1837
        %v1839 = vrot.slane %v1053, %v1838
        %v1840 = vlaneseq
        %v1841 = vshrl.u32 %v1840, 7
        %v1842 = vsub.s32 0, %v1841
        %v1843 = vrot.slane %v1055, %v1842
        %v1844 = vlaneseq
        %v1845 = vshrl.u32 %v1844, 7
        %v1846 = vsub.s32 1, %v1845
        %v1847 = vrot.slane %v1055, %v1846
        %v1848 = vlaneseq
        %v1849 = vshrl.u32 %v1848, 7
        %v1850 = vsub.s32 2, %v1849
        %v1851 = vrot.slane %v1055, %v1850
        %v1852 = vlaneseq
        %v1853 = vshrl.u32 %v1852, 7
        %v1854 = vsub.s32 3, %v1853
        %v1855 = vrot.slane %v1055, %v1854
        %v1856 = vlaneseq
        %v1857 = vshrl.u32 %v1856, 7
        %v1858 = vsub.s32 4, %v1857
        %v1859 = vrot.slane %v1055, %v1858
        %v1860 = vlaneseq
        %v1861 = vshrl.u32 %v1860, 7
        %v1862 = vsub.s32 5, %v1861
        %v1863 = vrot.slane %v1055, %v1862
        %v1864 = vlaneseq
        %v1865 = vshrl.u32 %v1864, 7
        %v1866 = vsub.s32 6, %v1865
        %v1867 = vrot.slane %v1055, %v1866
        %v1868 = vlaneseq
        %v1869 = vshrl.u32 %v1868, 7
        %v1870 = vsub.s32 7, %v1869
        %v1871 = vrot.slane %v1055, %v1870
        %v1872 = vlaneseq
        %v1873 = vshrl.u32 %v1872, 7
        %v1874 = vsub.s32 0, %v1873
        %v1875 = vrot.slane %v1057, %v1874
        %v1876 = vlaneseq
        %v1877 = vshrl.u32 %v1876, 7
        %v1878 = vsub.s32 1, %v1877
        %v1879 = vrot.slane %v1057, %v1878
        %v1880 = vlaneseq
        %v1881 = vshrl.u32 %v1880, 7
        %v1882 = vsub.s32 2, %v1881
        %v1883 = vrot.slane %v1057, %v1882
        %v1884 = vlaneseq
        %v1885 = vshrl.u32 %v1884, 7
        %v1886 = vsub.s32 3, %v1885
        %v1887 = vrot.slane %v1057, %v1886
        %v1888 = vlaneseq
        %v1889 = vshrl.u32 %v1888, 7
        %v1890 = vsub.s32 4, %v1889
        %v1891 = vrot.slane %v1057, %v1890
        %v1892 = vlaneseq
        %v1893 = vshrl.u32 %v1892, 7
        %v1894 = vsub.s32 5, %v1893
        %v1895 = vrot.slane %v1057, %v1894
        %v1896 = vlaneseq
        %v1897 = vshrl.u32 %v1896, 7
        %v1898 = vsub.s32 6, %v1897
        %v1899 = vrot.slane %v1057, %v1898
        %v1900 = vlaneseq
        %v1901 = vshrl.u32 %v1900, 7
        %v1902 = vsub.s32 7, %v1901
        %v1903 = vrot.slane %v1057, %v1902
        %v1904 = vlaneseq
        %v1905 = vshrl.u32 %v1904, 7
        %v1906 = vsub.s32 0, %v1905
        %v1907 = vrot.slane %v1059, %v1906
        %v1908 = vlaneseq
        %v1909 = vshrl.u32 %v1908, 7
        %v1910 = vsub.s32 1, %v1909
        %v1911 = vrot.slane %v1059, %v1910
        %v1912 = vlaneseq
        %v1913 = vshrl.u32 %v1912, 7
        %v1914 = vsub.s32 2, %v1913
        %v1915 = vrot.slane %v1059, %v1914
        %v1916 = vlaneseq
        %v1917 = vshrl.u32 %v1916, 7
        %v1918 = vsub.s32 3, %v1917
        %v1919 = vrot.slane %v1059, %v1918
        %v1920 = vlaneseq
        %v1921 = vshrl.u32 %v1920, 7
        %v1922 = vsub.s32 4, %v1921
        %v1923 = vrot.slane %v1059, %v1922
        %v1924 = vlaneseq
        %v1925 = vshrl.u32 %v1924, 7
        %v1926 = vsub.s32 5, %v1925
        %v1927 = vrot.slane %v1059, %v1926
        %v1928 = vlaneseq
        %v1929 = vshrl.u32 %v1928, 7
        %v1930 = vsub.s32 6, %v1929
        %v1931 = vrot.slane %v1059, %v1930
        %v1932 = vlaneseq
        %v1933 = vshrl.u32 %v1932, 7
        %v1934 = vsub.s32 7, %v1933
        %v1935 = vrot.slane %v1059, %v1934
        %v1936 = vlaneseq
        %v1937 = vshrl.u32 %v1936, 7
        %v1938 = vsub.s32 0, %v1937
        %v1939 = vrot.slane %v1061, %v1938
        %v1940 = vlaneseq
        %v1941 = vshrl.u32 %v1940, 7
        %v1942 = vsub.s32 1, %v1941
        %v1943 = vrot.slane %v1061, %v1942
        %v1944 = vlaneseq
        %v1945 = vshrl.u32 %v1944, 7
        %v1946 = vsub.s32 2, %v1945
        %v1947 = vrot.slane %v1061, %v1946
        %v1948 = vlaneseq
        %v1949 = vshrl.u32 %v1948, 7
        %v1950 = vsub.s32 3, %v1949
        %v1951 = vrot.slane %v1061, %v1950
        %v1952 = vlaneseq
        %v1953 = vshrl.u32 %v1952, 7
        %v1954 = vsub.s32 4, %v1953
        %v1955 = vrot.slane %v1061, %v1954
        %v1956 = vlaneseq
        %v1957 = vshrl.u32 %v1956, 7
        %v1958 = vsub.s32 5, %v1957
        %v1959 = vrot.slane %v1061, %v1958
        %v1960 = vlaneseq
        %v1961 = vshrl.u32 %v1960, 7
        %v1962 = vsub.s32 6, %v1961
        %v1963 = vrot.slane %v1061, %v1962
        %v1964 = vlaneseq
        %v1965 = vshrl.u32 %v1964, 7
        %v1966 = vsub.s32 7, %v1965
        %v1967 = vrot.slane %v1061, %v1966
        %v1968 = vlaneseq
        %v1969 = vshrl.u32 %v1968, 7
        %v1970 = vsub.s32 0, %v1969
        %v1971 = vrot.slane %v1063, %v1970
        %v1972 = vlaneseq
        %v1973 = vshrl.u32 %v1972, 7
        %v1974 = vsub.s32 1, %v1973
        %v1975 = vrot.slane %v1063, %v1974
        %v1976 = vlaneseq
        %v1977 = vshrl.u32 %v1976, 7
        %v1978 = vsub.s32 2, %v1977
        %v1979 = vrot.slane %v1063, %v1978
        %v1980 = vlaneseq
        %v1981 = vshrl.u32 %v1980, 7
        %v1982 = vsub.s32 3, %v1981
        %v1983 = vrot.slane %v1063, %v1982
        %v1984 = vlaneseq
        %v1985 = vshrl.u32 %v1984, 7
        %v1986 = vsub.s32 4, %v1985
        %v1987 = vrot.slane %v1063, %v1986
        %v1988 = vlaneseq
        %v1989 = vshrl.u32 %v1988, 7
        %v1990 = vsub.s32 5, %v1989
        %v1991 = vrot.slane %v1063, %v1990
        %v1992 = vlaneseq
        %v1993 = vshrl.u32 %v1992, 7
        %v1994 = vsub.s32 6, %v1993
        %v1995 = vrot.slane %v1063, %v1994
        %v1996 = vlaneseq
        %v1997 = vshrl.u32 %v1996, 7
        %v1998 = vsub.s32 7, %v1997
        %v1999 = vrot.slane %v1063, %v1998
        %v2000 = vlaneseq
        %v2001 = vshrl.u32 %v2000, 7
        %v2002 = vsub.s32 0, %v2001
        %v2003 = vrot.slane %v1065, %v2002
        %v2004 = vlaneseq
        %v2005 = vshrl.u32 %v2004, 7
        %v2006 = vsub.s32 1, %v2005
        %v2007 = vrot.slane %v1065, %v2006
        %v2008 = vlaneseq
        %v2009 = vshrl.u32 %v2008, 7
        %v2010 = vsub.s32 2, %v2009
        %v2011 = vrot.slane %v1065, %v2010
        %v2012 = vlaneseq
        %v2013 = vshrl.u32 %v2012, 7
        %v2014 = vsub.s32 3, %v2013
        %v2015 = vrot.slane %v1065, %v2014
        %v2016 = vlaneseq
        %v2017 = vshrl.u32 %v2016, 7
        %v2018 = vsub.s32 4, %v2017
        %v2019 = vrot.slane %v1065, %v2018
        %v2020 = vlaneseq
        %v2021 = vshrl.u32 %v2020, 7
        %v2022 = vsub.s32 5, %v2021
        %v2023 = vrot.slane %v1065, %v2022
        %v2024 = vlaneseq
        %v2025 = vshrl.u32 %v2024, 7
        %v2026 = vsub.s32 6, %v2025
        %v2027 = vrot.slane %v1065, %v2026
        %v2028 = vlaneseq
        %v2029 = vshrl.u32 %v2028, 7
        %v2030 = vsub.s32 7, %v2029
        %v2031 = vrot.slane %v1065, %v2030
        %v2032 = vlaneseq
        %v2033 = vshrl.u32 %v2032, 7
        %v2034 = vsub.s32 0, %v2033
        %v2035 = vrot.slane %v1067, %v2034
        %v2036 = vlaneseq
        %v2037 = vshrl.u32 %v2036, 7
        %v2038 = vsub.s32 1, %v2037
        %v2039 = vrot.slane %v1067, %v2038
        %v2040 = vlaneseq
        %v2041 = vshrl.u32 %v2040, 7
        %v2042 = vsub.s32 2, %v2041
        %v2043 = vrot.slane %v1067, %v2042
        %v2044 = vlaneseq
        %v2045 = vshrl.u32 %v2044, 7
        %v2046 = vsub.s32 3, %v2045
        %v2047 = vrot.slane %v1067, %v2046
        %v2048 = vlaneseq
        %v2049 = vshrl.u32 %v2048, 7
        %v2050 = vsub.s32 4, %v2049
        %v2051 = vrot.slane %v1067, %v2050
        %v2052 = vlaneseq
        %v2053 = vshrl.u32 %v2052, 7
        %v2054 = vsub.s32 5, %v2053
        %v2055 = vrot.slane %v1067, %v2054
        %v2056 = vlaneseq
        %v2057 = vshrl.u32 %v2056, 7
        %v2058 = vsub.s32 6, %v2057
        %v2059 = vrot.slane %v1067, %v2058
        %v2060 = vlaneseq
        %v2061 = vshrl.u32 %v2060, 7
        %v2062 = vsub.s32 7, %v2061
        %v2063 = vrot.slane %v1067, %v2062
        %v2064 = vlaneseq
        %v2065 = vshrl.u32 %v2064, 7
        %v2066 = vsub.s32 0, %v2065
        %v2067 = vrot.slane %v1069, %v2066
        %v2068 = vlaneseq
        %v2069 = vshrl.u32 %v2068, 7
        %v2070 = vsub.s32 1, %v2069
        %v2071 = vrot.slane %v1069, %v2070
        %v2072 = vlaneseq
        %v2073 = vshrl.u32 %v2072, 7
        %v2074 = vsub.s32 2, %v2073
        %v2075 = vrot.slane %v1069, %v2074
        %v2076 = vlaneseq
        %v2077 = vshrl.u32 %v2076, 7
        %v2078 = vsub.s32 3, %v2077
        %v2079 = vrot.slane %v1069, %v2078
        %v2080 = vlaneseq
        %v2081 = vshrl.u32 %v2080, 7
        %v2082 = vsub.s32 4, %v2081
        %v2083 = vrot.slane %v1069, %v2082
        %v2084 = vlaneseq
        %v2085 = vshrl.u32 %v2084, 7
        %v2086 = vsub.s32 5, %v2085
        %v2087 = vrot.slane %v1069, %v2086
        %v2088 = vlaneseq
        %v2089 = vshrl.u32 %v2088, 7
        %v2090 = vsub.s32 6, %v2089
        %v2091 = vrot.slane %v1069, %v2090
        %v2092 = vlaneseq
        %v2093 = vshrl.u32 %v2092, 7
        %v2094 = vsub.s32 7, %v2093
        %v2095 = vrot.slane %v1069, %v2094
        %v2096 = vlaneseq
        %v2097 = vshrl.u32 %v2096, 7
        %v2098 = vsub.s32 0, %v2097
        %v2099 = vrot.slane %v1071, %v2098
        %v2100 = vlaneseq
        %v2101 = vshrl.u32 %v2100, 7
        %v2102 = vsub.s32 1, %v2101
        %v2103 = vrot.slane %v1071, %v2102
        %v2104 = vlaneseq
        %v2105 = vshrl.u32 %v2104, 7
        %v2106 = vsub.s32 2, %v2105
        %v2107 = vrot.slane %v1071, %v2106
        %v2108 = vlaneseq
        %v2109 = vshrl.u32 %v2108, 7
        %v2110 = vsub.s32 3, %v2109
        %v2111 = vrot.slane %v1071, %v2110
        %v2112 = vlaneseq
        %v2113 = vshrl.u32 %v2112, 7
        %v2114 = vsub.s32 4, %v2113
        %v2115 = vrot.slane %v1071, %v2114
        %v2116 = vlaneseq
        %v2117 = vshrl.u32 %v2116, 7
        %v2118 = vsub.s32 5, %v2117
        %v2119 = vrot.slane %v1071, %v2118
        %v2120 = vlaneseq
        %v2121 = vshrl.u32 %v2120, 7
        %v2122 = vsub.s32 6, %v2121
        %v2123 = vrot.slane %v1071, %v2122
        %v2124 = vlaneseq
        %v2125 = vshrl.u32 %v2124, 7
        %v2126 = vsub.s32 7, %v2125
        %v2127 = vrot.slane %v1071, %v2126
        %v2128 = vcombine.low %v1107, %v1111
        %v2129 = vcombine.low %v1115, %v1119
        %v2130 = vcombine.low %v1123, %v1127
        %v2131 = vcombine.low %v1131, %v1135
        %v2133 = vunpack.c.l.s4 1966171168
        %v2134 = vunpack.c.0.s8 %v2133
        %v2135 = vlaneseq
        %v2136 = vshrl.u32 %v2135, 7
        %v2137 = vsub.s32 %v2134, %v2136
        %v2138 = vrot.slane %v2128, %v2137
        %v2140 = vunpack.c.l.s4 1966171168
        %v2141 = vunpack.c.0.s8 %v2140
        %v2142 = vlaneseq
        %v2143 = vshrl.u32 %v2142, 7
        %v2144 = vsub.s32 %v2141, %v2143
        %v2145 = vrot.slane %v2129, %v2144
        %v2147 = vunpack.c.l.s4 1966171168
        %v2148 = vunpack.c.0.s8 %v2147
        %v2149 = vlaneseq
        %v2150 = vshrl.u32 %v2149, 7
        %v2151 = vsub.s32 %v2148, %v2150
        %v2152 = vrot.slane %v2130, %v2151
        %v2154 = vunpack.c.l.s4 1966171168
        %v2155 = vunpack.c.0.s8 %v2154
        %v2156 = vlaneseq
        %v2157 = vshrl.u32 %v2156, 7
        %v2158 = vsub.s32 %v2155, %v2157
        %v2159 = vrot.slane %v2131, %v2158
        %v2160 = vcombine.low %v2138, %v2145
        %v2161 = vcombine.low %v2152, %v2159
        %v2163 = vunpack.c.l.s4 1966171168
        %v2164 = vunpack.c.0.s8 %v2163
        %v2165 = vlaneseq
        %v2166 = vshrl.u32 %v2165, 7
        %v2167 = vsub.s32 %v2164, %v2166
        %v2168 = vrot.slane %v2160, %v2167
        %v2170 = vunpack.c.l.s4 1966171168
        %v2171 = vunpack.c.0.s8 %v2170
        %v2172 = vlaneseq
        %v2173 = vshrl.u32 %v2172, 7
        %v2174 = vsub.s32 %v2171, %v2173
        %v2175 = vrot.slane %v2161, %v2174
        %v2176 = vcombine.low %v2168, %v2175
        %v2177 = vcombine.low %v1139, %v1143
        %v2178 = vcombine.low %v1147, %v1151
        %v2179 = vcombine.low %v1155, %v1159
        %v2180 = vcombine.low %v1163, %v1167
        %v2182 = vunpack.c.l.s4 1966171168
        %v2183 = vunpack.c.0.s8 %v2182
        %v2184 = vlaneseq
        %v2185 = vshrl.u32 %v2184, 7
        %v2186 = vsub.s32 %v2183, %v2185
        %v2187 = vrot.slane %v2177, %v2186
        %v2189 = vunpack.c.l.s4 1966171168
        %v2190 = vunpack.c.0.s8 %v2189
        %v2191 = vlaneseq
        %v2192 = vshrl.u32 %v2191, 7
        %v2193 = vsub.s32 %v2190, %v2192
        %v2194 = vrot.slane %v2178, %v2193
        %v2196 = vunpack.c.l.s4 1966171168
        %v2197 = vunpack.c.0.s8 %v2196
        %v2198 = vlaneseq
        %v2199 = vshrl.u32 %v2198, 7
        %v2200 = vsub.s32 %v2197, %v2199
        %v2201 = vrot.slane %v2179, %v2200
        %v2203 = vunpack.c.l.s4 1966171168
        %v2204 = vunpack.c.0.s8 %v2203
        %v2205 = vlaneseq
        %v2206 = vshrl.u32 %v2205, 7
        %v2207 = vsub.s32 %v2204, %v2206
        %v2208 = vrot.slane %v2180, %v2207
        %v2209 = vcombine.low %v2187, %v2194
        %v2210 = vcombine.low %v2201, %v2208
        %v2212 = vunpack.c.l.s4 1966171168
        %v2213 = vunpack.c.0.s8 %v2212
        %v2214 = vlaneseq
        %v2215 = vshrl.u32 %v2214, 7
        %v2216 = vsub.s32 %v2213, %v2215
        %v2217 = vrot.slane %v2209, %v2216
        %v2219 = vunpack.c.l.s4 1966171168
        %v2220 = vunpack.c.0.s8 %v2219
        %v2221 = vlaneseq
        %v2222 = vshrl.u32 %v2221, 7
        %v2223 = vsub.s32 %v2220, %v2222
        %v2224 = vrot.slane %v2210, %v2223
        %v2225 = vcombine.low %v2217, %v2224
        %v2226 = vcombine.low %v1171, %v1175
        %v2227 = vcombine.low %v1179, %v1183
        %v2228 = vcombine.low %v1187, %v1191
        %v2229 = vcombine.low %v1195, %v1199
        %v2231 = vunpack.c.l.s4 1966171168
        %v2232 = vunpack.c.0.s8 %v2231
        %v2233 = vlaneseq
        %v2234 = vshrl.u32 %v2233, 7
        %v2235 = vsub.s32 %v2232, %v2234
        %v2236 = vrot.slane %v2226, %v2235
        %v2238 = vunpack.c.l.s4 1966171168
        %v2239 = vunpack.c.0.s8 %v2238
        %v2240 = vlaneseq
        %v2241 = vshrl.u32 %v2240, 7
        %v2242 = vsub.s32 %v2239, %v2241
        %v2243 = vrot.slane %v2227, %v2242
        %v2245 = vunpack.c.l.s4 1966171168
        %v2246 = vunpack.c.0.s8 %v2245
        %v2247 = vlaneseq
        %v2248 = vshrl.u32 %v2247, 7
        %v2249 = vsub.s32 %v2246, %v2248
        %v2250 = vrot.slane %v2228, %v2249
        %v2252 = vunpack.c.l.s4 1966171168
        %v2253 = vunpack.c.0.s8 %v2252
        %v2254 = vlaneseq
        %v2255 = vshrl.u32 %v2254, 7
        %v2256 = vsub.s32 %v2253, %v2255
        %v2257 = vrot.slane %v2229, %v2256
        %v2258 = vcombine.low %v2236, %v2243
        %v2259 = vcombine.low %v2250, %v2257
        %v2261 = vunpack.c.l.s4 1966171168
        %v2262 = vunpack.c.0.s8 %v2261
        %v2263 = vlaneseq
        %v2264 = vshrl.u32 %v2263, 7
        %v2265 = vsub.s32 %v2262, %v2264
        %v2266 = vrot.slane %v2258, %v2265
        %v2268 = vunpack.c.l.s4 1966171168
        %v2269 = vunpack.c.0.s8 %v2268
        %v2270 = vlaneseq
        %v2271 = vshrl.u32 %v2270, 7
        %v2272 = vsub.s32 %v2269, %v2271
        %v2273 = vrot.slane %v2259, %v2272
        %v2274 = vcombine.low %v2266, %v2273
        %v2275 = vcombine.low %v1203, %v1207
        %v2276 = vcombine.low %v1211, %v1215
        %v2277 = vcombine.low %v1219, %v1223
        %v2278 = vcombine.low %v1227, %v1231
        %v2280 = vunpack.c.l.s4 1966171168
        %v2281 = vunpack.c.0.s8 %v2280
        %v2282 = vlaneseq
        %v2283 = vshrl.u32 %v2282, 7
        %v2284 = vsub.s32 %v2281, %v2283
        %v2285 = vrot.slane %v2275, %v2284
        %v2287 = vunpack.c.l.s4 1966171168
        %v2288 = vunpack.c.0.s8 %v2287
        %v2289 = vlaneseq
        %v2290 = vshrl.u32 %v2289, 7
        %v2291 = vsub.s32 %v2288, %v2290
        %v2292 = vrot.slane %v2276, %v2291
        %v2294 = vunpack.c.l.s4 1966171168
        %v2295 = vunpack.c.0.s8 %v2294
        %v2296 = vlaneseq
        %v2297 = vshrl.u32 %v2296, 7
        %v2298 = vsub.s32 %v2295, %v2297
        %v2299 = vrot.slane %v2277, %v2298
        %v2301 = vunpack.c.l.s4 1966171168
        %v2302 = vunpack.c.0.s8 %v2301
        %v2303 = vlaneseq
        %v2304 = vshrl.u32 %v2303, 7
        %v2305 = vsub.s32 %v2302, %v2304
        %v2306 = vrot.slane %v2278, %v2305
        %v2307 = vcombine.low %v2285, %v2292
        %v2308 = vcombine.low %v2299, %v2306
        %v2310 = vunpack.c.l.s4 1966171168
        %v2311 = vunpack.c.0.s8 %v2310
        %v2312 = vlaneseq
        %v2313 = vshrl.u32 %v2312, 7
        %v2314 = vsub.s32 %v2311, %v2313
        %v2315 = vrot.slane %v2307, %v2314
        %v2317 = vunpack.c.l.s4 1966171168
        %v2318 = vunpack.c.0.s8 %v2317
        %v2319 = vlaneseq
        %v2320 = vshrl.u32 %v2319, 7
        %v2321 = vsub.s32 %v2318, %v2320
        %v2322 = vrot.slane %v2308, %v2321
        %v2323 = vcombine.low %v2315, %v2322
        %v2324 = vcombine.low %v1235, %v1239
        %v2325 = vcombine.low %v1243, %v1247
        %v2326 = vcombine.low %v1251, %v1255
        %v2327 = vcombine.low %v1259, %v1263
        %v2329 = vunpack.c.l.s4 1966171168
        %v2330 = vunpack.c.0.s8 %v2329
        %v2331 = vlaneseq
        %v2332 = vshrl.u32 %v2331, 7
        %v2333 = vsub.s32 %v2330, %v2332
        %v2334 = vrot.slane %v2324, %v2333
        %v2336 = vunpack.c.l.s4 1966171168
        %v2337 = vunpack.c.0.s8 %v2336
        %v2338 = vlaneseq
        %v2339 = vshrl.u32 %v2338, 7
        %v2340 = vsub.s32 %v2337, %v2339
        %v2341 = vrot.slane %v2325, %v2340
        %v2343 = vunpack.c.l.s4 1966171168
        %v2344 = vunpack.c.0.s8 %v2343
        %v2345 = vlaneseq
        %v2346 = vshrl.u32 %v2345, 7
        %v2347 = vsub.s32 %v2344, %v2346
        %v2348 = vrot.slane %v2326, %v2347
        %v2350 = vunpack.c.l.s4 1966171168
        %v2351 = vunpack.c.0.s8 %v2350
        %v2352 = vlaneseq
        %v2353 = vshrl.u32 %v2352, 7
        %v2354 = vsub.s32 %v2351, %v2353
        %v2355 = vrot.slane %v2327, %v2354
        %v2356 = vcombine.low %v2334, %v2341
        %v2357 = vcombine.low %v2348, %v2355
        %v2359 = vunpack.c.l.s4 1966171168
        %v2360 = vunpack.c.0.s8 %v2359
        %v2361 = vlaneseq
        %v2362 = vshrl.u32 %v2361, 7
        %v2363 = vsub.s32 %v2360, %v2362
        %v2364 = vrot.slane %v2356, %v2363
        %v2366 = vunpack.c.l.s4 1966171168
        %v2367 = vunpack.c.0.s8 %v2366
        %v2368 = vlaneseq
        %v2369 = vshrl.u32 %v2368, 7
        %v2370 = vsub.s32 %v2367, %v2369
        %v2371 = vrot.slane %v2357, %v2370
        %v2372 = vcombine.low %v2364, %v2371
        %v2373 = vcombine.low %v1267, %v1271
        %v2374 = vcombine.low %v1275, %v1279
        %v2375 = vcombine.low %v1283, %v1287
        %v2376 = vcombine.low %v1291, %v1295
        %v2378 = vunpack.c.l.s4 1966171168
        %v2379 = vunpack.c.0.s8 %v2378
        %v2380 = vlaneseq
        %v2381 = vshrl.u32 %v2380, 7
        %v2382 = vsub.s32 %v2379, %v2381
        %v2383 = vrot.slane %v2373, %v2382
        %v2385 = vunpack.c.l.s4 1966171168
        %v2386 = vunpack.c.0.s8 %v2385
        %v2387 = vlaneseq
        %v2388 = vshrl.u32 %v2387, 7
        %v2389 = vsub.s32 %v2386, %v2388
        %v2390 = vrot.slane %v2374, %v2389
        %v2392 = vunpack.c.l.s4 1966171168
        %v2393 = vunpack.c.0.s8 %v2392
        %v2394 = vlaneseq
        %v2395 = vshrl.u32 %v2394, 7
        %v2396 = vsub.s32 %v2393, %v2395
        %v2397 = vrot.slane %v2375, %v2396
        %v2399 = vunpack.c.l.s4 1966171168
        %v2400 = vunpack.c.0.s8 %v2399
        %v2401 = vlaneseq
        %v2402 = vshrl.u32 %v2401, 7
        %v2403 = vsub.s32 %v2400, %v2402
        %v2404 = vrot.slane %v2376, %v2403
        %v2405 = vcombine.low %v2383, %v2390
        %v2406 = vcombine.low %v2397, %v2404
        %v2408 = vunpack.c.l.s4 1966171168
        %v2409 = vunpack.c.0.s8 %v2408
        %v2410 = vlaneseq
        %v2411 = vshrl.u32 %v2410, 7
        %v2412 = vsub.s32 %v2409, %v2411
        %v2413 = vrot.slane %v2405, %v2412
        %v2415 = vunpack.c.l.s4 1966171168
        %v2416 = vunpack.c.0.s8 %v2415
        %v2417 = vlaneseq
        %v2418 = vshrl.u32 %v2417, 7
        %v2419 = vsub.s32 %v2416, %v2418
        %v2420 = vrot.slane %v2406, %v2419
        %v2421 = vcombine.low %v2413, %v2420
        %v2422 = vcombine.low %v1299, %v1303
        %v2423 = vcombine.low %v1307, %v1311
        %v2424 = vcombine.low %v1315, %v1319
        %v2425 = vcombine.low %v1323, %v1327
        %v2427 = vunpack.c.l.s4 1966171168
        %v2428 = vunpack.c.0.s8 %v2427
        %v2429 = vlaneseq
        %v2430 = vshrl.u32 %v2429, 7
        %v2431 = vsub.s32 %v2428, %v2430
        %v2432 = vrot.slane %v2422, %v2431
        %v2434 = vunpack.c.l.s4 1966171168
        %v2435 = vunpack.c.0.s8 %v2434
        %v2436 = vlaneseq
        %v2437 = vshrl.u32 %v2436, 7
        %v2438 = vsub.s32 %v2435, %v2437
        %v2439 = vrot.slane %v2423, %v2438
        %v2441 = vunpack.c.l.s4 1966171168
        %v2442 = vunpack.c.0.s8 %v2441
        %v2443 = vlaneseq
        %v2444 = vshrl.u32 %v2443, 7
        %v2445 = vsub.s32 %v2442, %v2444
        %v2446 = vrot.slane %v2424, %v2445
        %v2448 = vunpack.c.l.s4 1966171168
        %v2449 = vunpack.c.0.s8 %v2448
        %v2450 = vlaneseq
        %v2451 = vshrl.u32 %v2450, 7
        %v2452 = vsub.s32 %v2449, %v2451
        %v2453 = vrot.slane %v2425, %v2452
        %v2454 = vcombine.low %v2432, %v2439
        %v2455 = vcombine.low %v2446, %v2453
        %v2457 = vunpack.c.l.s4 1966171168
        %v2458 = vunpack.c.0.s8 %v2457
        %v2459 = vlaneseq
        %v2460 = vshrl.u32 %v2459, 7
        %v2461 = vsub.s32 %v2458, %v2460
        %v2462 = vrot.slane %v2454, %v2461
        %v2464 = vunpack.c.l.s4 1966171168
        %v2465 = vunpack.c.0.s8 %v2464
        %v2466 = vlaneseq
        %v2467 = vshrl.u32 %v2466, 7
        %v2468 = vsub.s32 %v2465, %v2467
        %v2469 = vrot.slane %v2455, %v2468
        %v2470 = vcombine.low %v2462, %v2469
        %v2471 = vcombine.low %v1331, %v1335
        %v2472 = vcombine.low %v1339, %v1343
        %v2473 = vcombine.low %v1347, %v1351
        %v2474 = vcombine.low %v1355, %v1359
        %v2476 = vunpack.c.l.s4 1966171168
        %v2477 = vunpack.c.0.s8 %v2476
        %v2478 = vlaneseq
        %v2479 = vshrl.u32 %v2478, 7
        %v2480 = vsub.s32 %v2477, %v2479
        %v2481 = vrot.slane %v2471, %v2480
        %v2483 = vunpack.c.l.s4 1966171168
        %v2484 = vunpack.c.0.s8 %v2483
        %v2485 = vlaneseq
        %v2486 = vshrl.u32 %v2485, 7
        %v2487 = vsub.s32 %v2484, %v2486
        %v2488 = vrot.slane %v2472, %v2487
        %v2490 = vunpack.c.l.s4 1966171168
        %v2491 = vunpack.c.0.s8 %v2490
        %v2492 = vlaneseq
        %v2493 = vshrl.u32 %v2492, 7
        %v2494 = vsub.s32 %v2491, %v2493
        %v2495 = vrot.slane %v2473, %v2494
        %v2497 = vunpack.c.l.s4 1966171168
        %v2498 = vunpack.c.0.s8 %v2497
        %v2499 = vlaneseq
        %v2500 = vshrl.u32 %v2499, 7
        %v2501 = vsub.s32 %v2498, %v2500
        %v2502 = vrot.slane %v2474, %v2501
        %v2503 = vcombine.low %v2481, %v2488
        %v2504 = vcombine.low %v2495, %v2502
        %v2506 = vunpack.c.l.s4 1966171168
        %v2507 = vunpack.c.0.s8 %v2506
        %v2508 = vlaneseq
        %v2509 = vshrl.u32 %v2508, 7
        %v2510 = vsub.s32 %v2507, %v2509
        %v2511 = vrot.slane %v2503, %v2510
        %v2513 = vunpack.c.l.s4 1966171168
        %v2514 = vunpack.c.0.s8 %v2513
        %v2515 = vlaneseq
        %v2516 = vshrl.u32 %v2515, 7
        %v2517 = vsub.s32 %v2514, %v2516
        %v2518 = vrot.slane %v2504, %v2517
        %v2519 = vcombine.low %v2511, %v2518
        %v2520 = vcombine.low %v1363, %v1367
        %v2521 = vcombine.low %v1371, %v1375
        %v2522 = vcombine.low %v1379, %v1383
        %v2523 = vcombine.low %v1387, %v1391
        %v2525 = vunpack.c.l.s4 1966171168
        %v2526 = vunpack.c.0.s8 %v2525
        %v2527 = vlaneseq
        %v2528 = vshrl.u32 %v2527, 7
        %v2529 = vsub.s32 %v2526, %v2528
        %v2530 = vrot.slane %v2520, %v2529
        %v2532 = vunpack.c.l.s4 1966171168
        %v2533 = vunpack.c.0.s8 %v2532
        %v2534 = vlaneseq
        %v2535 = vshrl.u32 %v2534, 7
        %v2536 = vsub.s32 %v2533, %v2535
        %v2537 = vrot.slane %v2521, %v2536
        %v2539 = vunpack.c.l.s4 1966171168
        %v2540 = vunpack.c.0.s8 %v2539
        %v2541 = vlaneseq
        %v2542 = vshrl.u32 %v2541, 7
        %v2543 = vsub.s32 %v2540, %v2542
        %v2544 = vrot.slane %v2522, %v2543
        %v2546 = vunpack.c.l.s4 1966171168
        %v2547 = vunpack.c.0.s8 %v2546
        %v2548 = vlaneseq
        %v2549 = vshrl.u32 %v2548, 7
        %v2550 = vsub.s32 %v2547, %v2549
        %v2551 = vrot.slane %v2523, %v2550
        %v2552 = vcombine.low %v2530, %v2537
        %v2553 = vcombine.low %v2544, %v2551
        %v2555 = vunpack.c.l.s4 1966171168
        %v2556 = vunpack.c.0.s8 %v2555
        %v2557 = vlaneseq
        %v2558 = vshrl.u32 %v2557, 7
        %v2559 = vsub.s32 %v2556, %v2558
        %v2560 = vrot.slane %v2552, %v2559
        %v2562 = vunpack.c.l.s4 1966171168
        %v2563 = vunpack.c.0.s8 %v2562
        %v2564 = vlaneseq
        %v2565 = vshrl.u32 %v2564, 7
        %v2566 = vsub.s32 %v2563, %v2565
        %v2567 = vrot.slane %v2553, %v2566
        %v2568 = vcombine.low %v2560, %v2567
        %v2569 = vcombine.low %v1395, %v1399
        %v2570 = vcombine.low %v1403, %v1407
        %v2571 = vcombine.low %v1411, %v1415
        %v2572 = vcombine.low %v1419, %v1423
        %v2574 = vunpack.c.l.s4 1966171168
        %v2575 = vunpack.c.0.s8 %v2574
        %v2576 = vlaneseq
        %v2577 = vshrl.u32 %v2576, 7
        %v2578 = vsub.s32 %v2575, %v2577
        %v2579 = vrot.slane %v2569, %v2578
        %v2581 = vunpack.c.l.s4 1966171168
        %v2582 = vunpack.c.0.s8 %v2581
        %v2583 = vlaneseq
        %v2584 = vshrl.u32 %v2583, 7
        %v2585 = vsub.s32 %v2582, %v2584
        %v2586 = vrot.slane %v2570, %v2585
        %v2588 = vunpack.c.l.s4 1966171168
        %v2589 = vunpack.c.0.s8 %v2588
        %v2590 = vlaneseq
        %v2591 = vshrl.u32 %v2590, 7
        %v2592 = vsub.s32 %v2589, %v2591
        %v2593 = vrot.slane %v2571, %v2592
        %v2595 = vunpack.c.l.s4 1966171168
        %v2596 = vunpack.c.0.s8 %v2595
        %v2597 = vlaneseq
        %v2598 = vshrl.u32 %v2597, 7
        %v2599 = vsub.s32 %v2596, %v2598
        %v2600 = vrot.slane %v2572, %v2599
        %v2601 = vcombine.low %v2579, %v2586
        %v2602 = vcombine.low %v2593, %v2600
        %v2604 = vunpack.c.l.s4 1966171168
        %v2605 = vunpack.c.0.s8 %v2604
        %v2606 = vlaneseq
        %v2607 = vshrl.u32 %v2606, 7
        %v2608 = vsub.s32 %v2605, %v2607
        %v2609 = vrot.slane %v2601, %v2608
        %v2611 = vunpack.c.l.s4 1966171168
        %v2612 = vunpack.c.0.s8 %v2611
        %v2613 = vlaneseq
        %v2614 = vshrl.u32 %v2613, 7
        %v2615 = vsub.s32 %v2612, %v2614
        %v2616 = vrot.slane %v2602, %v2615
        %v2617 = vcombine.low %v2609, %v2616
        %v2618 = vcombine.low %v1427, %v1431
        %v2619 = vcombine.low %v1435, %v1439
        %v2620 = vcombine.low %v1443, %v1447
        %v2621 = vcombine.low %v1451, %v1455
        %v2623 = vunpack.c.l.s4 1966171168
        %v2624 = vunpack.c.0.s8 %v2623
        %v2625 = vlaneseq
        %v2626 = vshrl.u32 %v2625, 7
        %v2627 = vsub.s32 %v2624, %v2626
        %v2628 = vrot.slane %v2618, %v2627
        %v2630 = vunpack.c.l.s4 1966171168
        %v2631 = vunpack.c.0.s8 %v2630
        %v2632 = vlaneseq
        %v2633 = vshrl.u32 %v2632, 7
        %v2634 = vsub.s32 %v2631, %v2633
        %v2635 = vrot.slane %v2619, %v2634
        %v2637 = vunpack.c.l.s4 1966171168
        %v2638 = vunpack.c.0.s8 %v2637
        %v2639 = vlaneseq
        %v2640 = vshrl.u32 %v2639, 7
        %v2641 = vsub.s32 %v2638, %v2640
        %v2642 = vrot.slane %v2620, %v2641
        %v2644 = vunpack.c.l.s4 1966171168
        %v2645 = vunpack.c.0.s8 %v2644
        %v2646 = vlaneseq
        %v2647 = vshrl.u32 %v2646, 7
        %v2648 = vsub.s32 %v2645, %v2647
        %v2649 = vrot.slane %v2621, %v2648
        %v2650 = vcombine.low %v2628, %v2635
        %v2651 = vcombine.low %v2642, %v2649
        %v2653 = vunpack.c.l.s4 1966171168
        %v2654 = vunpack.c.0.s8 %v2653
        %v2655 = vlaneseq
        %v2656 = vshrl.u32 %v2655, 7
        %v2657 = vsub.s32 %v2654, %v2656
        %v2658 = vrot.slane %v2650, %v2657
        %v2660 = vunpack.c.l.s4 1966171168
        %v2661 = vunpack.c.0.s8 %v2660
        %v2662 = vlaneseq
        %v2663 = vshrl.u32 %v2662, 7
        %v2664 = vsub.s32 %v2661, %v2663
        %v2665 = vrot.slane %v2651, %v2664
        %v2666 = vcombine.low %v2658, %v2665
        %v2667 = vcombine.low %v1459, %v1463
        %v2668 = vcombine.low %v1467, %v1471
        %v2669 = vcombine.low %v1475, %v1479
        %v2670 = vcombine.low %v1483, %v1487
        %v2672 = vunpack.c.l.s4 1966171168
        %v2673 = vunpack.c.0.s8 %v2672
        %v2674 = vlaneseq
        %v2675 = vshrl.u32 %v2674, 7
        %v2676 = vsub.s32 %v2673, %v2675
        %v2677 = vrot.slane %v2667, %v2676
        %v2679 = vunpack.c.l.s4 1966171168
        %v2680 = vunpack.c.0.s8 %v2679
        %v2681 = vlaneseq
        %v2682 = vshrl.u32 %v2681, 7
        %v2683 = vsub.s32 %v2680, %v2682
        %v2684 = vrot.slane %v2668, %v2683
        %v2686 = vunpack.c.l.s4 1966171168
        %v2687 = vunpack.c.0.s8 %v2686
        %v2688 = vlaneseq
        %v2689 = vshrl.u32 %v2688, 7
        %v2690 = vsub.s32 %v2687, %v2689
        %v2691 = vrot.slane %v2669, %v2690
        %v2693 = vunpack.c.l.s4 1966171168
        %v2694 = vunpack.c.0.s8 %v2693
        %v2695 = vlaneseq
        %v2696 = vshrl.u32 %v2695, 7
        %v2697 = vsub.s32 %v2694, %v2696
        %v2698 = vrot.slane %v2670, %v2697
        %v2699 = vcombine.low %v2677, %v2684
        %v2700 = vcombine.low %v2691, %v2698
        %v2702 = vunpack.c.l.s4 1966171168
        %v2703 = vunpack.c.0.s8 %v2702
        %v2704 = vlaneseq
        %v2705 = vshrl.u32 %v2704, 7
        %v2706 = vsub.s32 %v2703, %v2705
        %v2707 = vrot.slane %v2699, %v2706
        %v2709 = vunpack.c.l.s4 1966171168
        %v2710 = vunpack.c.0.s8 %v2709
        %v2711 = vlaneseq
        %v2712 = vshrl.u32 %v2711, 7
        %v2713 = vsub.s32 %v2710, %v2712
        %v2714 = vrot.slane %v2700, %v2713
        %v2715 = vcombine.low %v2707, %v2714
        %v2716 = vcombine.low %v1491, %v1495
        %v2717 = vcombine.low %v1499, %v1503
        %v2718 = vcombine.low %v1507, %v1511
        %v2719 = vcombine.low %v1515, %v1519
        %v2721 = vunpack.c.l.s4 1966171168
        %v2722 = vunpack.c.0.s8 %v2721
        %v2723 = vlaneseq
        %v2724 = vshrl.u32 %v2723, 7
        %v2725 = vsub.s32 %v2722, %v2724
        %v2726 = vrot.slane %v2716, %v2725
        %v2728 = vunpack.c.l.s4 1966171168
        %v2729 = vunpack.c.0.s8 %v2728
        %v2730 = vlaneseq
        %v2731 = vshrl.u32 %v2730, 7
        %v2732 = vsub.s32 %v2729, %v2731
        %v2733 = vrot.slane %v2717, %v2732
        %v2735 = vunpack.c.l.s4 1966171168
        %v2736 = vunpack.c.0.s8 %v2735
        %v2737 = vlaneseq
        %v2738 = vshrl.u32 %v2737, 7
        %v2739 = vsub.s32 %v2736, %v2738
        %v2740 = vrot.slane %v2718, %v2739
        %v2742 = vunpack.c.l.s4 1966171168
        %v2743 = vunpack.c.0.s8 %v2742
        %v2744 = vlaneseq
        %v2745 = vshrl.u32 %v2744, 7
        %v2746 = vsub.s32 %v2743, %v2745
        %v2747 = vrot.slane %v2719, %v2746
        %v2748 = vcombine.low %v2726, %v2733
        %v2749 = vcombine.low %v2740, %v2747
        %v2751 = vunpack.c.l.s4 1966171168
        %v2752 = vunpack.c.0.s8 %v2751
        %v2753 = vlaneseq
        %v2754 = vshrl.u32 %v2753, 7
        %v2755 = vsub.s32 %v2752, %v2754
        %v2756 = vrot.slane %v2748, %v2755
        %v2758 = vunpack.c.l.s4 1966171168
        %v2759 = vunpack.c.0.s8 %v2758
        %v2760 = vlaneseq
        %v2761 = vshrl.u32 %v2760, 7
        %v2762 = vsub.s32 %v2759, %v2761
        %v2763 = vrot.slane %v2749, %v2762
        %v2764 = vcombine.low %v2756, %v2763
        %v2765 = vcombine.low %v1523, %v1527
        %v2766 = vcombine.low %v1531, %v1535
        %v2767 = vcombine.low %v1539, %v1543
        %v2768 = vcombine.low %v1547, %v1551
        %v2770 = vunpack.c.l.s4 1966171168
        %v2771 = vunpack.c.0.s8 %v2770
        %v2772 = vlaneseq
        %v2773 = vshrl.u32 %v2772, 7
        %v2774 = vsub.s32 %v2771, %v2773
        %v2775 = vrot.slane %v2765, %v2774
        %v2777 = vunpack.c.l.s4 1966171168
        %v2778 = vunpack.c.0.s8 %v2777
        %v2779 = vlaneseq
        %v2780 = vshrl.u32 %v2779, 7
        %v2781 = vsub.s32 %v2778, %v2780
        %v2782 = vrot.slane %v2766, %v2781
        %v2784 = vunpack.c.l.s4 1966171168
        %v2785 = vunpack.c.0.s8 %v2784
        %v2786 = vlaneseq
        %v2787 = vshrl.u32 %v2786, 7
        %v2788 = vsub.s32 %v2785, %v2787
        %v2789 = vrot.slane %v2767, %v2788
        %v2791 = vunpack.c.l.s4 1966171168
        %v2792 = vunpack.c.0.s8 %v2791
        %v2793 = vlaneseq
        %v2794 = vshrl.u32 %v2793, 7
        %v2795 = vsub.s32 %v2792, %v2794
        %v2796 = vrot.slane %v2768, %v2795
        %v2797 = vcombine.low %v2775, %v2782
        %v2798 = vcombine.low %v2789, %v2796
        %v2800 = vunpack.c.l.s4 1966171168
        %v2801 = vunpack.c.0.s8 %v2800
        %v2802 = vlaneseq
        %v2803 = vshrl.u32 %v2802, 7
        %v2804 = vsub.s32 %v2801, %v2803
        %v2805 = vrot.slane %v2797, %v2804
        %v2807 = vunpack.c.l.s4 1966171168
        %v2808 = vunpack.c.0.s8 %v2807
        %v2809 = vlaneseq
        %v2810 = vshrl.u32 %v2809, 7
        %v2811 = vsub.s32 %v2808, %v2810
        %v2812 = vrot.slane %v2798, %v2811
        %v2813 = vcombine.low %v2805, %v2812
        %v2814 = vcombine.low %v1555, %v1559
        %v2815 = vcombine.low %v1563, %v1567
        %v2816 = vcombine.low %v1571, %v1575
        %v2817 = vcombine.low %v1579, %v1583
        %v2819 = vunpack.c.l.s4 1966171168
        %v2820 = vunpack.c.0.s8 %v2819
        %v2821 = vlaneseq
        %v2822 = vshrl.u32 %v2821, 7
        %v2823 = vsub.s32 %v2820, %v2822
        %v2824 = vrot.slane %v2814, %v2823
        %v2826 = vunpack.c.l.s4 1966171168
        %v2827 = vunpack.c.0.s8 %v2826
        %v2828 = vlaneseq
        %v2829 = vshrl.u32 %v2828, 7
        %v2830 = vsub.s32 %v2827, %v2829
        %v2831 = vrot.slane %v2815, %v2830
        %v2833 = vunpack.c.l.s4 1966171168
        %v2834 = vunpack.c.0.s8 %v2833
        %v2835 = vlaneseq
        %v2836 = vshrl.u32 %v2835, 7
        %v2837 = vsub.s32 %v2834, %v2836
        %v2838 = vrot.slane %v2816, %v2837
        %v2840 = vunpack.c.l.s4 1966171168
        %v2841 = vunpack.c.0.s8 %v2840
        %v2842 = vlaneseq
        %v2843 = vshrl.u32 %v2842, 7
        %v2844 = vsub.s32 %v2841, %v2843
        %v2845 = vrot.slane %v2817, %v2844
        %v2846 = vcombine.low %v2824, %v2831
        %v2847 = vcombine.low %v2838, %v2845
        %v2849 = vunpack.c.l.s4 1966171168
        %v2850 = vunpack.c.0.s8 %v2849
        %v2851 = vlaneseq
        %v2852 = vshrl.u32 %v2851, 7
        %v2853 = vsub.s32 %v2850, %v2852
        %v2854 = vrot.slane %v2846, %v2853
        %v2856 = vunpack.c.l.s4 1966171168
        %v2857 = vunpack.c.0.s8 %v2856
        %v2858 = vlaneseq
        %v2859 = vshrl.u32 %v2858, 7
        %v2860 = vsub.s32 %v2857, %v2859
        %v2861 = vrot.slane %v2847, %v2860
        %v2862 = vcombine.low %v2854, %v2861
        %v2863 = vcombine.low %v1587, %v1591
        %v2864 = vcombine.low %v1595, %v1599
        %v2865 = vcombine.low %v1603, %v1607
        %v2866 = vcombine.low %v1611, %v1615
        %v2868 = vunpack.c.l.s4 1966171168
        %v2869 = vunpack.c.0.s8 %v2868
        %v2870 = vlaneseq
        %v2871 = vshrl.u32 %v2870, 7
        %v2872 = vsub.s32 %v2869, %v2871
        %v2873 = vrot.slane %v2863, %v2872
        %v2875 = vunpack.c.l.s4 1966171168
        %v2876 = vunpack.c.0.s8 %v2875
        %v2877 = vlaneseq
        %v2878 = vshrl.u32 %v2877, 7
        %v2879 = vsub.s32 %v2876, %v2878
        %v2880 = vrot.slane %v2864, %v2879
        %v2882 = vunpack.c.l.s4 1966171168
        %v2883 = vunpack.c.0.s8 %v2882
        %v2884 = vlaneseq
        %v2885 = vshrl.u32 %v2884, 7
        %v2886 = vsub.s32 %v2883, %v2885
        %v2887 = vrot.slane %v2865, %v2886
        %v2889 = vunpack.c.l.s4 1966171168
        %v2890 = vunpack.c.0.s8 %v2889
        %v2891 = vlaneseq
        %v2892 = vshrl.u32 %v2891, 7
        %v2893 = vsub.s32 %v2890, %v2892
        %v2894 = vrot.slane %v2866, %v2893
        %v2895 = vcombine.low %v2873, %v2880
        %v2896 = vcombine.low %v2887, %v2894
        %v2898 = vunpack.c.l.s4 1966171168
        %v2899 = vunpack.c.0.s8 %v2898
        %v2900 = vlaneseq
        %v2901 = vshrl.u32 %v2900, 7
        %v2902 = vsub.s32 %v2899, %v2901
        %v2903 = vrot.slane %v2895, %v2902
        %v2905 = vunpack.c.l.s4 1966171168
        %v2906 = vunpack.c.0.s8 %v2905
        %v2907 = vlaneseq
        %v2908 = vshrl.u32 %v2907, 7
        %v2909 = vsub.s32 %v2906, %v2908
        %v2910 = vrot.slane %v2896, %v2909
        %v2911 = vcombine.low %v2903, %v2910
        %v2912 = vcombine.low %v1619, %v1623
        %v2913 = vcombine.low %v1627, %v1631
        %v2914 = vcombine.low %v1635, %v1639
        %v2915 = vcombine.low %v1643, %v1647
        %v2917 = vunpack.c.l.s4 1966171168
        %v2918 = vunpack.c.0.s8 %v2917
        %v2919 = vlaneseq
        %v2920 = vshrl.u32 %v2919, 7
        %v2921 = vsub.s32 %v2918, %v2920
        %v2922 = vrot.slane %v2912, %v2921
        %v2924 = vunpack.c.l.s4 1966171168
        %v2925 = vunpack.c.0.s8 %v2924
        %v2926 = vlaneseq
        %v2927 = vshrl.u32 %v2926, 7
        %v2928 = vsub.s32 %v2925, %v2927
        %v2929 = vrot.slane %v2913, %v2928
        %v2931 = vunpack.c.l.s4 1966171168
        %v2932 = vunpack.c.0.s8 %v2931
        %v2933 = vlaneseq
        %v2934 = vshrl.u32 %v2933, 7
        %v2935 = vsub.s32 %v2932, %v2934
        %v2936 = vrot.slane %v2914, %v2935
        %v2938 = vunpack.c.l.s4 1966171168
        %v2939 = vunpack.c.0.s8 %v2938
        %v2940 = vlaneseq
        %v2941 = vshrl.u32 %v2940, 7
        %v2942 = vsub.s32 %v2939, %v2941
        %v2943 = vrot.slane %v2915, %v2942
        %v2944 = vcombine.low %v2922, %v2929
        %v2945 = vcombine.low %v2936, %v2943
        %v2947 = vunpack.c.l.s4 1966171168
        %v2948 = vunpack.c.0.s8 %v2947
        %v2949 = vlaneseq
        %v2950 = vshrl.u32 %v2949, 7
        %v2951 = vsub.s32 %v2948, %v2950
        %v2952 = vrot.slane %v2944, %v2951
        %v2954 = vunpack.c.l.s4 1966171168
        %v2955 = vunpack.c.0.s8 %v2954
        %v2956 = vlaneseq
        %v2957 = vshrl.u32 %v2956, 7
        %v2958 = vsub.s32 %v2955, %v2957
        %v2959 = vrot.slane %v2945, %v2958
        %v2960 = vcombine.low %v2952, %v2959
        %v2961 = vcombine.low %v1651, %v1655
        %v2962 = vcombine.low %v1659, %v1663
        %v2963 = vcombine.low %v1667, %v1671
        %v2964 = vcombine.low %v1675, %v1679
        %v2966 = vunpack.c.l.s4 1966171168
        %v2967 = vunpack.c.0.s8 %v2966
        %v2968 = vlaneseq
        %v2969 = vshrl.u32 %v2968, 7
        %v2970 = vsub.s32 %v2967, %v2969
        %v2971 = vrot.slane %v2961, %v2970
        %v2973 = vunpack.c.l.s4 1966171168
        %v2974 = vunpack.c.0.s8 %v2973
        %v2975 = vlaneseq
        %v2976 = vshrl.u32 %v2975, 7
        %v2977 = vsub.s32 %v2974, %v2976
        %v2978 = vrot.slane %v2962, %v2977
        %v2980 = vunpack.c.l.s4 1966171168
        %v2981 = vunpack.c.0.s8 %v2980
        %v2982 = vlaneseq
        %v2983 = vshrl.u32 %v2982, 7
        %v2984 = vsub.s32 %v2981, %v2983
        %v2985 = vrot.slane %v2963, %v2984
        %v2987 = vunpack.c.l.s4 1966171168
        %v2988 = vunpack.c.0.s8 %v2987
        %v2989 = vlaneseq
        %v2990 = vshrl.u32 %v2989, 7
        %v2991 = vsub.s32 %v2988, %v2990
        %v2992 = vrot.slane %v2964, %v2991
        %v2993 = vcombine.low %v2971, %v2978
        %v2994 = vcombine.low %v2985, %v2992
        %v2996 = vunpack.c.l.s4 1966171168
        %v2997 = vunpack.c.0.s8 %v2996
        %v2998 = vlaneseq
        %v2999 = vshrl.u32 %v2998, 7
        %v3000 = vsub.s32 %v2997, %v2999
        %v3001 = vrot.slane %v2993, %v3000
        %v3003 = vunpack.c.l.s4 1966171168
        %v3004 = vunpack.c.0.s8 %v3003
        %v3005 = vlaneseq
        %v3006 = vshrl.u32 %v3005, 7
        %v3007 = vsub.s32 %v3004, %v3006
        %v3008 = vrot.slane %v2994, %v3007
        %v3009 = vcombine.low %v3001, %v3008
        %v3010 = vcombine.low %v1683, %v1687
        %v3011 = vcombine.low %v1691, %v1695
        %v3012 = vcombine.low %v1699, %v1703
        %v3013 = vcombine.low %v1707, %v1711
        %v3015 = vunpack.c.l.s4 1966171168
        %v3016 = vunpack.c.0.s8 %v3015
        %v3017 = vlaneseq
        %v3018 = vshrl.u32 %v3017, 7
        %v3019 = vsub.s32 %v3016, %v3018
        %v3020 = vrot.slane %v3010, %v3019
        %v3022 = vunpack.c.l.s4 1966171168
        %v3023 = vunpack.c.0.s8 %v3022
        %v3024 = vlaneseq
        %v3025 = vshrl.u32 %v3024, 7
        %v3026 = vsub.s32 %v3023, %v3025
        %v3027 = vrot.slane %v3011, %v3026
        %v3029 = vunpack.c.l.s4 1966171168
        %v3030 = vunpack.c.0.s8 %v3029
        %v3031 = vlaneseq
        %v3032 = vshrl.u32 %v3031, 7
        %v3033 = vsub.s32 %v3030, %v3032
        %v3034 = vrot.slane %v3012, %v3033
        %v3036 = vunpack.c.l.s4 1966171168
        %v3037 = vunpack.c.0.s8 %v3036
        %v3038 = vlaneseq
        %v3039 = vshrl.u32 %v3038, 7
        %v3040 = vsub.s32 %v3037, %v3039
        %v3041 = vrot.slane %v3013, %v3040
        %v3042 = vcombine.low %v3020, %v3027
        %v3043 = vcombine.low %v3034, %v3041
        %v3045 = vunpack.c.l.s4 1966171168
        %v3046 = vunpack.c.0.s8 %v3045
        %v3047 = vlaneseq
        %v3048 = vshrl.u32 %v3047, 7
        %v3049 = vsub.s32 %v3046, %v3048
        %v3050 = vrot.slane %v3042, %v3049
        %v3052 = vunpack.c.l.s4 1966171168
        %v3053 = vunpack.c.0.s8 %v3052
        %v3054 = vlaneseq
        %v3055 = vshrl.u32 %v3054, 7
        %v3056 = vsub.s32 %v3053, %v3055
        %v3057 = vrot.slane %v3043, %v3056
        %v3058 = vcombine.low %v3050, %v3057
        %v3059 = vcombine.low %v1715, %v1719
        %v3060 = vcombine.low %v1723, %v1727
        %v3061 = vcombine.low %v1731, %v1735
        %v3062 = vcombine.low %v1739, %v1743
        %v3064 = vunpack.c.l.s4 1966171168
        %v3065 = vunpack.c.0.s8 %v3064
        %v3066 = vlaneseq
        %v3067 = vshrl.u32 %v3066, 7
        %v3068 = vsub.s32 %v3065, %v3067
        %v3069 = vrot.slane %v3059, %v3068
        %v3071 = vunpack.c.l.s4 1966171168
        %v3072 = vunpack.c.0.s8 %v3071
        %v3073 = vlaneseq
        %v3074 = vshrl.u32 %v3073, 7
        %v3075 = vsub.s32 %v3072, %v3074
        %v3076 = vrot.slane %v3060, %v3075
        %v3078 = vunpack.c.l.s4 1966171168
        %v3079 = vunpack.c.0.s8 %v3078
        %v3080 = vlaneseq
        %v3081 = vshrl.u32 %v3080, 7
        %v3082 = vsub.s32 %v3079, %v3081
        %v3083 = vrot.slane %v3061, %v3082
        %v3085 = vunpack.c.l.s4 1966171168
        %v3086 = vunpack.c.0.s8 %v3085
        %v3087 = vlaneseq
        %v3088 = vshrl.u32 %v3087, 7
        %v3089 = vsub.s32 %v3086, %v3088
        %v3090 = vrot.slane %v3062, %v3089
        %v3091 = vcombine.low %v3069, %v3076
        %v3092 = vcombine.low %v3083, %v3090
        %v3094 = vunpack.c.l.s4 1966171168
        %v3095 = vunpack.c.0.s8 %v3094
        %v3096 = vlaneseq
        %v3097 = vshrl.u32 %v3096, 7
        %v3098 = vsub.s32 %v3095, %v3097
        %v3099 = vrot.slane %v3091, %v3098
        %v3101 = vunpack.c.l.s4 1966171168
        %v3102 = vunpack.c.0.s8 %v3101
        %v3103 = vlaneseq
        %v3104 = vshrl.u32 %v3103, 7
        %v3105 = vsub.s32 %v3102, %v3104
        %v3106 = vrot.slane %v3092, %v3105
        %v3107 = vcombine.low %v3099, %v3106
        %v3108 = vcombine.low %v1747, %v1751
        %v3109 = vcombine.low %v1755, %v1759
        %v3110 = vcombine.low %v1763, %v1767
        %v3111 = vcombine.low %v1771, %v1775
        %v3113 = vunpack.c.l.s4 1966171168
        %v3114 = vunpack.c.0.s8 %v3113
        %v3115 = vlaneseq
        %v3116 = vshrl.u32 %v3115, 7
        %v3117 = vsub.s32 %v3114, %v3116
        %v3118 = vrot.slane %v3108, %v3117
        %v3120 = vunpack.c.l.s4 1966171168
        %v3121 = vunpack.c.0.s8 %v3120
        %v3122 = vlaneseq
        %v3123 = vshrl.u32 %v3122, 7
        %v3124 = vsub.s32 %v3121, %v3123
        %v3125 = vrot.slane %v3109, %v3124
        %v3127 = vunpack.c.l.s4 1966171168
        %v3128 = vunpack.c.0.s8 %v3127
        %v3129 = vlaneseq
        %v3130 = vshrl.u32 %v3129, 7
        %v3131 = vsub.s32 %v3128, %v3130
        %v3132 = vrot.slane %v3110, %v3131
        %v3134 = vunpack.c.l.s4 1966171168
        %v3135 = vunpack.c.0.s8 %v3134
        %v3136 = vlaneseq
        %v3137 = vshrl.u32 %v3136, 7
        %v3138 = vsub.s32 %v3135, %v3137
        %v3139 = vrot.slane %v3111, %v3138
        %v3140 = vcombine.low %v3118, %v3125
        %v3141 = vcombine.low %v3132, %v3139
        %v3143 = vunpack.c.l.s4 1966171168
        %v3144 = vunpack.c.0.s8 %v3143
        %v3145 = vlaneseq
        %v3146 = vshrl.u32 %v3145, 7
        %v3147 = vsub.s32 %v3144, %v3146
        %v3148 = vrot.slane %v3140, %v3147
        %v3150 = vunpack.c.l.s4 1966171168
        %v3151 = vunpack.c.0.s8 %v3150
        %v3152 = vlaneseq
        %v3153 = vshrl.u32 %v3152, 7
        %v3154 = vsub.s32 %v3151, %v3153
        %v3155 = vrot.slane %v3141, %v3154
        %v3156 = vcombine.low %v3148, %v3155
        %v3157 = vcombine.low %v1779, %v1783
        %v3158 = vcombine.low %v1787, %v1791
        %v3159 = vcombine.low %v1795, %v1799
        %v3160 = vcombine.low %v1803, %v1807
        %v3162 = vunpack.c.l.s4 1966171168
        %v3163 = vunpack.c.0.s8 %v3162
        %v3164 = vlaneseq
        %v3165 = vshrl.u32 %v3164, 7
        %v3166 = vsub.s32 %v3163, %v3165
        %v3167 = vrot.slane %v3157, %v3166
        %v3169 = vunpack.c.l.s4 1966171168
        %v3170 = vunpack.c.0.s8 %v3169
        %v3171 = vlaneseq
        %v3172 = vshrl.u32 %v3171, 7
        %v3173 = vsub.s32 %v3170, %v3172
        %v3174 = vrot.slane %v3158, %v3173
        %v3176 = vunpack.c.l.s4 1966171168
        %v3177 = vunpack.c.0.s8 %v3176
        %v3178 = vlaneseq
        %v3179 = vshrl.u32 %v3178, 7
        %v3180 = vsub.s32 %v3177, %v3179
        %v3181 = vrot.slane %v3159, %v3180
        %v3183 = vunpack.c.l.s4 1966171168
        %v3184 = vunpack.c.0.s8 %v3183
        %v3185 = vlaneseq
        %v3186 = vshrl.u32 %v3185, 7
        %v3187 = vsub.s32 %v3184, %v3186
        %v3188 = vrot.slane %v3160, %v3187
        %v3189 = vcombine.low %v3167, %v3174
        %v3190 = vcombine.low %v3181, %v3188
        %v3192 = vunpack.c.l.s4 1966171168
        %v3193 = vunpack.c.0.s8 %v3192
        %v3194 = vlaneseq
        %v3195 = vshrl.u32 %v3194, 7
        %v3196 = vsub.s32 %v3193, %v3195
        %v3197 = vrot.slane %v3189, %v3196
        %v3199 = vunpack.c.l.s4 1966171168
        %v3200 = vunpack.c.0.s8 %v3199
        %v3201 = vlaneseq
        %v3202 = vshrl.u32 %v3201, 7
        %v3203 = vsub.s32 %v3200, %v3202
        %v3204 = vrot.slane %v3190, %v3203
        %v3205 = vcombine.low %v3197, %v3204
        %v3206 = vcombine.low %v1811, %v1815
        %v3207 = vcombine.low %v1819, %v1823
        %v3208 = vcombine.low %v1827, %v1831
        %v3209 = vcombine.low %v1835, %v1839
        %v3211 = vunpack.c.l.s4 1966171168
        %v3212 = vunpack.c.0.s8 %v3211
        %v3213 = vlaneseq
        %v3214 = vshrl.u32 %v3213, 7
        %v3215 = vsub.s32 %v3212, %v3214
        %v3216 = vrot.slane %v3206, %v3215
        %v3218 = vunpack.c.l.s4 1966171168
        %v3219 = vunpack.c.0.s8 %v3218
        %v3220 = vlaneseq
        %v3221 = vshrl.u32 %v3220, 7
        %v3222 = vsub.s32 %v3219, %v3221
        %v3223 = vrot.slane %v3207, %v3222
        %v3225 = vunpack.c.l.s4 1966171168
        %v3226 = vunpack.c.0.s8 %v3225
        %v3227 = vlaneseq
        %v3228 = vshrl.u32 %v3227, 7
        %v3229 = vsub.s32 %v3226, %v3228
        %v3230 = vrot.slane %v3208, %v3229
        %v3232 = vunpack.c.l.s4 1966171168
        %v3233 = vunpack.c.0.s8 %v3232
        %v3234 = vlaneseq
        %v3235 = vshrl.u32 %v3234, 7
        %v3236 = vsub.s32 %v3233, %v3235
        %v3237 = vrot.slane %v3209, %v3236
        %v3238 = vcombine.low %v3216, %v3223
        %v3239 = vcombine.low %v3230, %v3237
        %v3241 = vunpack.c.l.s4 1966171168
        %v3242 = vunpack.c.0.s8 %v3241
        %v3243 = vlaneseq
        %v3244 = vshrl.u32 %v3243, 7
        %v3245 = vsub.s32 %v3242, %v3244
        %v3246 = vrot.slane %v3238, %v3245
        %v3248 = vunpack.c.l.s4 1966171168
        %v3249 = vunpack.c.0.s8 %v3248
        %v3250 = vlaneseq
        %v3251 = vshrl.u32 %v3250, 7
        %v3252 = vsub.s32 %v3249, %v3251
        %v3253 = vrot.slane %v3239, %v3252
        %v3254 = vcombine.low %v3246, %v3253
        %v3255 = vcombine.low %v1843, %v1847
        %v3256 = vcombine.low %v1851, %v1855
        %v3257 = vcombine.low %v1859, %v1863
        %v3258 = vcombine.low %v1867, %v1871
        %v3260 = vunpack.c.l.s4 1966171168
        %v3261 = vunpack.c.0.s8 %v3260
        %v3262 = vlaneseq
        %v3263 = vshrl.u32 %v3262, 7
        %v3264 = vsub.s32 %v3261, %v3263
        %v3265 = vrot.slane %v3255, %v3264
        %v3267 = vunpack.c.l.s4 1966171168
        %v3268 = vunpack.c.0.s8 %v3267
        %v3269 = vlaneseq
        %v3270 = vshrl.u32 %v3269, 7
        %v3271 = vsub.s32 %v3268, %v3270
        %v3272 = vrot.slane %v3256, %v3271
        %v3274 = vunpack.c.l.s4 1966171168
        %v3275 = vunpack.c.0.s8 %v3274
        %v3276 = vlaneseq
        %v3277 = vshrl.u32 %v3276, 7
        %v3278 = vsub.s32 %v3275, %v3277
        %v3279 = vrot.slane %v3257, %v3278
        %v3281 = vunpack.c.l.s4 1966171168
        %v3282 = vunpack.c.0.s8 %v3281
        %v3283 = vlaneseq
        %v3284 = vshrl.u32 %v3283, 7
        %v3285 = vsub.s32 %v3282, %v3284
        %v3286 = vrot.slane %v3258, %v3285
        %v3287 = vcombine.low %v3265, %v3272
        %v3288 = vcombine.low %v3279, %v3286
        %v3290 = vunpack.c.l.s4 1966171168
        %v3291 = vunpack.c.0.s8 %v3290
        %v3292 = vlaneseq
        %v3293 = vshrl.u32 %v3292, 7
        %v3294 = vsub.s32 %v3291, %v3293
        %v3295 = vrot.slane %v3287, %v3294
        %v3297 = vunpack.c.l.s4 1966171168
        %v3298 = vunpack.c.0.s8 %v3297
        %v3299 = vlaneseq
        %v3300 = vshrl.u32 %v3299, 7
        %v3301 = vsub.s32 %v3298, %v3300
        %v3302 = vrot.slane %v3288, %v3301
        %v3303 = vcombine.low %v3295, %v3302
        %v3304 = vcombine.low %v1875, %v1879
        %v3305 = vcombine.low %v1883, %v1887
        %v3306 = vcombine.low %v1891, %v1895
        %v3307 = vcombine.low %v1899, %v1903
        %v3309 = vunpack.c.l.s4 1966171168
        %v3310 = vunpack.c.0.s8 %v3309
        %v3311 = vlaneseq
        %v3312 = vshrl.u32 %v3311, 7
        %v3313 = vsub.s32 %v3310, %v3312
        %v3314 = vrot.slane %v3304, %v3313
        %v3316 = vunpack.c.l.s4 1966171168
        %v3317 = vunpack.c.0.s8 %v3316
        %v3318 = vlaneseq
        %v3319 = vshrl.u32 %v3318, 7
        %v3320 = vsub.s32 %v3317, %v3319
        %v3321 = vrot.slane %v3305, %v3320
        %v3323 = vunpack.c.l.s4 1966171168
        %v3324 = vunpack.c.0.s8 %v3323
        %v3325 = vlaneseq
        %v3326 = vshrl.u32 %v3325, 7
        %v3327 = vsub.s32 %v3324, %v3326
        %v3328 = vrot.slane %v3306, %v3327
        %v3330 = vunpack.c.l.s4 1966171168
        %v3331 = vunpack.c.0.s8 %v3330
        %v3332 = vlaneseq
        %v3333 = vshrl.u32 %v3332, 7
        %v3334 = vsub.s32 %v3331, %v3333
        %v3335 = vrot.slane %v3307, %v3334
        %v3336 = vcombine.low %v3314, %v3321
        %v3337 = vcombine.low %v3328, %v3335
        %v3339 = vunpack.c.l.s4 1966171168
        %v3340 = vunpack.c.0.s8 %v3339
        %v3341 = vlaneseq
        %v3342 = vshrl.u32 %v3341, 7
        %v3343 = vsub.s32 %v3340, %v3342
        %v3344 = vrot.slane %v3336, %v3343
        %v3346 = vunpack.c.l.s4 1966171168
        %v3347 = vunpack.c.0.s8 %v3346
        %v3348 = vlaneseq
        %v3349 = vshrl.u32 %v3348, 7
        %v3350 = vsub.s32 %v3347, %v3349
        %v3351 = vrot.slane %v3337, %v3350
        %v3352 = vcombine.low %v3344, %v3351
        %v3353 = vcombine.low %v1907, %v1911
        %v3354 = vcombine.low %v1915, %v1919
        %v3355 = vcombine.low %v1923, %v1927
        %v3356 = vcombine.low %v1931, %v1935
        %v3358 = vunpack.c.l.s4 1966171168
        %v3359 = vunpack.c.0.s8 %v3358
        %v3360 = vlaneseq
        %v3361 = vshrl.u32 %v3360, 7
        %v3362 = vsub.s32 %v3359, %v3361
        %v3363 = vrot.slane %v3353, %v3362
        %v3365 = vunpack.c.l.s4 1966171168
        %v3366 = vunpack.c.0.s8 %v3365
        %v3367 = vlaneseq
        %v3368 = vshrl.u32 %v3367, 7
        %v3369 = vsub.s32 %v3366, %v3368
        %v3370 = vrot.slane %v3354, %v3369
        %v3372 = vunpack.c.l.s4 1966171168
        %v3373 = vunpack.c.0.s8 %v3372
        %v3374 = vlaneseq
        %v3375 = vshrl.u32 %v3374, 7
        %v3376 = vsub.s32 %v3373, %v3375
        %v3377 = vrot.slane %v3355, %v3376
        %v3379 = vunpack.c.l.s4 1966171168
        %v3380 = vunpack.c.0.s8 %v3379
        %v3381 = vlaneseq
        %v3382 = vshrl.u32 %v3381, 7
        %v3383 = vsub.s32 %v3380, %v3382
        %v3384 = vrot.slane %v3356, %v3383
        %v3385 = vcombine.low %v3363, %v3370
        %v3386 = vcombine.low %v3377, %v3384
        %v3388 = vunpack.c.l.s4 1966171168
        %v3389 = vunpack.c.0.s8 %v3388
        %v3390 = vlaneseq
        %v3391 = vshrl.u32 %v3390, 7
        %v3392 = vsub.s32 %v3389, %v3391
        %v3393 = vrot.slane %v3385, %v3392
        %v3395 = vunpack.c.l.s4 1966171168
        %v3396 = vunpack.c.0.s8 %v3395
        %v3397 = vlaneseq
        %v3398 = vshrl.u32 %v3397, 7
        %v3399 = vsub.s32 %v3396, %v3398
        %v3400 = vrot.slane %v3386, %v3399
        %v3401 = vcombine.low %v3393, %v3400
        %v3402 = vcombine.low %v1939, %v1943
        %v3403 = vcombine.low %v1947, %v1951
        %v3404 = vcombine.low %v1955, %v1959
        %v3405 = vcombine.low %v1963, %v1967
        %v3407 = vunpack.c.l.s4 1966171168
        %v3408 = vunpack.c.0.s8 %v3407
        %v3409 = vlaneseq
        %v3410 = vshrl.u32 %v3409, 7
        %v3411 = vsub.s32 %v3408, %v3410
        %v3412 = vrot.slane %v3402, %v3411
        %v3414 = vunpack.c.l.s4 1966171168
        %v3415 = vunpack.c.0.s8 %v3414
        %v3416 = vlaneseq
        %v3417 = vshrl.u32 %v3416, 7
        %v3418 = vsub.s32 %v3415, %v3417
        %v3419 = vrot.slane %v3403, %v3418
        %v3421 = vunpack.c.l.s4 1966171168
        %v3422 = vunpack.c.0.s8 %v3421
        %v3423 = vlaneseq
        %v3424 = vshrl.u32 %v3423, 7
        %v3425 = vsub.s32 %v3422, %v3424
        %v3426 = vrot.slane %v3404, %v3425
        %v3428 = vunpack.c.l.s4 1966171168
        %v3429 = vunpack.c.0.s8 %v3428
        %v3430 = vlaneseq
        %v3431 = vshrl.u32 %v3430, 7
        %v3432 = vsub.s32 %v3429, %v3431
        %v3433 = vrot.slane %v3405, %v3432
        %v3434 = vcombine.low %v3412, %v3419
        %v3435 = vcombine.low %v3426, %v3433
        %v3437 = vunpack.c.l.s4 1966171168
        %v3438 = vunpack.c.0.s8 %v3437
        %v3439 = vlaneseq
        %v3440 = vshrl.u32 %v3439, 7
        %v3441 = vsub.s32 %v3438, %v3440
        %v3442 = vrot.slane %v3434, %v3441
        %v3444 = vunpack.c.l.s4 1966171168
        %v3445 = vunpack.c.0.s8 %v3444
        %v3446 = vlaneseq
        %v3447 = vshrl.u32 %v3446, 7
        %v3448 = vsub.s32 %v3445, %v3447
        %v3449 = vrot.slane %v3435, %v3448
        %v3450 = vcombine.low %v3442, %v3449
        %v3451 = vcombine.low %v1971, %v1975
        %v3452 = vcombine.low %v1979, %v1983
        %v3453 = vcombine.low %v1987, %v1991
        %v3454 = vcombine.low %v1995, %v1999
        %v3456 = vunpack.c.l.s4 1966171168
        %v3457 = vunpack.c.0.s8 %v3456
        %v3458 = vlaneseq
        %v3459 = vshrl.u32 %v3458, 7
        %v3460 = vsub.s32 %v3457, %v3459
        %v3461 = vrot.slane %v3451, %v3460
        %v3463 = vunpack.c.l.s4 1966171168
        %v3464 = vunpack.c.0.s8 %v3463
        %v3465 = vlaneseq
        %v3466 = vshrl.u32 %v3465, 7
        %v3467 = vsub.s32 %v3464, %v3466
        %v3468 = vrot.slane %v3452, %v3467
        %v3470 = vunpack.c.l.s4 1966171168
        %v3471 = vunpack.c.0.s8 %v3470
        %v3472 = vlaneseq
        %v3473 = vshrl.u32 %v3472, 7
        %v3474 = vsub.s32 %v3471, %v3473
        %v3475 = vrot.slane %v3453, %v3474
        %v3477 = vunpack.c.l.s4 1966171168
        %v3478 = vunpack.c.0.s8 %v3477
        %v3479 = vlaneseq
        %v3480 = vshrl.u32 %v3479, 7
        %v3481 = vsub.s32 %v3478, %v3480
        %v3482 = vrot.slane %v3454, %v3481
        %v3483 = vcombine.low %v3461, %v3468
        %v3484 = vcombine.low %v3475, %v3482
        %v3486 = vunpack.c.l.s4 1966171168
        %v3487 = vunpack.c.0.s8 %v3486
        %v3488 = vlaneseq
        %v3489 = vshrl.u32 %v3488, 7
        %v3490 = vsub.s32 %v3487, %v3489
        %v3491 = vrot.slane %v3483, %v3490
        %v3493 = vunpack.c.l.s4 1966171168
        %v3494 = vunpack.c.0.s8 %v3493
        %v3495 = vlaneseq
        %v3496 = vshrl.u32 %v3495, 7
        %v3497 = vsub.s32 %v3494, %v3496
        %v3498 = vrot.slane %v3484, %v3497
        %v3499 = vcombine.low %v3491, %v3498
        %v3500 = vcombine.low %v2003, %v2007
        %v3501 = vcombine.low %v2011, %v2015
        %v3502 = vcombine.low %v2019, %v2023
        %v3503 = vcombine.low %v2027, %v2031
        %v3505 = vunpack.c.l.s4 1966171168
        %v3506 = vunpack.c.0.s8 %v3505
        %v3507 = vlaneseq
        %v3508 = vshrl.u32 %v3507, 7
        %v3509 = vsub.s32 %v3506, %v3508
        %v3510 = vrot.slane %v3500, %v3509
        %v3512 = vunpack.c.l.s4 1966171168
        %v3513 = vunpack.c.0.s8 %v3512
        %v3514 = vlaneseq
        %v3515 = vshrl.u32 %v3514, 7
        %v3516 = vsub.s32 %v3513, %v3515
        %v3517 = vrot.slane %v3501, %v3516
        %v3519 = vunpack.c.l.s4 1966171168
        %v3520 = vunpack.c.0.s8 %v3519
        %v3521 = vlaneseq
        %v3522 = vshrl.u32 %v3521, 7
        %v3523 = vsub.s32 %v3520, %v3522
        %v3524 = vrot.slane %v3502, %v3523
        %v3526 = vunpack.c.l.s4 1966171168
        %v3527 = vunpack.c.0.s8 %v3526
        %v3528 = vlaneseq
        %v3529 = vshrl.u32 %v3528, 7
        %v3530 = vsub.s32 %v3527, %v3529
        %v3531 = vrot.slane %v3503, %v3530
        %v3532 = vcombine.low %v3510, %v3517
        %v3533 = vcombine.low %v3524, %v3531
        %v3535 = vunpack.c.l.s4 1966171168
        %v3536 = vunpack.c.0.s8 %v3535
        %v3537 = vlaneseq
        %v3538 = vshrl.u32 %v3537, 7
        %v3539 = vsub.s32 %v3536, %v3538
        %v3540 = vrot.slane %v3532, %v3539
        %v3542 = vunpack.c.l.s4 1966171168
        %v3543 = vunpack.c.0.s8 %v3542
        %v3544 = vlaneseq
        %v3545 = vshrl.u32 %v3544, 7
        %v3546 = vsub.s32 %v3543, %v3545
        %v3547 = vrot.slane %v3533, %v3546
        %v3548 = vcombine.low %v3540, %v3547
        %v3549 = vcombine.low %v2035, %v2039
        %v3550 = vcombine.low %v2043, %v2047
        %v3551 = vcombine.low %v2051, %v2055
        %v3552 = vcombine.low %v2059, %v2063
        %v3554 = vunpack.c.l.s4 1966171168
        %v3555 = vunpack.c.0.s8 %v3554
        %v3556 = vlaneseq
        %v3557 = vshrl.u32 %v3556, 7
        %v3558 = vsub.s32 %v3555, %v3557
        %v3559 = vrot.slane %v3549, %v3558
        %v3561 = vunpack.c.l.s4 1966171168
        %v3562 = vunpack.c.0.s8 %v3561
        %v3563 = vlaneseq
        %v3564 = vshrl.u32 %v3563, 7
        %v3565 = vsub.s32 %v3562, %v3564
        %v3566 = vrot.slane %v3550, %v3565
        %v3568 = vunpack.c.l.s4 1966171168
        %v3569 = vunpack.c.0.s8 %v3568
        %v3570 = vlaneseq
        %v3571 = vshrl.u32 %v3570, 7
        %v3572 = vsub.s32 %v3569, %v3571
        %v3573 = vrot.slane %v3551, %v3572
        %v3575 = vunpack.c.l.s4 1966171168
        %v3576 = vunpack.c.0.s8 %v3575
        %v3577 = vlaneseq
        %v3578 = vshrl.u32 %v3577, 7
        %v3579 = vsub.s32 %v3576, %v3578
        %v3580 = vrot.slane %v3552, %v3579
        %v3581 = vcombine.low %v3559, %v3566
        %v3582 = vcombine.low %v3573, %v3580
        %v3584 = vunpack.c.l.s4 1966171168
        %v3585 = vunpack.c.0.s8 %v3584
        %v3586 = vlaneseq
        %v3587 = vshrl.u32 %v3586, 7
        %v3588 = vsub.s32 %v3585, %v3587
        %v3589 = vrot.slane %v3581, %v3588
        %v3591 = vunpack.c.l.s4 1966171168
        %v3592 = vunpack.c.0.s8 %v3591
        %v3593 = vlaneseq
        %v3594 = vshrl.u32 %v3593, 7
        %v3595 = vsub.s32 %v3592, %v3594
        %v3596 = vrot.slane %v3582, %v3595
        %v3597 = vcombine.low %v3589, %v3596
        %v3598 = vcombine.low %v2067, %v2071
        %v3599 = vcombine.low %v2075, %v2079
        %v3600 = vcombine.low %v2083, %v2087
        %v3601 = vcombine.low %v2091, %v2095
        %v3603 = vunpack.c.l.s4 1966171168
        %v3604 = vunpack.c.0.s8 %v3603
        %v3605 = vlaneseq
        %v3606 = vshrl.u32 %v3605, 7
        %v3607 = vsub.s32 %v3604, %v3606
        %v3608 = vrot.slane %v3598, %v3607
        %v3610 = vunpack.c.l.s4 1966171168
        %v3611 = vunpack.c.0.s8 %v3610
        %v3612 = vlaneseq
        %v3613 = vshrl.u32 %v3612, 7
        %v3614 = vsub.s32 %v3611, %v3613
        %v3615 = vrot.slane %v3599, %v3614
        %v3617 = vunpack.c.l.s4 1966171168
        %v3618 = vunpack.c.0.s8 %v3617
        %v3619 = vlaneseq
        %v3620 = vshrl.u32 %v3619, 7
        %v3621 = vsub.s32 %v3618, %v3620
        %v3622 = vrot.slane %v3600, %v3621
        %v3624 = vunpack.c.l.s4 1966171168
        %v3625 = vunpack.c.0.s8 %v3624
        %v3626 = vlaneseq
        %v3627 = vshrl.u32 %v3626, 7
        %v3628 = vsub.s32 %v3625, %v3627
        %v3629 = vrot.slane %v3601, %v3628
        %v3630 = vcombine.low %v3608, %v3615
        %v3631 = vcombine.low %v3622, %v3629
        %v3633 = vunpack.c.l.s4 1966171168
        %v3634 = vunpack.c.0.s8 %v3633
        %v3635 = vlaneseq
        %v3636 = vshrl.u32 %v3635, 7
        %v3637 = vsub.s32 %v3634, %v3636
        %v3638 = vrot.slane %v3630, %v3637
        %v3640 = vunpack.c.l.s4 1966171168
        %v3641 = vunpack.c.0.s8 %v3640
        %v3642 = vlaneseq
        %v3643 = vshrl.u32 %v3642, 7
        %v3644 = vsub.s32 %v3641, %v3643
        %v3645 = vrot.slane %v3631, %v3644
        %v3646 = vcombine.low %v3638, %v3645
        %v3647 = vcombine.low %v2099, %v2103
        %v3648 = vcombine.low %v2107, %v2111
        %v3649 = vcombine.low %v2115, %v2119
        %v3650 = vcombine.low %v2123, %v2127
        %v3652 = vunpack.c.l.s4 1966171168
        %v3653 = vunpack.c.0.s8 %v3652
        %v3654 = vlaneseq
        %v3655 = vshrl.u32 %v3654, 7
        %v3656 = vsub.s32 %v3653, %v3655
        %v3657 = vrot.slane %v3647, %v3656
        %v3659 = vunpack.c.l.s4 1966171168
        %v3660 = vunpack.c.0.s8 %v3659
        %v3661 = vlaneseq
        %v3662 = vshrl.u32 %v3661, 7
        %v3663 = vsub.s32 %v3660, %v3662
        %v3664 = vrot.slane %v3648, %v3663
        %v3666 = vunpack.c.l.s4 1966171168
        %v3667 = vunpack.c.0.s8 %v3666
        %v3668 = vlaneseq
        %v3669 = vshrl.u32 %v3668, 7
        %v3670 = vsub.s32 %v3667, %v3669
        %v3671 = vrot.slane %v3649, %v3670
        %v3673 = vunpack.c.l.s4 1966171168
        %v3674 = vunpack.c.0.s8 %v3673
        %v3675 = vlaneseq
        %v3676 = vshrl.u32 %v3675, 7
        %v3677 = vsub.s32 %v3674, %v3676
        %v3678 = vrot.slane %v3650, %v3677
        %v3679 = vcombine.low %v3657, %v3664
        %v3680 = vcombine.low %v3671, %v3678
        %v3682 = vunpack.c.l.s4 1966171168
        %v3683 = vunpack.c.0.s8 %v3682
        %v3684 = vlaneseq
        %v3685 = vshrl.u32 %v3684, 7
        %v3686 = vsub.s32 %v3683, %v3685
        %v3687 = vrot.slane %v3679, %v3686
        %v3689 = vunpack.c.l.s4 1966171168
        %v3690 = vunpack.c.0.s8 %v3689
        %v3691 = vlaneseq
        %v3692 = vshrl.u32 %v3691, 7
        %v3693 = vsub.s32 %v3690, %v3692
        %v3694 = vrot.slane %v3680, %v3693
        %v3695 = vcombine.low %v3687, %v3694
        %3696 = vset.pattern.permute.xlu0 0
        %3697 = vperm.xlu0 %3696, %v2176
        %v3698 = vpop.permute.xlu0 %3697
        %3699 = vset.pattern.permute.xlu0 0
        %3700 = vperm.xlu0 %3699, %v2225
        %v3701 = vpop.permute.xlu0 %3700
        %3702 = vset.pattern.permute.xlu0 0
        %3703 = vperm.xlu0 %3702, %v2274
        %v3704 = vpop.permute.xlu0 %3703
        %3705 = vset.pattern.permute.xlu0 0
        %3706 = vperm.xlu0 %3705, %v2323
        %v3707 = vpop.permute.xlu0 %3706
        %3708 = vset.pattern.permute.xlu0 0
        %3709 = vperm.xlu0 %3708, %v2372
        %v3710 = vpop.permute.xlu0 %3709
        %3711 = vset.pattern.permute.xlu0 0
        %3712 = vperm.xlu0 %3711, %v2421
        %v3713 = vpop.permute.xlu0 %3712
        %3714 = vset.pattern.permute.xlu0 0
        %3715 = vperm.xlu0 %3714, %v2470
        %v3716 = vpop.permute.xlu0 %3715
        %3717 = vset.pattern.permute.xlu0 0
        %3718 = vperm.xlu0 %3717, %v2519
        %v3719 = vpop.permute.xlu0 %3718
        %3720 = vset.pattern.permute.xlu0 0
        %3721 = vperm.xlu0 %3720, %v2568
        %v3722 = vpop.permute.xlu0 %3721
        %3723 = vset.pattern.permute.xlu0 0
        %3724 = vperm.xlu0 %3723, %v2617
        %v3725 = vpop.permute.xlu0 %3724
        %3726 = vset.pattern.permute.xlu0 0
        %3727 = vperm.xlu0 %3726, %v2666
        %v3728 = vpop.permute.xlu0 %3727
        %3729 = vset.pattern.permute.xlu0 0
        %3730 = vperm.xlu0 %3729, %v2715
        %v3731 = vpop.permute.xlu0 %3730
        %3732 = vset.pattern.permute.xlu0 0
        %3733 = vperm.xlu0 %3732, %v2764
        %v3734 = vpop.permute.xlu0 %3733
        %3735 = vset.pattern.permute.xlu0 0
        %3736 = vperm.xlu0 %3735, %v2813
        %v3737 = vpop.permute.xlu0 %3736
        %3738 = vset.pattern.permute.xlu0 0
        %3739 = vperm.xlu0 %3738, %v2862
        %v3740 = vpop.permute.xlu0 %3739
        %3741 = vset.pattern.permute.xlu0 0
        %3742 = vperm.xlu0 %3741, %v2911
        %v3743 = vpop.permute.xlu0 %3742
        %3744 = vset.pattern.permute.xlu0 0
        %3745 = vperm.xlu0 %3744, %v2960
        %v3746 = vpop.permute.xlu0 %3745
        %3747 = vset.pattern.permute.xlu0 0
        %3748 = vperm.xlu0 %3747, %v3009
        %v3749 = vpop.permute.xlu0 %3748
        %3750 = vset.pattern.permute.xlu0 0
        %3751 = vperm.xlu0 %3750, %v3058
        %v3752 = vpop.permute.xlu0 %3751
        %3753 = vset.pattern.permute.xlu0 0
        %3754 = vperm.xlu0 %3753, %v3107
        %v3755 = vpop.permute.xlu0 %3754
        %3756 = vset.pattern.permute.xlu0 0
        %3757 = vperm.xlu0 %3756, %v3156
        %v3758 = vpop.permute.xlu0 %3757
        %3759 = vset.pattern.permute.xlu0 0
        %3760 = vperm.xlu0 %3759, %v3205
        %v3761 = vpop.permute.xlu0 %3760
        %3762 = vset.pattern.permute.xlu0 0
        %3763 = vperm.xlu0 %3762, %v3254
        %v3764 = vpop.permute.xlu0 %3763
        %3765 = vset.pattern.permute.xlu0 0
        %3766 = vperm.xlu0 %3765, %v3303
        %v3767 = vpop.permute.xlu0 %3766
        %3768 = vset.pattern.permute.xlu0 0
        %3769 = vperm.xlu0 %3768, %v3352
        %v3770 = vpop.permute.xlu0 %3769
        %3771 = vset.pattern.permute.xlu0 0
        %3772 = vperm.xlu0 %3771, %v3401
        %v3773 = vpop.permute.xlu0 %3772
        %3774 = vset.pattern.permute.xlu0 0
        %3775 = vperm.xlu0 %3774, %v3450
        %v3776 = vpop.permute.xlu0 %3775
        %3777 = vset.pattern.permute.xlu0 0
        %3778 = vperm.xlu0 %3777, %v3499
        %v3779 = vpop.permute.xlu0 %3778
        %3780 = vset.pattern.permute.xlu0 0
        %3781 = vperm.xlu0 %3780, %v3548
        %v3782 = vpop.permute.xlu0 %3781
        %3783 = vset.pattern.permute.xlu0 0
        %3784 = vperm.xlu0 %3783, %v3597
        %v3785 = vpop.permute.xlu0 %3784
        %3786 = vset.pattern.permute.xlu0 0
        %3787 = vperm.xlu0 %3786, %v3646
        %v3788 = vpop.permute.xlu0 %3787
        %3789 = vset.pattern.permute.xlu0 0
        %3790 = vperm.xlu0 %3789, %v3695
        %v3791 = vpop.permute.xlu0 %3790
        %v3792 = vlaneseq
        %v3793 = vand.u32 %v3792, 127
        %v3794 = vlaneseq
        %v3795 = vshrl.u32 %v3794, 7
        %v3796 = vsub.s32 %v3793, %v3795
        %v3797 = vrot.slane %v3698, %v3796
        %v3798 = vadd.s32 %v3793, 4294967288
        %v3799 = vlaneseq
        %v3800 = vshrl.u32 %v3799, 7
        %v3801 = vsub.s32 %v3798, %v3800
        %v3802 = vrot.slane %v3701, %v3801
        %vm3803 = vcmask 130112
        %v3804 = vsel %vm3803, %v3802, %v3797
        %v3805 = vadd.s32 %v3793, 4294967280
        %v3806 = vlaneseq
        %v3807 = vshrl.u32 %v3806, 7
        %v3808 = vsub.s32 %v3805, %v3807
        %v3809 = vrot.slane %v3704, %v3808
        %vm3810 = vcmask 195712
        %v3811 = vsel %vm3810, %v3809, %v3804
        %v3812 = vadd.s32 %v3793, 4294967272
        %v3813 = vlaneseq
        %v3814 = vshrl.u32 %v3813, 7
        %v3815 = vsub.s32 %v3812, %v3814
        %v3816 = vrot.slane %v3707, %v3815
        %vm3817 = vcmask 261312
        %v3818 = vsel %vm3817, %v3816, %v3811
        %v3819 = vadd.s32 %v3793, 4294967264
        %v3820 = vlaneseq
        %v3821 = vshrl.u32 %v3820, 7
        %v3822 = vsub.s32 %v3819, %v3821
        %v3823 = vrot.slane %v3710, %v3822
        %vm3824 = vcmask 326912
        %v3825 = vsel %vm3824, %v3823, %v3818
        %v3826 = vadd.s32 %v3793, 4294967256
        %v3827 = vlaneseq
        %v3828 = vshrl.u32 %v3827, 7
        %v3829 = vsub.s32 %v3826, %v3828
        %v3830 = vrot.slane %v3713, %v3829
        %vm3831 = vcmask 392512
        %v3832 = vsel %vm3831, %v3830, %v3825
        %v3833 = vadd.s32 %v3793, 4294967248
        %v3834 = vlaneseq
        %v3835 = vshrl.u32 %v3834, 7
        %v3836 = vsub.s32 %v3833, %v3835
        %v3837 = vrot.slane %v3716, %v3836
        %vm3838 = vcmask 458112
        %v3839 = vsel %vm3838, %v3837, %v3832
        %v3840 = vadd.s32 %v3793, 4294967240
        %v3841 = vlaneseq
        %v3842 = vshrl.u32 %v3841, 7
        %v3843 = vsub.s32 %v3840, %v3842
        %v3844 = vrot.slane %v3719, %v3843
        %vm3845 = vcmask 523712
        %v3846 = vsel %vm3845, %v3844, %v3839
        %v3847 = vadd.s32 %v3793, 4294967232
        %v3848 = vlaneseq
        %v3849 = vshrl.u32 %v3848, 7
        %v3850 = vsub.s32 %v3847, %v3849
        %v3851 = vrot.slane %v3722, %v3850
        %vm3852 = vcmask 589312
        %v3853 = vsel %vm3852, %v3851, %v3846
        %v3854 = vadd.s32 %v3793, 4294967224
        %v3855 = vlaneseq
        %v3856 = vshrl.u32 %v3855, 7
        %v3857 = vsub.s32 %v3854, %v3856
        %v3858 = vrot.slane %v3725, %v3857
        %vm3859 = vcmask 654912
        %v3860 = vsel %vm3859, %v3858, %v3853
        %v3861 = vadd.s32 %v3793, 4294967216
        %v3862 = vlaneseq
        %v3863 = vshrl.u32 %v3862, 7
        %v3864 = vsub.s32 %v3861, %v3863
        %v3865 = vrot.slane %v3728, %v3864
        %vm3866 = vcmask 720512
        %v3867 = vsel %vm3866, %v3865, %v3860
        %v3868 = vadd.s32 %v3793, 4294967208
        %v3869 = vlaneseq
        %v3870 = vshrl.u32 %v3869, 7
        %v3871 = vsub.s32 %v3868, %v3870
        %v3872 = vrot.slane %v3731, %v3871
        %vm3873 = vcmask 786112
        %v3874 = vsel %vm3873, %v3872, %v3867
        %v3875 = vadd.s32 %v3793, 4294967200
        %v3876 = vlaneseq
        %v3877 = vshrl.u32 %v3876, 7
        %v3878 = vsub.s32 %v3875, %v3877
        %v3879 = vrot.slane %v3734, %v3878
        %vm3880 = vcmask 851712
        %v3881 = vsel %vm3880, %v3879, %v3874
        %v3882 = vadd.s32 %v3793, 4294967192
        %v3883 = vlaneseq
        %v3884 = vshrl.u32 %v3883, 7
        %v3885 = vsub.s32 %v3882, %v3884
        %v3886 = vrot.slane %v3737, %v3885
        %vm3887 = vcmask 917312
        %v3888 = vsel %vm3887, %v3886, %v3881
        %v3889 = vadd.s32 %v3793, 4294967184
        %v3890 = vlaneseq
        %v3891 = vshrl.u32 %v3890, 7
        %v3892 = vsub.s32 %v3889, %v3891
        %v3893 = vrot.slane %v3740, %v3892
        %vm3894 = vcmask 982912
        %v3895 = vsel %vm3894, %v3893, %v3888
        %v3896 = vadd.s32 %v3793, 4294967176
        %v3897 = vlaneseq
        %v3898 = vshrl.u32 %v3897, 7
        %v3899 = vsub.s32 %v3896, %v3898
        %v3900 = vrot.slane %v3743, %v3899
        %vm3901 = vcmask 1048512
        %v3902 = vsel %vm3901, %v3900, %v3895
        %v3903 = vlaneseq
        %v3904 = vshrl.u32 %v3903, 7
        %v3905 = vsub.s32 %v3793, %v3904
        %v3906 = vrot.slane %v3746, %v3905
        %v3907 = vlaneseq
        %v3908 = vshrl.u32 %v3907, 7
        %v3909 = vsub.s32 %v3798, %v3908
        %v3910 = vrot.slane %v3749, %v3909
        %v3911 = vsel %vm3803, %v3910, %v3906
        %v3912 = vlaneseq
        %v3913 = vshrl.u32 %v3912, 7
        %v3914 = vsub.s32 %v3805, %v3913
        %v3915 = vrot.slane %v3752, %v3914
        %v3916 = vsel %vm3810, %v3915, %v3911
        %v3917 = vlaneseq
        %v3918 = vshrl.u32 %v3917, 7
        %v3919 = vsub.s32 %v3812, %v3918
        %v3920 = vrot.slane %v3755, %v3919
        %v3921 = vsel %vm3817, %v3920, %v3916
        %v3922 = vlaneseq
        %v3923 = vshrl.u32 %v3922, 7
        %v3924 = vsub.s32 %v3819, %v3923
        %v3925 = vrot.slane %v3758, %v3924
        %v3926 = vsel %vm3824, %v3925, %v3921
        %v3927 = vlaneseq
        %v3928 = vshrl.u32 %v3927, 7
        %v3929 = vsub.s32 %v3826, %v3928
        %v3930 = vrot.slane %v3761, %v3929
        %v3931 = vsel %vm3831, %v3930, %v3926
        %v3932 = vlaneseq
        %v3933 = vshrl.u32 %v3932, 7
        %v3934 = vsub.s32 %v3833, %v3933
        %v3935 = vrot.slane %v3764, %v3934
        %v3936 = vsel %vm3838, %v3935, %v3931
        %v3937 = vlaneseq
        %v3938 = vshrl.u32 %v3937, 7
        %v3939 = vsub.s32 %v3840, %v3938
        %v3940 = vrot.slane %v3767, %v3939
        %v3941 = vsel %vm3845, %v3940, %v3936
        %v3942 = vlaneseq
        %v3943 = vshrl.u32 %v3942, 7
        %v3944 = vsub.s32 %v3847, %v3943
        %v3945 = vrot.slane %v3770, %v3944
        %v3946 = vsel %vm3852, %v3945, %v3941
        %v3947 = vlaneseq
        %v3948 = vshrl.u32 %v3947, 7
        %v3949 = vsub.s32 %v3854, %v3948
        %v3950 = vrot.slane %v3773, %v3949
        %v3951 = vsel %vm3859, %v3950, %v3946
        %v3952 = vlaneseq
        %v3953 = vshrl.u32 %v3952, 7
        %v3954 = vsub.s32 %v3861, %v3953
        %v3955 = vrot.slane %v3776, %v3954
        %v3956 = vsel %vm3866, %v3955, %v3951
        %v3957 = vlaneseq
        %v3958 = vshrl.u32 %v3957, 7
        %v3959 = vsub.s32 %v3868, %v3958
        %v3960 = vrot.slane %v3779, %v3959
        %v3961 = vsel %vm3873, %v3960, %v3956
        %v3962 = vlaneseq
        %v3963 = vshrl.u32 %v3962, 7
        %v3964 = vsub.s32 %v3875, %v3963
        %v3965 = vrot.slane %v3782, %v3964
        %v3966 = vsel %vm3880, %v3965, %v3961
        %v3967 = vlaneseq
        %v3968 = vshrl.u32 %v3967, 7
        %v3969 = vsub.s32 %v3882, %v3968
        %v3970 = vrot.slane %v3785, %v3969
        %v3971 = vsel %vm3887, %v3970, %v3966
        %v3972 = vlaneseq
        %v3973 = vshrl.u32 %v3972, 7
        %v3974 = vsub.s32 %v3889, %v3973
        %v3975 = vrot.slane %v3788, %v3974
        %v3976 = vsel %vm3894, %v3975, %v3971
        %v3977 = vlaneseq
        %v3978 = vshrl.u32 %v3977, 7
        %v3979 = vsub.s32 %v3896, %v3978
        %v3980 = vrot.slane %v3791, %v3979
        %v3981 = vsel %vm3901, %v3980, %v3976
        %v3982 = vcombine.low %v3902, %v3981
        %v3984 = vunpack.c.l.s4 1966171168
        %v3985 = vunpack.c.0.s8 %v3984
        %v3986 = vlaneseq
        %v3987 = vshrl.u32 %v3986, 7
        %v3988 = vsub.s32 %v3985, %v3987
        %v3989 = vrot.slane %v3982, %v3988
        %v3991 = vunpack.c.l.s4 1966171168
        %v3992 = vunpack.c.0.s8 %v3991
        %v3993 = vlaneseq
        %v3994 = vshrl.u32 %v3993, 7
        %v3995 = vsub.s32 %v3992, %v3994
        %v3996 = vrot.slane %v3989, %v3995
        %v3998 = vlaneseq
        %vm3999 = vcmp.ge.s32.totalorder %v3998, 0
        %vm4000 = vcmp.lt.s32.totalorder %v3998, 256
        %vm4001 = vmand %vm3999, %vm4000
        %4002 = vst.msk [vmem:[%s231] sm:$0x3] %vm4001, %v3996
        %s4003 = sand.u32 %s120, 1
        %s4004 = scalar_lea.sflag [#allocation3], %s4003
        %s4005 = sand.u32 %s120, 1
        %s4006 = smul.addr %s4005, 2
        %s4007 = scalar_lea.vmem [#allocation2], %s4006
        // Predicated region
        $region37: #{tpu_custom_call.1} parent=35 // pred_check
          %p4008 = pneg %p130
        $region38: #{tpu_custom_call.1} parent=35 // pred_check_branch
          %4010 = sbr.rel (%p4008) target = $region40
        $region39: #{tpu_custom_call.1} parent=35 // pred_region
          %s4011 = smul.u32 2, %s18
          %s4012 = ssub.s32 3, %s4011
          %p4013 = scmp.lt.s32.totalorder %s4012, 2
          %s4014 = scalar_select %p4013, %s4012, 2
          %s4015 = smul.u32 16, %s4014
          %s4017 = ssub.s32 32, %s4015
          %4018 = vsyncadd %s4004, %s4017
          %p4019 = scmp.ne.s32.totalorder 0, %s4015
          %s4020 = smul.addr %s4011, 16
          %s4021 = scalar_lea.hbm %s4, %s4020
          %s4022 = sshll.u32 %s4014, 4
          %s4023 = sshll.u32 %s4007, 4
          %s4024 = int_to_ptr.vmem [resolvable:$true] %s4023
          %4026 = dma.vmem_to_hbm [thread:$0]  (%p4019), %s4024, %s4022, %s4021, %s4004
        $region40: #{tpu_custom_call.1} parent=35 // pred_fallthru
          _
      $region36: #{tpu_custom_call.1} parent=5 // pred_fallthru
        _
      %p4027 = scmp.le.s32.totalorder 2, %s13
      // Predicated region
      $region41: #{tpu_custom_call.1} parent=5 // pred_check
        %p4028 = pneg %p4027
      $region42: #{tpu_custom_call.1} parent=5 // pred_check_branch
        %4030 = sbr.rel (%p4028) target = $region44
      $region43: #{tpu_custom_call.1} parent=5 // pred_region
        %s4031 = ssub.s32 %s13, 2
        // Predicated region
        $region45: #{tpu_custom_call.1} parent=43 // pred_check
          %p4032 = pneg %p136
        $region46: #{tpu_custom_call.1} parent=43 // pred_check_branch
          %4034 = sbr.rel (%p4032) target = $region48
        $region47: #{tpu_custom_call.1} parent=43 // pred_region
          %s4035 = sand.u32 %s121, 1
          %s4036 = scalar_lea.sflag [#allocation3], %s4035
          %s4037 = sand.u32 %s121, 1
          %s4038 = smul.addr %s4037, 2
          %s4039 = scalar_lea.vmem [#allocation2], %s4038
          %4040 = dma.done %s4036, 32
        $region48: #{tpu_custom_call.1} parent=43 // pred_fallthru
          _
      $region44: #{tpu_custom_call.1} parent=5 // pred_fallthru
        _
    $region6: #{tpu_custom_call.1} parent=1 // loop_footer
      %s17 = sadd.s32 1, %s13
    $region7: #{tpu_custom_call.1} parent=1 // loop_footer_branch
      %12 = sbr.rel target = $region3
    $region8: #{tpu_custom_call.1} parent=1 // loop_exit
      _
    %4041 = vsyncpa [#allocation3], 1
    %s4042 = scalar_lea.sflag [#allocation3], 1
    %4043 = vsyncpa %s4042, 1

</llo_original>
